<compile_context>
chip_gen: v7x
topology: tpu7x:2x2x1
jax: 0.10.0
libtpu: 0.0.40
codegen_flags: <defaults>
</compile_context>

<pallas_src>
import math

import jax
import jax.numpy as jnp
import numpy as np
from jax import lax
from jax.experimental import pallas as pl
from jax.experimental.pallas import tpu as pltpu

LN_EPS = 1e-5  # nn.LayerNorm default
# tap index == torch depthwise kernel flat index (kh*3 + kw) with kh=dh+1, kw=dw+1
TAPS = tuple((dh, dw) for dh in (-1, 0, 1) for dw in (-1, 0, 1))


# ----------------------------- static precompute ------------------------------
def _adaptive_windows(in_size: int, out_size: int):
    """PyTorch adaptive_avg_pool2d windows: [floor(i*I/O), ceil((i+1)*I/O))."""
    return [
        (int(math.floor(i * in_size / out_size)),
         int(math.ceil((i + 1) * in_size / out_size)))
        for i in range(out_size)
    ]


def _pool_matrix_2d(H, W, Ho, Wo, rows_pad):
    """(rows_pad, H*W) adaptive-average-pool matrix; rows >= Ho*Wo are zero padding."""
    P = np.zeros((rows_pad, H * W), dtype=np.float32)
    hwin = _adaptive_windows(H, Ho)
    wwin = _adaptive_windows(W, Wo)
    for i, (hs, he) in enumerate(hwin):
        for j, (ws, we) in enumerate(wwin):
            row = P[i * Wo + j].reshape(H, W)
            row[hs:he, ws:we] = 1.0 / ((he - hs) * (we - ws))
    return P


def _tap_masks_full(Ho, Wo, rows_pad):
    """(rows_pad, 9) f32: mask[t, tap] = 1 iff the 3x3 tap's source (h+dh, w+dw) is
    inside the (Ho, Wo) grid for destination token t (pad rows fully masked)."""
    m = np.zeros((rows_pad, 9), dtype=np.float32)
    for t in range(Ho * Wo):
        h, w = divmod(t, Wo)
        for tap, (dh, dw) in enumerate(TAPS):
            if 0 <= h + dh < Ho and 0 <= w + dw < Wo:
                m[t, tap] = 1.0
    return m


def _tap_masks_wonly(Wo, rows):
    """(rows, 9) f32 W-border-only masks for the row-chunked identity scale (the
    H borders are handled by the zero halo rows in the VMEM scratch)."""
    m = np.zeros((rows, 9), dtype=np.float32)
    for j in range(rows):
        w = j % Wo
        for tap, (dh, dw) in enumerate(TAPS):
            if 0 <= w + dw < Wo:
                m[j, tap] = 1.0
    return m


def _ceil8(n):
    return ((n + 7) // 8) * 8


def _pick_groups(BN, C):
    """G grid steps.  >1 only on 2-TensorCore chips (v7x-class) and only when each
    step still has >= 128 lanes (bbC >= 128).  v5e/v6e always use G=1."""
    try:
        kind = jax.devices()[0].device_kind.lower()
    except Exception:  # pragma: no cover - defensive
        kind = ""
    two_tc = ("v7" in kind) or ("7x" in kind)
    if two_tc and BN % 2 == 0 and (BN * C) // 2 >= 128:
        return 2
    return 1


def _chunk_image_rows(H, W):
    """Image rows per chunk for the identity scale: largest divisor of H with
    rows*W <= 64 flat rows (keeps the per-chunk working set tiny)."""
    rh = 1
    for r in range(1, H + 1):
        if H % r == 0 and r * W <= 64:
            rh = r
    return rh


# -------------------------------- kernel body ----------------------------------
def _make_fused_kernel(plan, S, n_pool, HW, bbC, W, CH, PADR, has_chunked):
    SLAB = CH + 2 * PADR  # rows per haloed chunk slab (only used when has_chunked)

    def kernel(*refs):
        i = 0
        x_ref = refs[i]; i += 1
        p_refs = refs[i:i + n_pool]; i += n_pool          # bf16 pooling matrices
        m_refs = refs[i:i + S]; i += S                    # per-scale tap masks
        w_ref, b_ref, g_ref, bt_ref, mm_ref = refs[i:i + 5]; i += 5
        o_ref = refs[i]; i += 1
        scr_ref = refs[i] if has_chunked else None        # zero-haloed x scratch

        x = x_ref[0]                                      # (HW, bbC) f32, lane-packed
        gam = g_ref[...]                                  # (1, bbC)
        bet = bt_ref[...]                                 # (1, bbC)
        mm = mm_ref[...]                                  # (bbC, bbC) block-diag 1/C

        # bf16 copy of x only if some scale actually needs a pool matmul
        x_bf = x.astype(jnp.bfloat16) if n_pool > 0 else None

        def layernorm(acc, rows):
            # fused mean / E[x^2]: one small block-diagonal matmul instead of two
            red = jnp.dot(jnp.concatenate([acc, acc * acc], axis=0), mm,
                          preferred_element_type=jnp.float32)
            mean = red[:rows, :]
            var = red[rows:, :] - mean * mean
            return (acc - mean) * lax.rsqrt(var + LN_EPS) * gam + bet

        if has_chunked:
            # x with zero halo rows above/below -> handles the conv's H borders and
            # lets every chunk read an aligned, always-in-bounds slab.
            scr_ref[0:PADR, :] = jnp.zeros((PADR, bbC), jnp.float32)
            scr_ref[PADR:PADR + HW, :] = x
            scr_ref[PADR + HW:PADR + 2 * PADR + HW, :] = jnp.zeros((PADR, bbC),
                                                                   jnp.float32)

        for k, (mode, Ho, Wo, rows, off, p_idx) in enumerate(plan):
            wts = w_ref[k]                                # (9, bbC)
            bias = b_ref[k]                               # (1, bbC)
            mask9 = m_refs[k][...]                        # (rows|CH, 9)

            if mode == "chunked":
                # r=1 scale: pooled == x, processed in CH-row chunks from the
                # haloed scratch.  Real loop (not unrolled) -> bounded live ranges.
                nchunk = HW // CH

                def chunk_body(c, carry, wts=wts, bias=bias, mask9=mask9, off=off):
                    r0 = pl.multiple_of(c * CH, 8)
                    slab = scr_ref[pl.ds(r0, SLAB), :]            # (SLAB, bbC)
                    center = slab[PADR:PADR + CH, :]              # this chunk of x
                    conv = bias
                    for tap, (dh, dw) in enumerate(TAPS):
                        ofs = dh * W + dw
                        if ofs == 0:
                            s = center
                        else:
                            s = pltpu.roll(slab, (-ofs) % SLAB,
                                           axis=0)[PADR:PADR + CH, :]
                        term = wts[tap:tap + 1, :] * s
                        if dw != 0:                       # H borders come from the halo
                            term = term * mask9[:, tap:tap + 1]
                        conv = conv + term
                    acc = center + conv                   # residual: pool + conv(pool)
                    y = layernorm(acc, CH)
                    dst = pl.multiple_of(off + r0, 8)
                    o_ref[0, pl.ds(dst, CH), :] = y.astype(o_ref.dtype)
                    return carry

                lax.fori_loop(0, nchunk, chunk_body, 0)
            else:
                if mode == "pool":
                    # adaptive avg-pool: ONE bf16 MXU matmul for all packed images
                    pooled = jnp.dot(p_refs[p_idx][...], x_bf,
                                     preferred_element_type=jnp.float32)  # (rows,bbC)
                else:  # identity scale that could not be chunked (W % 8 != 0)
                    pooled = x

                conv = bias
                for tap, (dh, dw) in enumerate(TAPS):
                    ofs = dh * Wo + dw
                    if ofs == 0:
                        s = pooled
                    else:
                        s = pltpu.roll(pooled, (-ofs) % rows, axis=0)
                    term = wts[tap:tap + 1, :] * s
                    if ofs != 0:
                        term = term * mask9[:, tap:tap + 1]
                    conv = conv + term
                acc = pooled + conv                       # residual: pool + conv(pool)
                y = layernorm(acc, rows)
                o_ref[0, off:off + rows, :] = y.astype(o_ref.dtype)

    return kernel


# --------------------------------- wrapper --------------------------------------
def pooling_mhsa_forward(x, redu_ratios, params):
    """x: (B, N, C, H, W)  ->  (B, N, sum_k round(H/r)*round(W/r), C)."""
    B, N, C, H, W = map(int, x.shape)
    BN = B * N
    S = len(redu_ratios)
    HW = H * W

    G = _pick_groups(BN, C)
    bb = BN // G
    bbC = bb * C

    out_hw = [(int(round(H / r)), int(round(W / r))) for r in redu_ratios]

    # chunking config for identity scales (adaptive pool is a no-op there)
    rh = _chunk_image_rows(H, W)
    CH = rh * W
    PADR = W
    chunkable = (W % 8 == 0) and (HW > CH)

    plan = []          # (mode, Ho, Wo, rows, off, p_idx)
    pool_mats = []
    masks = []
    seg = []           # (offset, real length) for un-padding the output
    off = 0
    for (Ho, Wo) in out_hw:
        Lk = Ho * Wo
        identity = (Ho == H and Wo == W)
        if identity and chunkable:
            mode, rows, p_idx = "chunked", HW, -1
            masks.append(_tap_masks_wonly(Wo, CH))
        elif identity:
            mode, rows, p_idx = "identity", HW, -1
            masks.append(_tap_masks_full(Ho, Wo, rows))
        else:
            mode, rows, p_idx = "pool", _ceil8(Lk), len(pool_mats)
            masks.append(_tap_masks_full(Ho, Wo, rows))
            pool_mats.append(_pool_matrix_2d(H, W, Ho, Wo, rows))
        plan.append((mode, Ho, Wo, rows, off, p_idx))
        seg.append((off, Lk))
        off += _ceil8(rows)            # keep every slab start 8-row aligned
    L_total_pad = off
    has_chunked = any(p[0] == "chunked" for p in plan)
    n_pool = len(pool_mats)

    # (B,N,C,H,W) -> (G, H*W, bb*C); lane index = (image-in-group)*C + channel.
    xg = jnp.transpose(x.reshape(G, bb, C, H, W), (0, 3, 4, 1, 2)).reshape(G, HW, bbC)

    pool_mats_j = [jnp.asarray(p, dtype=jnp.bfloat16) for p in pool_mats]
    masks_j = [jnp.asarray(m) for m in masks]

    # torch depthwise weight (C,1,3,3) -> (9, C) with tap = kh*3+kw, tiled over bb
    w_all = jnp.stack([
        jnp.tile(jnp.transpose(params["conv_w"][k][:, 0, :, :].reshape(C, 9), (1, 0)),
                 (1, bb))
        for k in range(S)])                                        # (S, 9, bbC)
    b_all = jnp.stack([
        jnp.tile(params["conv_b"][k].reshape(1, C), (1, bb))
        for k in range(S)])                                        # (S, 1, bbC)
    gam = jnp.tile(params["gamma"].reshape(1, C), (1, bb))         # (1, bbC)
    bet = jnp.tile(params["beta"].reshape(1, C), (1, bb))          # (1, bbC)
    # block-diagonal per-image channel-averaging matrix for the LayerNorm reduce
    mmean = jnp.asarray(np.kron(np.eye(bb, dtype=np.float32),
                                np.full((C, C), 1.0 / C, dtype=np.float32)))

    kernel = _make_fused_kernel(tuple(plan), S, n_pool, HW, bbC, W, CH, PADR,
                                has_chunked)

    in_specs = [pl.BlockSpec((1, HW, bbC), lambda g: (g, 0, 0))]
    in_specs += [pl.BlockSpec(p.shape, lambda g: (0, 0)) for p in pool_mats_j]
    in_specs += [pl.BlockSpec(m.shape, lambda g: (0, 0)) for m in masks_j]
    in_specs += [
        pl.BlockSpec((S, 9, bbC), lambda g: (0, 0, 0)),
        pl.BlockSpec((S, 1, bbC), lambda g: (0, 0, 0)),
        pl.BlockSpec((1, bbC), lambda g: (0, 0)),
        pl.BlockSpec((1, bbC), lambda g: (0, 0)),
        pl.BlockSpec((bbC, bbC), lambda g: (0, 0)),
    ]
    scratch_shapes = ([pltpu.VMEM((HW + 2 * PADR, bbC), jnp.float32)]
                      if has_chunked else [])

    out = pl.pallas_call(
        kernel,
        out_shape=jax.ShapeDtypeStruct((G, L_total_pad, bbC), x.dtype),
        grid_spec=pltpu.PrefetchScalarGridSpec(
            num_scalar_prefetch=0,
            grid=(G,),
            in_specs=in_specs,
            out_specs=pl.BlockSpec((1, L_total_pad, bbC), lambda g: (g, 0, 0)),
            scratch_shapes=scratch_shapes,
        ),
        compiler_params=pltpu.CompilerParams(
            dimension_semantics=("parallel",)),
    )(xg, *pool_mats_j, *masks_j, w_all, b_all, gam, bet, mmean)

    # strip the per-scale 8-row padding, then unpack lanes: (G, L, bb*C) -> (B,N,L,C)
    out = jnp.concatenate([out[:, o:o + l, :] for (o, l) in seg], axis=1)
    L_total = out.shape[1]
    out = out.reshape(G, L_total, bb, C)
    out = jnp.transpose(out, (0, 2, 1, 3)).reshape(B, N, L_total, C)
    return out


# ----------------------------- pure-JAX reference -------------------------------
def reference_forward(x, redu_ratios, params):
    B, N, C, H, W = x.shape
    xr = x.reshape(B * N, C, H, W)
    outs = []
    for k, r in enumerate(redu_ratios):
        Ho = round(H / r)
        Wo = round(W / r)
        hw = _adaptive_windows(H, Ho)
        ww = _adaptive_windows(W, Wo)
        pooled = jnp.stack([
            jnp.stack([jnp.mean(xr[:, :, hs:he, ws:we], axis=(2, 3))
                       for (ws, we) in ww], axis=-1)
            for (hs, he) in hw], axis=-2)                      # (BN, C, Ho, Wo)
        conv = lax.conv_general_dilated(
            pooled, params["conv_w"][k], window_strides=(1, 1),
            padding=((1, 1), (1, 1)), feature_group_count=C,
            dimension_numbers=("NCHW", "OIHW", "NCHW"),
            precision=lax.Precision.HIGHEST)
        conv = conv + params["conv_b"][k].reshape(1, C, 1, 1)
        p = pooled + conv
        outs.append(p.reshape(B * N, C, -1))
    pools = jnp.concatenate(outs, axis=2)
    pools = jnp.transpose(pools, (0, 2, 1))                    # (BN, L, C)
    mean = jnp.mean(pools, axis=-1, keepdims=True)
    var = jnp.mean((pools - mean) ** 2, axis=-1, keepdims=True)
    pools = (pools - mean) / jnp.sqrt(var + LN_EPS)
    pools = pools * params["gamma"] + params["beta"]
    return pools.reshape(B, N, -1, C)


if __name__ == "__main__":
    key = jax.random.PRNGKey(0)
    B, N, C, H, W = 2, 2, 32, 16, 16          # dim = C = 32
    redu_ratios = [1, 2, 3, 4]                # one ratio per depthwise conv

    k_x, k_w, k_b, k_g, k_bt = jax.random.split(key, 5)
    x = jax.random.normal(k_x, (B, N, C, H, W), dtype=jnp.float32)
    params = {
        "conv_w": [0.1 * jax.random.normal(jax.random.fold_in(k_w, i),
                                           (C, 1, 3, 3), dtype=jnp.float32)
                   for i in range(4)],
        "conv_b": [0.1 * jax.random.normal(jax.random.fold_in(k_b, i),
                                           (C,), dtype=jnp.float32)
                   for i in range(4)],
        "gamma": 1.0 + 0.1 * jax.random.normal(k_g, (C,), dtype=jnp.float32),
        "beta": 0.1 * jax.random.normal(k_bt, (C,), dtype=jnp.float32),
    }

    out = pooling_mhsa_forward(x, redu_ratios, params)
    out = jax.block_until_ready(out)

    ref = reference_forward(x, redu_ratios, params)
    assert out.shape == ref.shape, (out.shape, ref.shape)
    # Tolerance 2e-2: pooling matrices ride the MXU in bf16 and the LayerNorm
    # reductions use default (bf16-pass) MXU precision; the r=1 scale is now exact
    # in the pooling step (identity special case).
    np.testing.assert_allclose(np.asarray(out), np.asarray(ref),
                               atol=2e-2, rtol=2e-2)
    print("KERNEL_OK")
</pallas_src>

<mosaic_0001>
module attributes {stable_mosaic.version = 11 : i64} {
  func.func @kernel(%arg0: i32, %arg1: memref<1x256x128xf32, #tpu.memory_space<vmem>>, %arg2: memref<64x256xbf16, #tpu.memory_space<vmem>>, %arg3: memref<32x256xbf16, #tpu.memory_space<vmem>>, %arg4: memref<16x256xbf16, #tpu.memory_space<vmem>>, %arg5: memref<64x9xf32, #tpu.memory_space<vmem>>, %arg6: memref<64x9xf32, #tpu.memory_space<vmem>>, %arg7: memref<32x9xf32, #tpu.memory_space<vmem>>, %arg8: memref<16x9xf32, #tpu.memory_space<vmem>>, %arg9: memref<4x9x128xf32, #tpu.memory_space<vmem>>, %arg10: memref<4x1x128xf32, #tpu.memory_space<vmem>>, %arg11: memref<1x128xf32, #tpu.memory_space<vmem>>, %arg12: memref<1x128xf32, #tpu.memory_space<vmem>>, %arg13: memref<128x128xf32, #tpu.memory_space<vmem>>, %arg14: memref<1x368x128xf32, #tpu.memory_space<vmem>>, %arg15: memref<288x128xf32, #tpu.memory_space<vmem>>) attributes {dimension_semantics = [#tpu.dimension_semantics<parallel>], iteration_bounds = array<i64: 1>, scalar_prefetch = 0 : i64, scratch_operands = 1 : i64, tpu.core_type = #tpu.core_type<tc>, window_params = [{transform_indices = @transform_0, window_bounds = array<i64: 1, 256, 128>}, {pipeline_mode = #tpu.pipeline_mode<synchronous>, transform_indices = @transform_1, window_bounds = array<i64: 64, 256>}, {pipeline_mode = #tpu.pipeline_mode<synchronous>, transform_indices = @transform_2, window_bounds = array<i64: 32, 256>}, {pipeline_mode = #tpu.pipeline_mode<synchronous>, transform_indices = @transform_3, window_bounds = array<i64: 16, 256>}, {pipeline_mode = #tpu.pipeline_mode<synchronous>, transform_indices = @transform_4, window_bounds = array<i64: 64, 9>}, {pipeline_mode = #tpu.pipeline_mode<synchronous>, transform_indices = @transform_5, window_bounds = array<i64: 64, 9>}, {pipeline_mode = #tpu.pipeline_mode<synchronous>, transform_indices = @transform_6, window_bounds = array<i64: 32, 9>}, {pipeline_mode = #tpu.pipeline_mode<synchronous>, transform_indices = @transform_7, window_bounds = array<i64: 16, 9>}, {pipeline_mode = #tpu.pipeline_mode<synchronous>, transform_indices = @transform_8, window_bounds = array<i64: 4, 9, 128>}, {pipeline_mode = #tpu.pipeline_mode<synchronous>, transform_indices = @transform_9, window_bounds = array<i64: 4, 1, 128>}, {pipeline_mode = #tpu.pipeline_mode<synchronous>, transform_indices = @transform_10, window_bounds = array<i64: 1, 128>}, {pipeline_mode = #tpu.pipeline_mode<synchronous>, transform_indices = @transform_11, window_bounds = array<i64: 1, 128>}, {pipeline_mode = #tpu.pipeline_mode<synchronous>, transform_indices = @transform_12, window_bounds = array<i64: 128, 128>}, {transform_indices = @transform_13, window_bounds = array<i64: 1, 368, 128>}]} {
    %c0 = arith.constant 0 : index
    %c0_0 = arith.constant 0 : index
    %c0_1 = arith.constant 0 : index
    %0 = vector.load %arg1[%c0, %c0_0, %c0_1] : memref<1x256x128xf32, #tpu.memory_space<vmem>>, vector<1x256x128xf32>
    %1 = vector.shape_cast %0 : vector<1x256x128xf32> to vector<256x128xf32>
    %c0_2 = arith.constant 0 : index
    %c0_3 = arith.constant 0 : index
    %2 = vector.load %arg11[%c0_2, %c0_3] : memref<1x128xf32, #tpu.memory_space<vmem>>, vector<1x128xf32>
    %c0_4 = arith.constant 0 : index
    %c0_5 = arith.constant 0 : index
    %3 = vector.load %arg12[%c0_4, %c0_5] : memref<1x128xf32, #tpu.memory_space<vmem>>, vector<1x128xf32>
    %c0_6 = arith.constant 0 : index
    %c0_7 = arith.constant 0 : index
    %4 = vector.load %arg13[%c0_6, %c0_7] : memref<128x128xf32, #tpu.memory_space<vmem>>, vector<128x128xf32>
    %5 = arith.truncf %1 : vector<256x128xf32> to vector<256x128xbf16>
    %cst = arith.constant 0.000000e+00 : f32
    %6 = vector.broadcast %cst : f32 to vector<16x128xf32>
    %c0_8 = arith.constant 0 : index
    %c0_9 = arith.constant 0 : index
    %7 = vector.load %arg15[%c0_8, %c0_9] : memref<288x128xf32, #tpu.memory_space<vmem>>, vector<16x128xf32>
    tpu.vector_store %arg15[%c0_8, %c0_9], %6 {strides = array<i32>} : memref<288x128xf32, #tpu.memory_space<vmem>>, vector<16x128xf32>,
    %c16 = arith.constant 16 : index
    %c0_10 = arith.constant 0 : index
    %8 = vector.load %arg15[%c16, %c0_10] : memref<288x128xf32, #tpu.memory_space<vmem>>, vector<256x128xf32>
    tpu.vector_store %arg15[%c16, %c0_10], %1 {strides = array<i32>} : memref<288x128xf32, #tpu.memory_space<vmem>>, vector<256x128xf32>,
    %cst_11 = arith.constant 0.000000e+00 : f32
    %9 = vector.broadcast %cst_11 : f32 to vector<16x128xf32>
    %c272 = arith.constant 272 : index
    %c0_12 = arith.constant 0 : index
    %10 = vector.load %arg15[%c272, %c0_12] : memref<288x128xf32, #tpu.memory_space<vmem>>, vector<16x128xf32>
    tpu.vector_store %arg15[%c272, %c0_12], %9 {strides = array<i32>} : memref<288x128xf32, #tpu.memory_space<vmem>>, vector<16x128xf32>,
    %c0_13 = arith.constant 0 : index
    %c0_14 = arith.constant 0 : index
    %c0_15 = arith.constant 0 : index
    %11 = vector.load %arg9[%c0_13, %c0_14, %c0_15] : memref<4x9x128xf32, #tpu.memory_space<vmem>>, vector<1x9x128xf32>
    %12 = vector.shape_cast %11 : vector<1x9x128xf32> to vector<9x128xf32>
    %c0_16 = arith.constant 0 : index
    %c0_17 = arith.constant 0 : index
    %c0_18 = arith.constant 0 : index
    %13 = vector.load %arg10[%c0_16, %c0_17, %c0_18] : memref<4x1x128xf32, #tpu.memory_space<vmem>>, vector<1x1x128xf32>
    %14 = vector.shape_cast %13 : vector<1x1x128xf32> to vector<1x128xf32>
    %c0_19 = arith.constant 0 : index
    %c0_20 = arith.constant 0 : index
    %15 = vector.load %arg5[%c0_19, %c0_20] : memref<64x9xf32, #tpu.memory_space<vmem>>, vector<64x9xf32>
    %c0_i32 = arith.constant 0 : i32
    %c4_i32 = arith.constant 4 : i32
    %16 = arith.addi %c0_i32, %c4_i32 : i32
    %c1_i32 = arith.constant 1 : i32
    scf.for %arg16 = %c0_i32 to %16 step %c1_i32  : i32 {
      %c64_i32 = arith.constant 64 : i32
      %305 = arith.muli %arg16, %c64_i32 : i32
      %306 = tpu.assume_multiple %305, 8 : i32
      %307 = arith.index_cast %306 : i32 to index
      %c0_70 = arith.constant 0 : index
      %308 = vector.load %arg15[%307, %c0_70] : memref<288x128xf32, #tpu.memory_space<vmem>>, vector<96x128xf32>
      %309 = vector.extract_strided_slice %308 {offsets = [16, 0], sizes = [64, 128], strides = [1, 1]} : vector<96x128xf32> to vector<64x128xf32>
      %c17_i32 = arith.constant 17 : i32
      %310 = tpu.dynamic_rotate %308 by %c17_i32 dim 0 : vector<96x128xf32>, i32 -> vector<96x128xf32>
      %311 = vector.extract_strided_slice %310 {offsets = [16, 0], sizes = [64, 128], strides = [1, 1]} : vector<96x128xf32> to vector<64x128xf32>
      %312 = vector.extract_strided_slice %12 {offsets = [0, 0], sizes = [1, 128], strides = [1, 1]} : vector<9x128xf32> to vector<1x128xf32>
      %313 = vector.broadcast %312 : vector<1x128xf32> to vector<64x128xf32>
      %314 = arith.mulf %313, %311 : vector<64x128xf32>
      %315 = vector.extract_strided_slice %15 {offsets = [0, 0], sizes = [64, 1], strides = [1, 1]} : vector<64x9xf32> to vector<64x1xf32>
      %316 = vector.broadcast %315 : vector<64x1xf32> to vector<64x128xf32>
      %317 = arith.mulf %314, %316 : vector<64x128xf32>
      %318 = vector.broadcast %14 : vector<1x128xf32> to vector<64x128xf32>
      %319 = arith.addf %318, %317 : vector<64x128xf32>
      %c16_i32 = arith.constant 16 : i32
      %320 = tpu.dynamic_rotate %308 by %c16_i32 dim 0 : vector<96x128xf32>, i32 -> vector<96x128xf32>
      %321 = vector.extract_strided_slice %320 {offsets = [16, 0], sizes = [64, 128], strides = [1, 1]} : vector<96x128xf32> to vector<64x128xf32>
      %322 = vector.extract_strided_slice %12 {offsets = [1, 0], sizes = [1, 128], strides = [1, 1]} : vector<9x128xf32> to vector<1x128xf32>
      %323 = vector.broadcast %322 : vector<1x128xf32> to vector<64x128xf32>
      %324 = arith.mulf %323, %321 : vector<64x128xf32>
      %325 = arith.addf %319, %324 : vector<64x128xf32>
      %c15_i32_71 = arith.constant 15 : i32
      %326 = tpu.dynamic_rotate %308 by %c15_i32_71 dim 0 : vector<96x128xf32>, i32 -> vector<96x128xf32>
      %327 = vector.extract_strided_slice %326 {offsets = [16, 0], sizes = [64, 128], strides = [1, 1]} : vector<96x128xf32> to vector<64x128xf32>
      %328 = vector.extract_strided_slice %12 {offsets = [2, 0], sizes = [1, 128], strides = [1, 1]} : vector<9x128xf32> to vector<1x128xf32>
      %329 = vector.broadcast %328 : vector<1x128xf32> to vector<64x128xf32>
      %330 = arith.mulf %329, %327 : vector<64x128xf32>
      %331 = vector.extract_strided_slice %15 {offsets = [0, 2], sizes = [64, 1], strides = [1, 1]} : vector<64x9xf32> to vector<64x1xf32>
      %332 = vector.broadcast %331 : vector<64x1xf32> to vector<64x128xf32>
      %333 = arith.mulf %330, %332 : vector<64x128xf32>
      %334 = arith.addf %325, %333 : vector<64x128xf32>
      %c1_i32_72 = arith.constant 1 : i32
      %335 = tpu.dynamic_rotate %308 by %c1_i32_72 dim 0 : vector<96x128xf32>, i32 -> vector<96x128xf32>
      %336 = vector.extract_strided_slice %335 {offsets = [16, 0], sizes = [64, 128], strides = [1, 1]} : vector<96x128xf32> to vector<64x128xf32>
      %337 = vector.extract_strided_slice %12 {offsets = [3, 0], sizes = [1, 128], strides = [1, 1]} : vector<9x128xf32> to vector<1x128xf32>
      %338 = vector.broadcast %337 : vector<1x128xf32> to vector<64x128xf32>
      %339 = arith.mulf %338, %336 : vector<64x128xf32>
      %340 = vector.extract_strided_slice %15 {offsets = [0, 3], sizes = [64, 1], strides = [1, 1]} : vector<64x9xf32> to vector<64x1xf32>
      %341 = vector.broadcast %340 : vector<64x1xf32> to vector<64x128xf32>
      %342 = arith.mulf %339, %341 : vector<64x128xf32>
      %343 = arith.addf %334, %342 : vector<64x128xf32>
      %344 = vector.extract_strided_slice %12 {offsets = [4, 0], sizes = [1, 128], strides = [1, 1]} : vector<9x128xf32> to vector<1x128xf32>
      %345 = vector.broadcast %344 : vector<1x128xf32> to vector<64x128xf32>
      %346 = arith.mulf %345, %309 : vector<64x128xf32>
      %347 = arith.addf %343, %346 : vector<64x128xf32>
      %c95_i32 = arith.constant 95 : i32
      %348 = tpu.dynamic_rotate %308 by %c95_i32 dim 0 : vector<96x128xf32>, i32 -> vector<96x128xf32>
      %349 = vector.extract_strided_slice %348 {offsets = [16, 0], sizes = [64, 128], strides = [1, 1]} : vector<96x128xf32> to vector<64x128xf32>
      %350 = vector.extract_strided_slice %12 {offsets = [5, 0], sizes = [1, 128], strides = [1, 1]} : vector<9x128xf32> to vector<1x128xf32>
      %351 = vector.broadcast %350 : vector<1x128xf32> to vector<64x128xf32>
      %352 = arith.mulf %351, %349 : vector<64x128xf32>
      %353 = vector.extract_strided_slice %15 {offsets = [0, 5], sizes = [64, 1], strides = [1, 1]} : vector<64x9xf32> to vector<64x1xf32>
      %354 = vector.broadcast %353 : vector<64x1xf32> to vector<64x128xf32>
      %355 = arith.mulf %352, %354 : vector<64x128xf32>
      %356 = arith.addf %347, %355 : vector<64x128xf32>
      %c81_i32 = arith.constant 81 : i32
      %357 = tpu.dynamic_rotate %308 by %c81_i32 dim 0 : vector<96x128xf32>, i32 -> vector<96x128xf32>
      %358 = vector.extract_strided_slice %357 {offsets = [16, 0], sizes = [64, 128], strides = [1, 1]} : vector<96x128xf32> to vector<64x128xf32>
      %359 = vector.extract_strided_slice %12 {offsets = [6, 0], sizes = [1, 128], strides = [1, 1]} : vector<9x128xf32> to vector<1x128xf32>
      %360 = vector.broadcast %359 : vector<1x128xf32> to vector<64x128xf32>
      %361 = arith.mulf %360, %358 : vector<64x128xf32>
      %362 = vector.extract_strided_slice %15 {offsets = [0, 6], sizes = [64, 1], strides = [1, 1]} : vector<64x9xf32> to vector<64x1xf32>
      %363 = vector.broadcast %362 : vector<64x1xf32> to vector<64x128xf32>
      %364 = arith.mulf %361, %363 : vector<64x128xf32>
      %365 = arith.addf %356, %364 : vector<64x128xf32>
      %c80_i32 = arith.constant 80 : i32
      %366 = tpu.dynamic_rotate %308 by %c80_i32 dim 0 : vector<96x128xf32>, i32 -> vector<96x128xf32>
      %367 = vector.extract_strided_slice %366 {offsets = [16, 0], sizes = [64, 128], strides = [1, 1]} : vector<96x128xf32> to vector<64x128xf32>
      %368 = vector.extract_strided_slice %12 {offsets = [7, 0], sizes = [1, 128], strides = [1, 1]} : vector<9x128xf32> to vector<1x128xf32>
      %369 = vector.broadcast %368 : vector<1x128xf32> to vector<64x128xf32>
      %370 = arith.mulf %369, %367 : vector<64x128xf32>
      %371 = arith.addf %365, %370 : vector<64x128xf32>
      %c79_i32 = arith.constant 79 : i32
      %372 = tpu.dynamic_rotate %308 by %c79_i32 dim 0 : vector<96x128xf32>, i32 -> vector<96x128xf32>
      %373 = vector.extract_strided_slice %372 {offsets = [16, 0], sizes = [64, 128], strides = [1, 1]} : vector<96x128xf32> to vector<64x128xf32>
      %374 = vector.extract_strided_slice %12 {offsets = [8, 0], sizes = [1, 128], strides = [1, 1]} : vector<9x128xf32> to vector<1x128xf32>
      %375 = vector.broadcast %374 : vector<1x128xf32> to vector<64x128xf32>
      %376 = arith.mulf %375, %373 : vector<64x128xf32>
      %377 = vector.extract_strided_slice %15 {offsets = [0, 8], sizes = [64, 1], strides = [1, 1]} : vector<64x9xf32> to vector<64x1xf32>
      %378 = vector.broadcast %377 : vector<64x1xf32> to vector<64x128xf32>
      %379 = arith.mulf %376, %378 : vector<64x128xf32>
      %380 = arith.addf %371, %379 : vector<64x128xf32>
      %381 = arith.addf %309, %380 : vector<64x128xf32>
      %382 = arith.mulf %381, %381 : vector<64x128xf32>
      %383 = tpu.concatenate %381, %382 in 0 : vector<64x128xf32>, vector<64x128xf32> -> vector<128x128xf32>
      %cst_73 = arith.constant dense<0.000000e+00> : vector<128x128xf32>
      %384 = tpu.matmul %383, %4, %cst_73 {dimension_numbers = #tpu.dot_dimension_numbers<[1], [0], [0], [1], [0, 0, 1, 1], [], []>} : vector<128x128xf32>, vector<128x128xf32>, vector<128x128xf32> -> vector<128x128xf32>
      %385 = vector.extract_strided_slice %384 {offsets = [0, 0], sizes = [64, 128], strides = [1, 1]} : vector<128x128xf32> to vector<64x128xf32>
      %386 = vector.extract_strided_slice %384 {offsets = [64, 0], sizes = [64, 128], strides = [1, 1]} : vector<128x128xf32> to vector<64x128xf32>
      %387 = arith.mulf %385, %385 : vector<64x128xf32>
      %388 = arith.subf %386, %387 : vector<64x128xf32>
      %389 = arith.subf %381, %385 : vector<64x128xf32>
      %cst_74 = arith.constant 9.99999974E-6 : f32
      %390 = vector.broadcast %cst_74 : f32 to vector<64x128xf32>
      %391 = arith.addf %388, %390 : vector<64x128xf32>
      %392 = math.rsqrt %391 : vector<64x128xf32>
      %393 = arith.mulf %389, %392 : vector<64x128xf32>
      %394 = vector.broadcast %2 : vector<1x128xf32> to vector<64x128xf32>
      %395 = arith.mulf %393, %394 : vector<64x128xf32>
      %396 = vector.broadcast %3 : vector<1x128xf32> to vector<64x128xf32>
      %397 = arith.addf %395, %396 : vector<64x128xf32>
      %c0_i32_75 = arith.constant 0 : i32
      %398 = arith.addi %c0_i32_75, %306 : i32
      %399 = tpu.assume_multiple %398, 8 : i32
      %c0_76 = arith.constant 0 : index
      %400 = arith.index_cast %399 : i32 to index
      %c0_77 = arith.constant 0 : index
      %401 = vector.load %arg14[%c0_76, %400, %c0_77] : memref<1x368x128xf32, #tpu.memory_space<vmem>>, vector<1x64x128xf32>
      %402 = vector.shape_cast %401 : vector<1x64x128xf32> to vector<64x128xf32>
      %403 = vector.shape_cast %397 : vector<64x128xf32> to vector<1x64x128xf32>
      tpu.vector_store %arg14[%c0_76, %400, %c0_77], %403 {strides = array<i32>} : memref<1x368x128xf32, #tpu.memory_space<vmem>>, vector<1x64x128xf32>,
    }
    %c4_i32_21 = arith.constant 4 : i32
    %c1 = arith.constant 1 : index
    %c0_22 = arith.constant 0 : index
    %c0_23 = arith.constant 0 : index
    %17 = vector.load %arg9[%c1, %c0_22, %c0_23] : memref<4x9x128xf32, #tpu.memory_space<vmem>>, vector<1x9x128xf32>
    %18 = vector.shape_cast %17 : vector<1x9x128xf32> to vector<9x128xf32>
    %c1_24 = arith.constant 1 : index
    %c0_25 = arith.constant 0 : index
    %c0_26 = arith.constant 0 : index
    %19 = vector.load %arg10[%c1_24, %c0_25, %c0_26] : memref<4x1x128xf32, #tpu.memory_space<vmem>>, vector<1x1x128xf32>
    %20 = vector.shape_cast %19 : vector<1x1x128xf32> to vector<1x128xf32>
    %c0_27 = arith.constant 0 : index
    %c0_28 = arith.constant 0 : index
    %21 = vector.load %arg6[%c0_27, %c0_28] : memref<64x9xf32, #tpu.memory_space<vmem>>, vector<64x9xf32>
    %c0_29 = arith.constant 0 : index
    %c0_30 = arith.constant 0 : index
    %22 = vector.load %arg2[%c0_29, %c0_30] : memref<64x256xbf16, #tpu.memory_space<vmem>>, vector<64x256xbf16>
    %cst_31 = arith.constant dense<0.000000e+00> : vector<64x128xf32>
    %23 = tpu.matmul %22, %5, %cst_31 {dimension_numbers = #tpu.dot_dimension_numbers<[1], [0], [0], [1], [0, 0, 1, 1], [], []>} : vector<64x256xbf16>, vector<256x128xbf16>, vector<64x128xf32> -> vector<64x128xf32>
    %c9_i32 = arith.constant 9 : i32
    %24 = tpu.dynamic_rotate %23 by %c9_i32 dim 0 : vector<64x128xf32>, i32 -> vector<64x128xf32>
    %25 = vector.extract_strided_slice %18 {offsets = [0, 0], sizes = [1, 128], strides = [1, 1]} : vector<9x128xf32> to vector<1x128xf32>
    %26 = vector.broadcast %25 : vector<1x128xf32> to vector<64x128xf32>
    %27 = arith.mulf %26, %24 : vector<64x128xf32>
    %28 = vector.extract_strided_slice %21 {offsets = [0, 0], sizes = [64, 1], strides = [1, 1]} : vector<64x9xf32> to vector<64x1xf32>
    %29 = vector.broadcast %28 : vector<64x1xf32> to vector<64x128xf32>
    %30 = arith.mulf %27, %29 : vector<64x128xf32>
    %31 = vector.broadcast %20 : vector<1x128xf32> to vector<64x128xf32>
    %32 = arith.addf %31, %30 : vector<64x128xf32>
    %c8_i32 = arith.constant 8 : i32
    %33 = tpu.dynamic_rotate %23 by %c8_i32 dim 0 : vector<64x128xf32>, i32 -> vector<64x128xf32>
    %34 = vector.extract_strided_slice %18 {offsets = [1, 0], sizes = [1, 128], strides = [1, 1]} : vector<9x128xf32> to vector<1x128xf32>
    %35 = vector.broadcast %34 : vector<1x128xf32> to vector<64x128xf32>
    %36 = arith.mulf %35, %33 : vector<64x128xf32>
    %37 = vector.extract_strided_slice %21 {offsets = [0, 1], sizes = [64, 1], strides = [1, 1]} : vector<64x9xf32> to vector<64x1xf32>
    %38 = vector.broadcast %37 : vector<64x1xf32> to vector<64x128xf32>
    %39 = arith.mulf %36, %38 : vector<64x128xf32>
    %40 = arith.addf %32, %39 : vector<64x128xf32>
    %c7_i32 = arith.constant 7 : i32
    %41 = tpu.dynamic_rotate %23 by %c7_i32 dim 0 : vector<64x128xf32>, i32 -> vector<64x128xf32>
    %42 = vector.extract_strided_slice %18 {offsets = [2, 0], sizes = [1, 128], strides = [1, 1]} : vector<9x128xf32> to vector<1x128xf32>
    %43 = vector.broadcast %42 : vector<1x128xf32> to vector<64x128xf32>
    %44 = arith.mulf %43, %41 : vector<64x128xf32>
    %45 = vector.extract_strided_slice %21 {offsets = [0, 2], sizes = [64, 1], strides = [1, 1]} : vector<64x9xf32> to vector<64x1xf32>
    %46 = vector.broadcast %45 : vector<64x1xf32> to vector<64x128xf32>
    %47 = arith.mulf %44, %46 : vector<64x128xf32>
    %48 = arith.addf %40, %47 : vector<64x128xf32>
    %c1_i32_32 = arith.constant 1 : i32
    %49 = tpu.dynamic_rotate %23 by %c1_i32_32 dim 0 : vector<64x128xf32>, i32 -> vector<64x128xf32>
    %50 = vector.extract_strided_slice %18 {offsets = [3, 0], sizes = [1, 128], strides = [1, 1]} : vector<9x128xf32> to vector<1x128xf32>
    %51 = vector.broadcast %50 : vector<1x128xf32> to vector<64x128xf32>
    %52 = arith.mulf %51, %49 : vector<64x128xf32>
    %53 = vector.extract_strided_slice %21 {offsets = [0, 3], sizes = [64, 1], strides = [1, 1]} : vector<64x9xf32> to vector<64x1xf32>
    %54 = vector.broadcast %53 : vector<64x1xf32> to vector<64x128xf32>
    %55 = arith.mulf %52, %54 : vector<64x128xf32>
    %56 = arith.addf %48, %55 : vector<64x128xf32>
    %57 = vector.extract_strided_slice %18 {offsets = [4, 0], sizes = [1, 128], strides = [1, 1]} : vector<9x128xf32> to vector<1x128xf32>
    %58 = vector.broadcast %57 : vector<1x128xf32> to vector<64x128xf32>
    %59 = arith.mulf %58, %23 : vector<64x128xf32>
    %60 = arith.addf %56, %59 : vector<64x128xf32>
    %c63_i32 = arith.constant 63 : i32
    %61 = tpu.dynamic_rotate %23 by %c63_i32 dim 0 : vector<64x128xf32>, i32 -> vector<64x128xf32>
    %62 = vector.extract_strided_slice %18 {offsets = [5, 0], sizes = [1, 128], strides = [1, 1]} : vector<9x128xf32> to vector<1x128xf32>
    %63 = vector.broadcast %62 : vector<1x128xf32> to vector<64x128xf32>
    %64 = arith.mulf %63, %61 : vector<64x128xf32>
    %65 = vector.extract_strided_slice %21 {offsets = [0, 5], sizes = [64, 1], strides = [1, 1]} : vector<64x9xf32> to vector<64x1xf32>
    %66 = vector.broadcast %65 : vector<64x1xf32> to vector<64x128xf32>
    %67 = arith.mulf %64, %66 : vector<64x128xf32>
    %68 = arith.addf %60, %67 : vector<64x128xf32>
    %c57_i32 = arith.constant 57 : i32
    %69 = tpu.dynamic_rotate %23 by %c57_i32 dim 0 : vector<64x128xf32>, i32 -> vector<64x128xf32>
    %70 = vector.extract_strided_slice %18 {offsets = [6, 0], sizes = [1, 128], strides = [1, 1]} : vector<9x128xf32> to vector<1x128xf32>
    %71 = vector.broadcast %70 : vector<1x128xf32> to vector<64x128xf32>
    %72 = arith.mulf %71, %69 : vector<64x128xf32>
    %73 = vector.extract_strided_slice %21 {offsets = [0, 6], sizes = [64, 1], strides = [1, 1]} : vector<64x9xf32> to vector<64x1xf32>
    %74 = vector.broadcast %73 : vector<64x1xf32> to vector<64x128xf32>
    %75 = arith.mulf %72, %74 : vector<64x128xf32>
    %76 = arith.addf %68, %75 : vector<64x128xf32>
    %c56_i32 = arith.constant 56 : i32
    %77 = tpu.dynamic_rotate %23 by %c56_i32 dim 0 : vector<64x128xf32>, i32 -> vector<64x128xf32>
    %78 = vector.extract_strided_slice %18 {offsets = [7, 0], sizes = [1, 128], strides = [1, 1]} : vector<9x128xf32> to vector<1x128xf32>
    %79 = vector.broadcast %78 : vector<1x128xf32> to vector<64x128xf32>
    %80 = arith.mulf %79, %77 : vector<64x128xf32>
    %81 = vector.extract_strided_slice %21 {offsets = [0, 7], sizes = [64, 1], strides = [1, 1]} : vector<64x9xf32> to vector<64x1xf32>
    %82 = vector.broadcast %81 : vector<64x1xf32> to vector<64x128xf32>
    %83 = arith.mulf %80, %82 : vector<64x128xf32>
    %84 = arith.addf %76, %83 : vector<64x128xf32>
    %c55_i32 = arith.constant 55 : i32
    %85 = tpu.dynamic_rotate %23 by %c55_i32 dim 0 : vector<64x128xf32>, i32 -> vector<64x128xf32>
    %86 = vector.extract_strided_slice %18 {offsets = [8, 0], sizes = [1, 128], strides = [1, 1]} : vector<9x128xf32> to vector<1x128xf32>
    %87 = vector.broadcast %86 : vector<1x128xf32> to vector<64x128xf32>
    %88 = arith.mulf %87, %85 : vector<64x128xf32>
    %89 = vector.extract_strided_slice %21 {offsets = [0, 8], sizes = [64, 1], strides = [1, 1]} : vector<64x9xf32> to vector<64x1xf32>
    %90 = vector.broadcast %89 : vector<64x1xf32> to vector<64x128xf32>
    %91 = arith.mulf %88, %90 : vector<64x128xf32>
    %92 = arith.addf %84, %91 : vector<64x128xf32>
    %93 = arith.addf %23, %92 : vector<64x128xf32>
    %94 = arith.mulf %93, %93 : vector<64x128xf32>
    %95 = tpu.concatenate %93, %94 in 0 : vector<64x128xf32>, vector<64x128xf32> -> vector<128x128xf32>
    %cst_33 = arith.constant dense<0.000000e+00> : vector<128x128xf32>
    %96 = tpu.matmul %95, %4, %cst_33 {dimension_numbers = #tpu.dot_dimension_numbers<[1], [0], [0], [1], [0, 0, 1, 1], [], []>} : vector<128x128xf32>, vector<128x128xf32>, vector<128x128xf32> -> vector<128x128xf32>
    %97 = vector.extract_strided_slice %96 {offsets = [0, 0], sizes = [64, 128], strides = [1, 1]} : vector<128x128xf32> to vector<64x128xf32>
    %98 = vector.extract_strided_slice %96 {offsets = [64, 0], sizes = [64, 128], strides = [1, 1]} : vector<128x128xf32> to vector<64x128xf32>
    %99 = arith.mulf %97, %97 : vector<64x128xf32>
    %100 = arith.subf %98, %99 : vector<64x128xf32>
    %101 = arith.subf %93, %97 : vector<64x128xf32>
    %cst_34 = arith.constant 9.99999974E-6 : f32
    %102 = vector.broadcast %cst_34 : f32 to vector<64x128xf32>
    %103 = arith.addf %100, %102 : vector<64x128xf32>
    %104 = math.rsqrt %103 : vector<64x128xf32>
    %105 = arith.mulf %101, %104 : vector<64x128xf32>
    %106 = vector.broadcast %2 : vector<1x128xf32> to vector<64x128xf32>
    %107 = arith.mulf %105, %106 : vector<64x128xf32>
    %108 = vector.broadcast %3 : vector<1x128xf32> to vector<64x128xf32>
    %109 = arith.addf %107, %108 : vector<64x128xf32>
    %c0_35 = arith.constant 0 : index
    %c256 = arith.constant 256 : index
    %c0_36 = arith.constant 0 : index
    %110 = vector.load %arg14[%c0_35, %c256, %c0_36] : memref<1x368x128xf32, #tpu.memory_space<vmem>>, vector<1x64x128xf32>
    %111 = vector.shape_cast %110 : vector<1x64x128xf32> to vector<64x128xf32>
    %112 = vector.shape_cast %109 : vector<64x128xf32> to vector<1x64x128xf32>
    tpu.vector_store %arg14[%c0_35, %c256, %c0_36], %112 {strides = array<i32>} : memref<1x368x128xf32, #tpu.memory_space<vmem>>, vector<1x64x128xf32>,
    %c2 = arith.constant 2 : index
    %c0_37 = arith.constant 0 : index
    %c0_38 = arith.constant 0 : index
    %113 = vector.load %arg9[%c2, %c0_37, %c0_38] : memref<4x9x128xf32, #tpu.memory_space<vmem>>, vector<1x9x128xf32>
    %114 = vector.shape_cast %113 : vector<1x9x128xf32> to vector<9x128xf32>
    %c2_39 = arith.constant 2 : index
    %c0_40 = arith.constant 0 : index
    %c0_41 = arith.constant 0 : index
    %115 = vector.load %arg10[%c2_39, %c0_40, %c0_41] : memref<4x1x128xf32, #tpu.memory_space<vmem>>, vector<1x1x128xf32>
    %116 = vector.shape_cast %115 : vector<1x1x128xf32> to vector<1x128xf32>
    %c0_42 = arith.constant 0 : index
    %c0_43 = arith.constant 0 : index
    %117 = vector.load %arg7[%c0_42, %c0_43] : memref<32x9xf32, #tpu.memory_space<vmem>>, vector<32x9xf32>
    %c0_44 = arith.constant 0 : index
    %c0_45 = arith.constant 0 : index
    %118 = vector.load %arg3[%c0_44, %c0_45] : memref<32x256xbf16, #tpu.memory_space<vmem>>, vector<32x256xbf16>
    %cst_46 = arith.constant dense<0.000000e+00> : vector<32x128xf32>
    %119 = tpu.matmul %118, %5, %cst_46 {dimension_numbers = #tpu.dot_dimension_numbers<[1], [0], [0], [1], [0, 0, 1, 1], [], []>} : vector<32x256xbf16>, vector<256x128xbf16>, vector<32x128xf32> -> vector<32x128xf32>
    %c6_i32 = arith.constant 6 : i32
    %120 = tpu.dynamic_rotate %119 by %c6_i32 dim 0 : vector<32x128xf32>, i32 -> vector<32x128xf32>
    %121 = vector.extract_strided_slice %114 {offsets = [0, 0], sizes = [1, 128], strides = [1, 1]} : vector<9x128xf32> to vector<1x128xf32>
    %122 = vector.broadcast %121 : vector<1x128xf32> to vector<32x128xf32>
    %123 = arith.mulf %122, %120 : vector<32x128xf32>
    %124 = vector.extract_strided_slice %117 {offsets = [0, 0], sizes = [32, 1], strides = [1, 1]} : vector<32x9xf32> to vector<32x1xf32>
    %125 = vector.broadcast %124 : vector<32x1xf32> to vector<32x128xf32>
    %126 = arith.mulf %123, %125 : vector<32x128xf32>
    %127 = vector.broadcast %116 : vector<1x128xf32> to vector<32x128xf32>
    %128 = arith.addf %127, %126 : vector<32x128xf32>
    %c5_i32 = arith.constant 5 : i32
    %129 = tpu.dynamic_rotate %119 by %c5_i32 dim 0 : vector<32x128xf32>, i32 -> vector<32x128xf32>
    %130 = vector.extract_strided_slice %114 {offsets = [1, 0], sizes = [1, 128], strides = [1, 1]} : vector<9x128xf32> to vector<1x128xf32>
    %131 = vector.broadcast %130 : vector<1x128xf32> to vector<32x128xf32>
    %132 = arith.mulf %131, %129 : vector<32x128xf32>
    %133 = vector.extract_strided_slice %117 {offsets = [0, 1], sizes = [32, 1], strides = [1, 1]} : vector<32x9xf32> to vector<32x1xf32>
    %134 = vector.broadcast %133 : vector<32x1xf32> to vector<32x128xf32>
    %135 = arith.mulf %132, %134 : vector<32x128xf32>
    %136 = arith.addf %128, %135 : vector<32x128xf32>
    %c4_i32_47 = arith.constant 4 : i32
    %137 = tpu.dynamic_rotate %119 by %c4_i32_47 dim 0 : vector<32x128xf32>, i32 -> vector<32x128xf32>
    %138 = vector.extract_strided_slice %114 {offsets = [2, 0], sizes = [1, 128], strides = [1, 1]} : vector<9x128xf32> to vector<1x128xf32>
    %139 = vector.broadcast %138 : vector<1x128xf32> to vector<32x128xf32>
    %140 = arith.mulf %139, %137 : vector<32x128xf32>
    %141 = vector.extract_strided_slice %117 {offsets = [0, 2], sizes = [32, 1], strides = [1, 1]} : vector<32x9xf32> to vector<32x1xf32>
    %142 = vector.broadcast %141 : vector<32x1xf32> to vector<32x128xf32>
    %143 = arith.mulf %140, %142 : vector<32x128xf32>
    %144 = arith.addf %136, %143 : vector<32x128xf32>
    %c1_i32_48 = arith.constant 1 : i32
    %145 = tpu.dynamic_rotate %119 by %c1_i32_48 dim 0 : vector<32x128xf32>, i32 -> vector<32x128xf32>
    %146 = vector.extract_strided_slice %114 {offsets = [3, 0], sizes = [1, 128], strides = [1, 1]} : vector<9x128xf32> to vector<1x128xf32>
    %147 = vector.broadcast %146 : vector<1x128xf32> to vector<32x128xf32>
    %148 = arith.mulf %147, %145 : vector<32x128xf32>
    %149 = vector.extract_strided_slice %117 {offsets = [0, 3], sizes = [32, 1], strides = [1, 1]} : vector<32x9xf32> to vector<32x1xf32>
    %150 = vector.broadcast %149 : vector<32x1xf32> to vector<32x128xf32>
    %151 = arith.mulf %148, %150 : vector<32x128xf32>
    %152 = arith.addf %144, %151 : vector<32x128xf32>
    %153 = vector.extract_strided_slice %114 {offsets = [4, 0], sizes = [1, 128], strides = [1, 1]} : vector<9x128xf32> to vector<1x128xf32>
    %154 = vector.broadcast %153 : vector<1x128xf32> to vector<32x128xf32>
    %155 = arith.mulf %154, %119 : vector<32x128xf32>
    %156 = arith.addf %152, %155 : vector<32x128xf32>
    %c31_i32 = arith.constant 31 : i32
    %157 = tpu.dynamic_rotate %119 by %c31_i32 dim 0 : vector<32x128xf32>, i32 -> vector<32x128xf32>
    %158 = vector.extract_strided_slice %114 {offsets = [5, 0], sizes = [1, 128], strides = [1, 1]} : vector<9x128xf32> to vector<1x128xf32>
    %159 = vector.broadcast %158 : vector<1x128xf32> to vector<32x128xf32>
    %160 = arith.mulf %159, %157 : vector<32x128xf32>
    %161 = vector.extract_strided_slice %117 {offsets = [0, 5], sizes = [32, 1], strides = [1, 1]} : vector<32x9xf32> to vector<32x1xf32>
    %162 = vector.broadcast %161 : vector<32x1xf32> to vector<32x128xf32>
    %163 = arith.mulf %160, %162 : vector<32x128xf32>
    %164 = arith.addf %156, %163 : vector<32x128xf32>
    %c28_i32 = arith.constant 28 : i32
    %165 = tpu.dynamic_rotate %119 by %c28_i32 dim 0 : vector<32x128xf32>, i32 -> vector<32x128xf32>
    %166 = vector.extract_strided_slice %114 {offsets = [6, 0], sizes = [1, 128], strides = [1, 1]} : vector<9x128xf32> to vector<1x128xf32>
    %167 = vector.broadcast %166 : vector<1x128xf32> to vector<32x128xf32>
    %168 = arith.mulf %167, %165 : vector<32x128xf32>
    %169 = vector.extract_strided_slice %117 {offsets = [0, 6], sizes = [32, 1], strides = [1, 1]} : vector<32x9xf32> to vector<32x1xf32>
    %170 = vector.broadcast %169 : vector<32x1xf32> to vector<32x128xf32>
    %171 = arith.mulf %168, %170 : vector<32x128xf32>
    %172 = arith.addf %164, %171 : vector<32x128xf32>
    %c27_i32 = arith.constant 27 : i32
    %173 = tpu.dynamic_rotate %119 by %c27_i32 dim 0 : vector<32x128xf32>, i32 -> vector<32x128xf32>
    %174 = vector.extract_strided_slice %114 {offsets = [7, 0], sizes = [1, 128], strides = [1, 1]} : vector<9x128xf32> to vector<1x128xf32>
    %175 = vector.broadcast %174 : vector<1x128xf32> to vector<32x128xf32>
    %176 = arith.mulf %175, %173 : vector<32x128xf32>
    %177 = vector.extract_strided_slice %117 {offsets = [0, 7], sizes = [32, 1], strides = [1, 1]} : vector<32x9xf32> to vector<32x1xf32>
    %178 = vector.broadcast %177 : vector<32x1xf32> to vector<32x128xf32>
    %179 = arith.mulf %176, %178 : vector<32x128xf32>
    %180 = arith.addf %172, %179 : vector<32x128xf32>
    %c26_i32 = arith.constant 26 : i32
    %181 = tpu.dynamic_rotate %119 by %c26_i32 dim 0 : vector<32x128xf32>, i32 -> vector<32x128xf32>
    %182 = vector.extract_strided_slice %114 {offsets = [8, 0], sizes = [1, 128], strides = [1, 1]} : vector<9x128xf32> to vector<1x128xf32>
    %183 = vector.broadcast %182 : vector<1x128xf32> to vector<32x128xf32>
    %184 = arith.mulf %183, %181 : vector<32x128xf32>
    %185 = vector.extract_strided_slice %117 {offsets = [0, 8], sizes = [32, 1], strides = [1, 1]} : vector<32x9xf32> to vector<32x1xf32>
    %186 = vector.broadcast %185 : vector<32x1xf32> to vector<32x128xf32>
    %187 = arith.mulf %184, %186 : vector<32x128xf32>
    %188 = arith.addf %180, %187 : vector<32x128xf32>
    %189 = arith.addf %119, %188 : vector<32x128xf32>
    %190 = arith.mulf %189, %189 : vector<32x128xf32>
    %191 = tpu.concatenate %189, %190 in 0 : vector<32x128xf32>, vector<32x128xf32> -> vector<64x128xf32>
    %cst_49 = arith.constant dense<0.000000e+00> : vector<64x128xf32>
    %192 = tpu.matmul %191, %4, %cst_49 {dimension_numbers = #tpu.dot_dimension_numbers<[1], [0], [0], [1], [0, 0, 1, 1], [], []>} : vector<64x128xf32>, vector<128x128xf32>, vector<64x128xf32> -> vector<64x128xf32>
    %193 = vector.extract_strided_slice %192 {offsets = [0, 0], sizes = [32, 128], strides = [1, 1]} : vector<64x128xf32> to vector<32x128xf32>
    %194 = vector.extract_strided_slice %192 {offsets = [32, 0], sizes = [32, 128], strides = [1, 1]} : vector<64x128xf32> to vector<32x128xf32>
    %195 = arith.mulf %193, %193 : vector<32x128xf32>
    %196 = arith.subf %194, %195 : vector<32x128xf32>
    %197 = arith.subf %189, %193 : vector<32x128xf32>
    %cst_50 = arith.constant 9.99999974E-6 : f32
    %198 = vector.broadcast %cst_50 : f32 to vector<32x128xf32>
    %199 = arith.addf %196, %198 : vector<32x128xf32>
    %200 = math.rsqrt %199 : vector<32x128xf32>
    %201 = arith.mulf %197, %200 : vector<32x128xf32>
    %202 = vector.broadcast %2 : vector<1x128xf32> to vector<32x128xf32>
    %203 = arith.mulf %201, %202 : vector<32x128xf32>
    %204 = vector.broadcast %3 : vector<1x128xf32> to vector<32x128xf32>
    %205 = arith.addf %203, %204 : vector<32x128xf32>
    %c0_51 = arith.constant 0 : index
    %c320 = arith.constant 320 : index
    %c0_52 = arith.constant 0 : index
    %206 = vector.load %arg14[%c0_51, %c320, %c0_52] : memref<1x368x128xf32, #tpu.memory_space<vmem>>, vector<1x32x128xf32>
    %207 = vector.shape_cast %206 : vector<1x32x128xf32> to vector<32x128xf32>
    %208 = vector.shape_cast %205 : vector<32x128xf32> to vector<1x32x128xf32>
    tpu.vector_store %arg14[%c0_51, %c320, %c0_52], %208 {strides = array<i32>} : memref<1x368x128xf32, #tpu.memory_space<vmem>>, vector<1x32x128xf32>,
    %c3 = arith.constant 3 : index
    %c0_53 = arith.constant 0 : index
    %c0_54 = arith.constant 0 : index
    %209 = vector.load %arg9[%c3, %c0_53, %c0_54] : memref<4x9x128xf32, #tpu.memory_space<vmem>>, vector<1x9x128xf32>
    %210 = vector.shape_cast %209 : vector<1x9x128xf32> to vector<9x128xf32>
    %c3_55 = arith.constant 3 : index
    %c0_56 = arith.constant 0 : index
    %c0_57 = arith.constant 0 : index
    %211 = vector.load %arg10[%c3_55, %c0_56, %c0_57] : memref<4x1x128xf32, #tpu.memory_space<vmem>>, vector<1x1x128xf32>
    %212 = vector.shape_cast %211 : vector<1x1x128xf32> to vector<1x128xf32>
    %c0_58 = arith.constant 0 : index
    %c0_59 = arith.constant 0 : index
    %213 = vector.load %arg8[%c0_58, %c0_59] : memref<16x9xf32, #tpu.memory_space<vmem>>, vector<16x9xf32>
    %c0_60 = arith.constant 0 : index
    %c0_61 = arith.constant 0 : index
    %214 = vector.load %arg4[%c0_60, %c0_61] : memref<16x256xbf16, #tpu.memory_space<vmem>>, vector<16x256xbf16>
    %cst_62 = arith.constant dense<0.000000e+00> : vector<16x128xf32>
    %215 = tpu.matmul %214, %5, %cst_62 {dimension_numbers = #tpu.dot_dimension_numbers<[1], [0], [0], [1], [0, 0, 1, 1], [], []>} : vector<16x256xbf16>, vector<256x128xbf16>, vector<16x128xf32> -> vector<16x128xf32>
    %c5_i32_63 = arith.constant 5 : i32
    %216 = tpu.dynamic_rotate %215 by %c5_i32_63 dim 0 : vector<16x128xf32>, i32 -> vector<16x128xf32>
    %217 = vector.extract_strided_slice %210 {offsets = [0, 0], sizes = [1, 128], strides = [1, 1]} : vector<9x128xf32> to vector<1x128xf32>
    %218 = vector.broadcast %217 : vector<1x128xf32> to vector<16x128xf32>
    %219 = arith.mulf %218, %216 : vector<16x128xf32>
    %220 = vector.extract_strided_slice %213 {offsets = [0, 0], sizes = [16, 1], strides = [1, 1]} : vector<16x9xf32> to vector<16x1xf32>
    %221 = vector.broadcast %220 : vector<16x1xf32> to vector<16x128xf32>
    %222 = arith.mulf %219, %221 : vector<16x128xf32>
    %223 = vector.broadcast %212 : vector<1x128xf32> to vector<16x128xf32>
    %224 = arith.addf %223, %222 : vector<16x128xf32>
    %c4_i32_64 = arith.constant 4 : i32
    %225 = tpu.dynamic_rotate %215 by %c4_i32_64 dim 0 : vector<16x128xf32>, i32 -> vector<16x128xf32>
    %226 = vector.extract_strided_slice %210 {offsets = [1, 0], sizes = [1, 128], strides = [1, 1]} : vector<9x128xf32> to vector<1x128xf32>
    %227 = vector.broadcast %226 : vector<1x128xf32> to vector<16x128xf32>
    %228 = arith.mulf %227, %225 : vector<16x128xf32>
    %229 = vector.extract_strided_slice %213 {offsets = [0, 1], sizes = [16, 1], strides = [1, 1]} : vector<16x9xf32> to vector<16x1xf32>
    %230 = vector.broadcast %229 : vector<16x1xf32> to vector<16x128xf32>
    %231 = arith.mulf %228, %230 : vector<16x128xf32>
    %232 = arith.addf %224, %231 : vector<16x128xf32>
    %c3_i32 = arith.constant 3 : i32
    %233 = tpu.dynamic_rotate %215 by %c3_i32 dim 0 : vector<16x128xf32>, i32 -> vector<16x128xf32>
    %234 = vector.extract_strided_slice %210 {offsets = [2, 0], sizes = [1, 128], strides = [1, 1]} : vector<9x128xf32> to vector<1x128xf32>
    %235 = vector.broadcast %234 : vector<1x128xf32> to vector<16x128xf32>
    %236 = arith.mulf %235, %233 : vector<16x128xf32>
    %237 = vector.extract_strided_slice %213 {offsets = [0, 2], sizes = [16, 1], strides = [1, 1]} : vector<16x9xf32> to vector<16x1xf32>
    %238 = vector.broadcast %237 : vector<16x1xf32> to vector<16x128xf32>
    %239 = arith.mulf %236, %238 : vector<16x128xf32>
    %240 = arith.addf %232, %239 : vector<16x128xf32>
    %c1_i32_65 = arith.constant 1 : i32
    %241 = tpu.dynamic_rotate %215 by %c1_i32_65 dim 0 : vector<16x128xf32>, i32 -> vector<16x128xf32>
    %242 = vector.extract_strided_slice %210 {offsets = [3, 0], sizes = [1, 128], strides = [1, 1]} : vector<9x128xf32> to vector<1x128xf32>
    %243 = vector.broadcast %242 : vector<1x128xf32> to vector<16x128xf32>
    %244 = arith.mulf %243, %241 : vector<16x128xf32>
    %245 = vector.extract_strided_slice %213 {offsets = [0, 3], sizes = [16, 1], strides = [1, 1]} : vector<16x9xf32> to vector<16x1xf32>
    %246 = vector.broadcast %245 : vector<16x1xf32> to vector<16x128xf32>
    %247 = arith.mulf %244, %246 : vector<16x128xf32>
    %248 = arith.addf %240, %247 : vector<16x128xf32>
    %249 = vector.extract_strided_slice %210 {offsets = [4, 0], sizes = [1, 128], strides = [1, 1]} : vector<9x128xf32> to vector<1x128xf32>
    %250 = vector.broadcast %249 : vector<1x128xf32> to vector<16x128xf32>
    %251 = arith.mulf %250, %215 : vector<16x128xf32>
    %252 = arith.addf %248, %251 : vector<16x128xf32>
    %c15_i32 = arith.constant 15 : i32
    %253 = tpu.dynamic_rotate %215 by %c15_i32 dim 0 : vector<16x128xf32>, i32 -> vector<16x128xf32>
    %254 = vector.extract_strided_slice %210 {offsets = [5, 0], sizes = [1, 128], strides = [1, 1]} : vector<9x128xf32> to vector<1x128xf32>
    %255 = vector.broadcast %254 : vector<1x128xf32> to vector<16x128xf32>
    %256 = arith.mulf %255, %253 : vector<16x128xf32>
    %257 = vector.extract_strided_slice %213 {offsets = [0, 5], sizes = [16, 1], strides = [1, 1]} : vector<16x9xf32> to vector<16x1xf32>
    %258 = vector.broadcast %257 : vector<16x1xf32> to vector<16x128xf32>
    %259 = arith.mulf %256, %258 : vector<16x128xf32>
    %260 = arith.addf %252, %259 : vector<16x128xf32>
    %c13_i32 = arith.constant 13 : i32
    %261 = tpu.dynamic_rotate %215 by %c13_i32 dim 0 : vector<16x128xf32>, i32 -> vector<16x128xf32>
    %262 = vector.extract_strided_slice %210 {offsets = [6, 0], sizes = [1, 128], strides = [1, 1]} : vector<9x128xf32> to vector<1x128xf32>
    %263 = vector.broadcast %262 : vector<1x128xf32> to vector<16x128xf32>
    %264 = arith.mulf %263, %261 : vector<16x128xf32>
    %265 = vector.extract_strided_slice %213 {offsets = [0, 6], sizes = [16, 1], strides = [1, 1]} : vector<16x9xf32> to vector<16x1xf32>
    %266 = vector.broadcast %265 : vector<16x1xf32> to vector<16x128xf32>
    %267 = arith.mulf %264, %266 : vector<16x128xf32>
    %268 = arith.addf %260, %267 : vector<16x128xf32>
    %c12_i32 = arith.constant 12 : i32
    %269 = tpu.dynamic_rotate %215 by %c12_i32 dim 0 : vector<16x128xf32>, i32 -> vector<16x128xf32>
    %270 = vector.extract_strided_slice %210 {offsets = [7, 0], sizes = [1, 128], strides = [1, 1]} : vector<9x128xf32> to vector<1x128xf32>
    %271 = vector.broadcast %270 : vector<1x128xf32> to vector<16x128xf32>
    %272 = arith.mulf %271, %269 : vector<16x128xf32>
    %273 = vector.extract_strided_slice %213 {offsets = [0, 7], sizes = [16, 1], strides = [1, 1]} : vector<16x9xf32> to vector<16x1xf32>
    %274 = vector.broadcast %273 : vector<16x1xf32> to vector<16x128xf32>
    %275 = arith.mulf %272, %274 : vector<16x128xf32>
    %276 = arith.addf %268, %275 : vector<16x128xf32>
    %c11_i32 = arith.constant 11 : i32
    %277 = tpu.dynamic_rotate %215 by %c11_i32 dim 0 : vector<16x128xf32>, i32 -> vector<16x128xf32>
    %278 = vector.extract_strided_slice %210 {offsets = [8, 0], sizes = [1, 128], strides = [1, 1]} : vector<9x128xf32> to vector<1x128xf32>
    %279 = vector.broadcast %278 : vector<1x128xf32> to vector<16x128xf32>
    %280 = arith.mulf %279, %277 : vector<16x128xf32>
    %281 = vector.extract_strided_slice %213 {offsets = [0, 8], sizes = [16, 1], strides = [1, 1]} : vector<16x9xf32> to vector<16x1xf32>
    %282 = vector.broadcast %281 : vector<16x1xf32> to vector<16x128xf32>
    %283 = arith.mulf %280, %282 : vector<16x128xf32>
    %284 = arith.addf %276, %283 : vector<16x128xf32>
    %285 = arith.addf %215, %284 : vector<16x128xf32>
    %286 = arith.mulf %285, %285 : vector<16x128xf32>
    %287 = tpu.concatenate %285, %286 in 0 : vector<16x128xf32>, vector<16x128xf32> -> vector<32x128xf32>
    %cst_66 = arith.constant dense<0.000000e+00> : vector<32x128xf32>
    %288 = tpu.matmul %287, %4, %cst_66 {dimension_numbers = #tpu.dot_dimension_numbers<[1], [0], [0], [1], [0, 0, 1, 1], [], []>} : vector<32x128xf32>, vector<128x128xf32>, vector<32x128xf32> -> vector<32x128xf32>
    %289 = vector.extract_strided_slice %288 {offsets = [0, 0], sizes = [16, 128], strides = [1, 1]} : vector<32x128xf32> to vector<16x128xf32>
    %290 = vector.extract_strided_slice %288 {offsets = [16, 0], sizes = [16, 128], strides = [1, 1]} : vector<32x128xf32> to vector<16x128xf32>
    %291 = arith.mulf %289, %289 : vector<16x128xf32>
    %292 = arith.subf %290, %291 : vector<16x128xf32>
    %293 = arith.subf %285, %289 : vector<16x128xf32>
    %cst_67 = arith.constant 9.99999974E-6 : f32
    %294 = vector.broadcast %cst_67 : f32 to vector<16x128xf32>
    %295 = arith.addf %292, %294 : vector<16x128xf32>
    %296 = math.rsqrt %295 : vector<16x128xf32>
    %297 = arith.mulf %293, %296 : vector<16x128xf32>
    %298 = vector.broadcast %2 : vector<1x128xf32> to vector<16x128xf32>
    %299 = arith.mulf %297, %298 : vector<16x128xf32>
    %300 = vector.broadcast %3 : vector<1x128xf32> to vector<16x128xf32>
    %301 = arith.addf %299, %300 : vector<16x128xf32>
    %c0_68 = arith.constant 0 : index
    %c352 = arith.constant 352 : index
    %c0_69 = arith.constant 0 : index
    %302 = vector.load %arg14[%c0_68, %c352, %c0_69] : memref<1x368x128xf32, #tpu.memory_space<vmem>>, vector<1x16x128xf32>
    %303 = vector.shape_cast %302 : vector<1x16x128xf32> to vector<16x128xf32>
    %304 = vector.shape_cast %301 : vector<16x128xf32> to vector<1x16x128xf32>
    tpu.vector_store %arg14[%c0_68, %c352, %c0_69], %304 {strides = array<i32>} : memref<1x368x128xf32, #tpu.memory_space<vmem>>, vector<1x16x128xf32>,
    return
  }
  func.func @transform_0(%arg0: i32) -> (i32, i32, i32) {
    %c0_i32 = arith.constant 0 : i32
    %c0_i32_0 = arith.constant 0 : i32
    %c0_i32_1 = arith.constant 0 : i32
    return %arg0, %c0_i32, %c0_i32_0 : i32, i32, i32
  }
  func.func @transform_1(%arg0: i32) -> (i32, i32) {
    %c0_i32 = arith.constant 0 : i32
    %c0_i32_0 = arith.constant 0 : i32
    %c0_i32_1 = arith.constant 0 : i32
    return %c0_i32, %c0_i32_0 : i32, i32
  }
  func.func @transform_2(%arg0: i32) -> (i32, i32) {
    %c0_i32 = arith.constant 0 : i32
    %c0_i32_0 = arith.constant 0 : i32
    %c0_i32_1 = arith.constant 0 : i32
    return %c0_i32, %c0_i32_0 : i32, i32
  }
  func.func @transform_3(%arg0: i32) -> (i32, i32) {
    %c0_i32 = arith.constant 0 : i32
    %c0_i32_0 = arith.constant 0 : i32
    %c0_i32_1 = arith.constant 0 : i32
    return %c0_i32, %c0_i32_0 : i32, i32
  }
  func.func @transform_4(%arg0: i32) -> (i32, i32) {
    %c0_i32 = arith.constant 0 : i32
    %c0_i32_0 = arith.constant 0 : i32
    %c0_i32_1 = arith.constant 0 : i32
    return %c0_i32, %c0_i32_0 : i32, i32
  }
  func.func @transform_5(%arg0: i32) -> (i32, i32) {
    %c0_i32 = arith.constant 0 : i32
    %c0_i32_0 = arith.constant 0 : i32
    %c0_i32_1 = arith.constant 0 : i32
    return %c0_i32, %c0_i32_0 : i32, i32
  }
  func.func @transform_6(%arg0: i32) -> (i32, i32) {
    %c0_i32 = arith.constant 0 : i32
    %c0_i32_0 = arith.constant 0 : i32
    %c0_i32_1 = arith.constant 0 : i32
    return %c0_i32, %c0_i32_0 : i32, i32
  }
  func.func @transform_7(%arg0: i32) -> (i32, i32) {
    %c0_i32 = arith.constant 0 : i32
    %c0_i32_0 = arith.constant 0 : i32
    %c0_i32_1 = arith.constant 0 : i32
    return %c0_i32, %c0_i32_0 : i32, i32
  }
  func.func @transform_8(%arg0: i32) -> (i32, i32, i32) {
    %c0_i32 = arith.constant 0 : i32
    %c0_i32_0 = arith.constant 0 : i32
    %c0_i32_1 = arith.constant 0 : i32
    %c0_i32_2 = arith.constant 0 : i32
    return %c0_i32, %c0_i32_0, %c0_i32_1 : i32, i32, i32
  }
  func.func @transform_9(%arg0: i32) -> (i32, i32, i32) {
    %c0_i32 = arith.constant 0 : i32
    %c0_i32_0 = arith.constant 0 : i32
    %c0_i32_1 = arith.constant 0 : i32
    %c0_i32_2 = arith.constant 0 : i32
    return %c0_i32, %c0_i32_0, %c0_i32_1 : i32, i32, i32
  }
  func.func @transform_10(%arg0: i32) -> (i32, i32) {
    %c0_i32 = arith.constant 0 : i32
    %c0_i32_0 = arith.constant 0 : i32
    %c0_i32_1 = arith.constant 0 : i32
    return %c0_i32, %c0_i32_0 : i32, i32
  }
  func.func @transform_11(%arg0: i32) -> (i32, i32) {
    %c0_i32 = arith.constant 0 : i32
    %c0_i32_0 = arith.constant 0 : i32
    %c0_i32_1 = arith.constant 0 : i32
    return %c0_i32, %c0_i32_0 : i32, i32
  }
  func.func @transform_12(%arg0: i32) -> (i32, i32) {
    %c0_i32 = arith.constant 0 : i32
    %c0_i32_0 = arith.constant 0 : i32
    %c0_i32_1 = arith.constant 0 : i32
    return %c0_i32, %c0_i32_0 : i32, i32
  }
  func.func @transform_13(%arg0: i32) -> (i32, i32, i32) {
    %c0_i32 = arith.constant 0 : i32
    %c0_i32_0 = arith.constant 0 : i32
    %c0_i32_1 = arith.constant 0 : i32
    return %arg0, %c0_i32, %c0_i32_0 : i32, i32, i32
  }
}

</mosaic_0001>

<llo_original>
// kernel: tpu_custom_call.1
$region0: #{tpu_custom_call.1}
  #allocation0 [shape = 'u32[]', space=smem, size = 0x4, offset = 0x4, fixed_abs, tag = 'smem constant byte address 0x4 - core index']
  #allocation1 [shape = 'u32[144,128]{1,0:T(1,128)}', space=vmem, size = 0x12000, scoped, tag = 'internal scratch']
  #allocation2 [shape = 'f32[288,128]{1,0:T(8,128)}', space=vmem, size = 0x24000, scoped, tag = 'scratch operand']
  %s0 = inlined_call_operand.vmem [shape: f32[1,256,128], index: 0, kind: input, shape index: {}]
  %s1 = inlined_call_operand.hbm [shape: bf16[64,256], index: 1, kind: input, shape index: {}]
  %s2 = inlined_call_operand.hbm [shape: bf16[32,256], index: 2, kind: input, shape index: {}]
  %s3 = inlined_call_operand.vmem [shape: bf16[16,256], index: 3, kind: input, shape index: {}]
  %s4 = inlined_call_operand.vmem [shape: f32[64,9], index: 4, kind: input, shape index: {}]
  %s5 = inlined_call_operand.vmem [shape: f32[64,9], index: 5, kind: input, shape index: {}]
  %s6 = inlined_call_operand.vmem [shape: f32[32,9], index: 6, kind: input, shape index: {}]
  %s7 = inlined_call_operand.vmem [shape: f32[16,9], index: 7, kind: input, shape index: {}]
  %s8 = inlined_call_operand.vmem [shape: f32[4,9,128], index: 8, kind: input, shape index: {}]
  %s9 = inlined_call_operand.vmem [shape: f32[4,1,128], index: 9, kind: input, shape index: {}]
  %s10 = inlined_call_operand.vmem [shape: f32[1,128], index: 10, kind: input, shape index: {}]
  %s11 = inlined_call_operand.vmem [shape: f32[1,128], index: 11, kind: input, shape index: {}]
  %s12 = inlined_call_operand.hbm [shape: f32[128,128], index: 12, kind: input, shape index: {}]
  %s13 = inlined_call_operand.hbm [shape: f32[1,368,128], index: 13, kind: output, shape index: {}]
  %s14 = sld [smem:[#allocation0]]
  $region81: #{tpu_custom_call.1} parent=0
    _
  %s16 = ssub.s32 1, %s14
  %s17 = scalar_select 0, %s16, %s14
  $region1: #{tpu_custom_call.1} parent=0
    #allocation3 [shape = 'u8[32768]{0}', space=vmem, size = 0x8000, scoped, tag = 'input window, operand 1, single buffered']
    #allocation4 [shape = 's32[1]{0}', space=sflag, size = 0x4, scoped, tag = 'scoped memory for tpu_custom_call.1']
    #allocation5 [shape = 's32[1]{0}', space=sflag, size = 0x4, scoped, tag = 'scoped memory for tpu_custom_call.1']
    #allocation6 [shape = 'u8[16384]{0}', space=vmem, size = 0x4000, scoped, tag = 'input window, operand 2, single buffered']
    #allocation7 [shape = 's32[1]{0}', space=sflag, size = 0x4, scoped, tag = 'scoped memory for tpu_custom_call.1']
    #allocation8 [shape = 'u8[65536]{0}', space=vmem, size = 0x10000, scoped, tag = 'input window, operand 12, single buffered']
    #allocation9 [shape = 'u8[188416]{0}', space=vmem, size = 0x2e000, scoped, tag = 'output window, operand 0, single buffered']
    %18 = vsyncpa [#allocation4], 0
    %19 = vsyncpa [#allocation7], 0
    %20 = vsyncpa [#allocation5], 0
    // Predicated region
    $region2: #{tpu_custom_call.1} parent=1 // pred_check
      _
    $region3: #{tpu_custom_call.1} parent=1 // pred_check_branch
      %22 = sbr.rel (0) target = $region5
    $region4: #{tpu_custom_call.1} parent=1 // pred_region
      _
    $region5: #{tpu_custom_call.1} parent=1 // pred_fallthru
      _
    // Predicated region
    $region6: #{tpu_custom_call.1} parent=1 // pred_check
      _
    $region7: #{tpu_custom_call.1} parent=1 // pred_check_branch
      %24 = sbr.rel (0) target = $region9
    $region8: #{tpu_custom_call.1} parent=1 // pred_region
      %s26 = ssub.s32 1024, 1024
      %27 = vsyncadd [#allocation4], %s26
      %s28 = sshll.u32 [#allocation3], 4
      %s29 = int_to_ptr.vmem [resolvable:$true] %s28
      %34 = dma.hbm_to_vmem [thread:$0]  %s1, 1024, %s29, [#allocation4], 128, 128, 8
    $region9: #{tpu_custom_call.1} parent=1 // pred_fallthru
      _
    // Predicated region
    $region10: #{tpu_custom_call.1} parent=1 // pred_check
      _
    $region11: #{tpu_custom_call.1} parent=1 // pred_check_branch
      %36 = sbr.rel (0) target = $region13
    $region12: #{tpu_custom_call.1} parent=1 // pred_region
      %s38 = ssub.s32 512, 512
      %39 = vsyncadd [#allocation7], %s38
      %s40 = sshll.u32 [#allocation6], 4
      %s41 = int_to_ptr.vmem [resolvable:$true] %s40
      %46 = dma.hbm_to_vmem [thread:$0]  %s2, 512, %s41, [#allocation7], 128, 128, 8
    $region13: #{tpu_custom_call.1} parent=1 // pred_fallthru
      _
    // Predicated region
    $region14: #{tpu_custom_call.1} parent=1 // pred_check
      _
    $region15: #{tpu_custom_call.1} parent=1 // pred_check_branch
      %48 = sbr.rel (0) target = $region17
    $region16: #{tpu_custom_call.1} parent=1 // pred_region
      _
    $region17: #{tpu_custom_call.1} parent=1 // pred_fallthru
      _
    // Predicated region
    $region18: #{tpu_custom_call.1} parent=1 // pred_check
      _
    $region19: #{tpu_custom_call.1} parent=1 // pred_check_branch
      %50 = sbr.rel (0) target = $region21
    $region20: #{tpu_custom_call.1} parent=1 // pred_region
      _
    $region21: #{tpu_custom_call.1} parent=1 // pred_fallthru
      _
    // Predicated region
    $region22: #{tpu_custom_call.1} parent=1 // pred_check
      _
    $region23: #{tpu_custom_call.1} parent=1 // pred_check_branch
      %52 = sbr.rel (0) target = $region25
    $region24: #{tpu_custom_call.1} parent=1 // pred_region
      _
    $region25: #{tpu_custom_call.1} parent=1 // pred_fallthru
      _
    // Predicated region
    $region26: #{tpu_custom_call.1} parent=1 // pred_check
      _
    $region27: #{tpu_custom_call.1} parent=1 // pred_check_branch
      %54 = sbr.rel (0) target = $region29
    $region28: #{tpu_custom_call.1} parent=1 // pred_region
      _
    $region29: #{tpu_custom_call.1} parent=1 // pred_fallthru
      _
    // Predicated region
    $region30: #{tpu_custom_call.1} parent=1 // pred_check
      _
    $region31: #{tpu_custom_call.1} parent=1 // pred_check_branch
      %56 = sbr.rel (0) target = $region33
    $region32: #{tpu_custom_call.1} parent=1 // pred_region
      _
    $region33: #{tpu_custom_call.1} parent=1 // pred_fallthru
      _
    // Predicated region
    $region34: #{tpu_custom_call.1} parent=1 // pred_check
      _
    $region35: #{tpu_custom_call.1} parent=1 // pred_check_branch
      %58 = sbr.rel (0) target = $region37
    $region36: #{tpu_custom_call.1} parent=1 // pred_region
      _
    $region37: #{tpu_custom_call.1} parent=1 // pred_fallthru
      _
    // Predicated region
    $region38: #{tpu_custom_call.1} parent=1 // pred_check
      _
    $region39: #{tpu_custom_call.1} parent=1 // pred_check_branch
      %60 = sbr.rel (0) target = $region41
    $region40: #{tpu_custom_call.1} parent=1 // pred_region
      _
    $region41: #{tpu_custom_call.1} parent=1 // pred_fallthru
      _
    // Predicated region
    $region42: #{tpu_custom_call.1} parent=1 // pred_check
      _
    $region43: #{tpu_custom_call.1} parent=1 // pred_check_branch
      %62 = sbr.rel (0) target = $region45
    $region44: #{tpu_custom_call.1} parent=1 // pred_region
      _
    $region45: #{tpu_custom_call.1} parent=1 // pred_fallthru
      _
    // Predicated region
    $region46: #{tpu_custom_call.1} parent=1 // pred_check
      _
    $region47: #{tpu_custom_call.1} parent=1 // pred_check_branch
      %64 = sbr.rel (0) target = $region49
    $region48: #{tpu_custom_call.1} parent=1 // pred_region
      _
    $region49: #{tpu_custom_call.1} parent=1 // pred_fallthru
      _
    // Predicated region
    $region50: #{tpu_custom_call.1} parent=1 // pred_check
      _
    $region51: #{tpu_custom_call.1} parent=1 // pred_check_branch
      %66 = sbr.rel (0) target = $region53
    $region52: #{tpu_custom_call.1} parent=1 // pred_region
      %s68 = ssub.s32 2048, 2048
      %69 = vsyncadd [#allocation7], %s68
      %s70 = sshll.u32 [#allocation8], 4
      %s71 = int_to_ptr.vmem [resolvable:$true] %s70
      %76 = dma.hbm_to_vmem [thread:$0]  %s12, 2048, %s71, [#allocation7], 128, 128, 8
    $region53: #{tpu_custom_call.1} parent=1 // pred_fallthru
      _
    // Predicated region
    $region54: #{tpu_custom_call.1} parent=1 // pred_check
      _
    $region55: #{tpu_custom_call.1} parent=1 // pred_check_branch
      %78 = sbr.rel (0) target = $region57
    $region56: #{tpu_custom_call.1} parent=1 // pred_region
      %79 = dma.done [#allocation4], 1024
    $region57: #{tpu_custom_call.1} parent=1 // pred_fallthru
      _
    // Predicated region
    $region58: #{tpu_custom_call.1} parent=1 // pred_check
      _
    $region59: #{tpu_custom_call.1} parent=1 // pred_check_branch
      %81 = sbr.rel (0) target = $region61
    $region60: #{tpu_custom_call.1} parent=1 // pred_region
      %82 = dma.done [#allocation7], 512
    $region61: #{tpu_custom_call.1} parent=1 // pred_fallthru
      _
    // Predicated region
    $region62: #{tpu_custom_call.1} parent=1 // pred_check
      _
    $region63: #{tpu_custom_call.1} parent=1 // pred_check_branch
      %84 = sbr.rel (0) target = $region65
    $region64: #{tpu_custom_call.1} parent=1 // pred_region
      %85 = dma.done [#allocation7], 2048
    $region65: #{tpu_custom_call.1} parent=1 // pred_fallthru
      _
    %v87 = vld [vmem:[%s0] sm:$0xff]
    %v88 = vld [vmem:[%s0 + $0x8] sm:$0xff]
    %v89 = vld [vmem:[%s0 + $0x10] sm:$0xff]
    %v90 = vld [vmem:[%s0 + $0x18] sm:$0xff]
    %v91 = vld [vmem:[%s0 + $0x20] sm:$0xff]
    %v92 = vld [vmem:[%s0 + $0x28] sm:$0xff]
    %v93 = vld [vmem:[%s0 + $0x30] sm:$0xff]
    %v94 = vld [vmem:[%s0 + $0x38] sm:$0xff]
    %v95 = vld [vmem:[%s0 + $0x40] sm:$0xff]
    %v96 = vld [vmem:[%s0 + $0x48] sm:$0xff]
    %v97 = vld [vmem:[%s0 + $0x50] sm:$0xff]
    %v98 = vld [vmem:[%s0 + $0x58] sm:$0xff]
    %v99 = vld [vmem:[%s0 + $0x60] sm:$0xff]
    %v100 = vld [vmem:[%s0 + $0x68] sm:$0xff]
    %v101 = vld [vmem:[%s0 + $0x70] sm:$0xff]
    %v102 = vld [vmem:[%s0 + $0x78] sm:$0xff]
    %v103 = vld [vmem:[%s0 + $0x80] sm:$0xff]
    %v104 = vld [vmem:[%s0 + $0x88] sm:$0xff]
    %v105 = vld [vmem:[%s0 + $0x90] sm:$0xff]
    %v106 = vld [vmem:[%s0 + $0x98] sm:$0xff]
    %v107 = vld [vmem:[%s0 + $0xa0] sm:$0xff]
    %v108 = vld [vmem:[%s0 + $0xa8] sm:$0xff]
    %v109 = vld [vmem:[%s0 + $0xb0] sm:$0xff]
    %v110 = vld [vmem:[%s0 + $0xb8] sm:$0xff]
    %v111 = vld [vmem:[%s0 + $0xc0] sm:$0xff]
    %v112 = vld [vmem:[%s0 + $0xc8] sm:$0xff]
    %v113 = vld [vmem:[%s0 + $0xd0] sm:$0xff]
    %v114 = vld [vmem:[%s0 + $0xd8] sm:$0xff]
    %v115 = vld [vmem:[%s0 + $0xe0] sm:$0xff]
    %v116 = vld [vmem:[%s0 + $0xe8] sm:$0xff]
    %v117 = vld [vmem:[%s0 + $0xf0] sm:$0xff]
    %v118 = vld [vmem:[%s0 + $0xf8] sm:$0xff]
    %v119 = vld [vmem:[%s10] sm:$0x1]
    %v120 = vld [vmem:[%s11] sm:$0x1]
    %v121 = vld [vmem:[#allocation8] sm:$0xff]
    %v122 = vld [vmem:[#allocation8 + $0x8] sm:$0xff]
    %v123 = vld [vmem:[#allocation8 + $0x10] sm:$0xff]
    %v124 = vld [vmem:[#allocation8 + $0x18] sm:$0xff]
    %v125 = vld [vmem:[#allocation8 + $0x20] sm:$0xff]
    %v126 = vld [vmem:[#allocation8 + $0x28] sm:$0xff]
    %v127 = vld [vmem:[#allocation8 + $0x30] sm:$0xff]
    %v128 = vld [vmem:[#allocation8 + $0x38] sm:$0xff]
    %v129 = vld [vmem:[#allocation8 + $0x40] sm:$0xff]
    %v130 = vld [vmem:[#allocation8 + $0x48] sm:$0xff]
    %v131 = vld [vmem:[#allocation8 + $0x50] sm:$0xff]
    %v132 = vld [vmem:[#allocation8 + $0x58] sm:$0xff]
    %v133 = vld [vmem:[#allocation8 + $0x60] sm:$0xff]
    %v134 = vld [vmem:[#allocation8 + $0x68] sm:$0xff]
    %v135 = vld [vmem:[#allocation8 + $0x70] sm:$0xff]
    %v136 = vld [vmem:[#allocation8 + $0x78] sm:$0xff]
    %v137 = vpack.c.bf16 %v88, %v87
    %v138 = vpack.c.bf16 %v90, %v89
    %v139 = vpack.c.bf16 %v92, %v91
    %v140 = vpack.c.bf16 %v94, %v93
    %v141 = vpack.c.bf16 %v96, %v95
    %v142 = vpack.c.bf16 %v98, %v97
    %v143 = vpack.c.bf16 %v100, %v99
    %v144 = vpack.c.bf16 %v102, %v101
    %v145 = vpack.c.bf16 %v104, %v103
    %v146 = vpack.c.bf16 %v106, %v105
    %v147 = vpack.c.bf16 %v108, %v107
    %v148 = vpack.c.bf16 %v110, %v109
    %v149 = vpack.c.bf16 %v112, %v111
    %v150 = vpack.c.bf16 %v114, %v113
    %v151 = vpack.c.bf16 %v116, %v115
    %v152 = vpack.c.bf16 %v118, %v117
    %153 = vst [vmem:[#allocation2] sm:$0xff] 0.0
    %154 = vst [vmem:[#allocation2 + $0x8] sm:$0xff] 0.0
    %155 = vst [vmem:[#allocation2 + $0x10] sm:$0xff] %v87
    %156 = vst [vmem:[#allocation2 + $0x18] sm:$0xff] %v88
    %157 = vst [vmem:[#allocation2 + $0x20] sm:$0xff] %v89
    %158 = vst [vmem:[#allocation2 + $0x28] sm:$0xff] %v90
    %159 = vst [vmem:[#allocation2 + $0x30] sm:$0xff] %v91
    %160 = vst [vmem:[#allocation2 + $0x38] sm:$0xff] %v92
    %161 = vst [vmem:[#allocation2 + $0x40] sm:$0xff] %v93
    %162 = vst [vmem:[#allocation2 + $0x48] sm:$0xff] %v94
    %163 = vst [vmem:[#allocation2 + $0x50] sm:$0xff] %v95
    %164 = vst [vmem:[#allocation2 + $0x58] sm:$0xff] %v96
    %165 = vst [vmem:[#allocation2 + $0x60] sm:$0xff] %v97
    %166 = vst [vmem:[#allocation2 + $0x68] sm:$0xff] %v98
    %167 = vst [vmem:[#allocation2 + $0x70] sm:$0xff] %v99
    %168 = vst [vmem:[#allocation2 + $0x78] sm:$0xff] %v100
    %169 = vst [vmem:[#allocation2 + $0x80] sm:$0xff] %v101
    %170 = vst [vmem:[#allocation2 + $0x88] sm:$0xff] %v102
    %171 = vst [vmem:[#allocation2 + $0x90] sm:$0xff] %v103
    %172 = vst [vmem:[#allocation2 + $0x98] sm:$0xff] %v104
    %173 = vst [vmem:[#allocation2 + $0xa0] sm:$0xff] %v105
    %174 = vst [vmem:[#allocation2 + $0xa8] sm:$0xff] %v106
    %175 = vst [vmem:[#allocation2 + $0xb0] sm:$0xff] %v107
    %176 = vst [vmem:[#allocation2 + $0xb8] sm:$0xff] %v108
    %177 = vst [vmem:[#allocation2 + $0xc0] sm:$0xff] %v109
    %178 = vst [vmem:[#allocation2 + $0xc8] sm:$0xff] %v110
    %179 = vst [vmem:[#allocation2 + $0xd0] sm:$0xff] %v111
    %180 = vst [vmem:[#allocation2 + $0xd8] sm:$0xff] %v112
    %181 = vst [vmem:[#allocation2 + $0xe0] sm:$0xff] %v113
    %182 = vst [vmem:[#allocation2 + $0xe8] sm:$0xff] %v114
    %183 = vst [vmem:[#allocation2 + $0xf0] sm:$0xff] %v115
    %184 = vst [vmem:[#allocation2 + $0xf8] sm:$0xff] %v116
    %185 = vst [vmem:[#allocation2 + $0x100] sm:$0xff] %v117
    %186 = vst [vmem:[#allocation2 + $0x108] sm:$0xff] %v118
    %187 = vst [vmem:[#allocation2 + $0x110] sm:$0xff] 0.0
    %188 = vst [vmem:[#allocation2 + $0x118] sm:$0xff] 0.0
    %v189 = vld [vmem:[%s8] sm:$0xff]
    %v190 = vld [vmem:[%s8 + $0x8] sm:$0x1]
    %v191 = vld [vmem:[%s9] sm:$0x1]
    %v192 = vld [vmem:[%s4] sm:$0xff]
    %v193 = vld [vmem:[%s4 + $0x8] sm:$0xff]
    %v194 = vld [vmem:[%s4 + $0x10] sm:$0xff]
    %v195 = vld [vmem:[%s4 + $0x18] sm:$0xff]
    %v196 = vld [vmem:[%s4 + $0x20] sm:$0xff]
    %v197 = vld [vmem:[%s4 + $0x28] sm:$0xff]
    %v198 = vld [vmem:[%s4 + $0x30] sm:$0xff]
    %v199 = vld [vmem:[%s4 + $0x38] sm:$0xff]
    loop: start=0, step=1, limit=4
    $region66: #{tpu_custom_call.1} parent=1 // loop_pre_header
      _
    $region67: #{tpu_custom_call.1} parent=1 // loop_header
      %s201 = sphi 0, %s205
      %p202 = scmp.ge.s32.totalorder %s201, 4
    $region68: #{tpu_custom_call.1} parent=1 // loop_header_branch
      %204 = sbr.rel (%p202) target = $region72
    $region69: #{tpu_custom_call.1} parent=1 // loop_body
      %s206 = smul.u32 %s201, 64
      %s207 = scalar_lea.vmem [#allocation2], %s206
      %v208 = vld [vmem:[%s207] sm:$0xff]
      %v209 = vld [vmem:[%s207 + $0x8] sm:$0xff]
      %v210 = vld [vmem:[%s207 + $0x10] sm:$0xff]
      %v211 = vld [vmem:[%s207 + $0x18] sm:$0xff]
      %v212 = vld [vmem:[%s207 + $0x20] sm:$0xff]
      %v213 = vld [vmem:[%s207 + $0x28] sm:$0xff]
      %v214 = vld [vmem:[%s207 + $0x30] sm:$0xff]
      %v215 = vld [vmem:[%s207 + $0x38] sm:$0xff]
      %v216 = vld [vmem:[%s207 + $0x40] sm:$0xff]
      %v217 = vld [vmem:[%s207 + $0x48] sm:$0xff]
      %v218 = vld [vmem:[%s207 + $0x50] sm:$0xff]
      %v219 = vld [vmem:[%s207 + $0x58] sm:$0xff]
      %v220 = vrot.slane %v208, 7
      %v221 = vrot.slane %v209, 7
      %v222 = vrot.slane %v210, 7
      %v223 = vrot.slane %v211, 7
      %v224 = vrot.slane %v212, 7
      %v225 = vrot.slane %v213, 7
      %v226 = vrot.slane %v214, 7
      %v227 = vrot.slane %v215, 7
      %v228 = vrot.slane %v219, 7
      %v229 = vlaneseq
      %v230 = vshrl.u32 %v229, 7
      %vm231 = vcmp.lt.s32.totalorder %v230, 1
      %v232 = vsel %vm231, %v226, %v227
      %v233 = vsel %vm231, %v225, %v226
      %v234 = vsel %vm231, %v224, %v225
      %v235 = vsel %vm231, %v223, %v224
      %v236 = vsel %vm231, %v222, %v223
      %v237 = vsel %vm231, %v221, %v222
      %v238 = vsel %vm231, %v220, %v221
      %v239 = vsel %vm231, %v228, %v220
      %v240 = vlaneseq
      %v241 = vshrl.u32 %v240, 7
      %v242 = vsub.s32 0, %v241
      %v243 = vrot.slane %v189, %v242
      %v244 = vmul.f32 %v243, %v239
      %v245 = vmul.f32 %v243, %v238
      %v246 = vmul.f32 %v243, %v237
      %v247 = vmul.f32 %v243, %v236
      %v248 = vmul.f32 %v243, %v235
      %v249 = vmul.f32 %v243, %v234
      %v250 = vmul.f32 %v243, %v233
      %v251 = vmul.f32 %v243, %v232
      %253 = vset.pattern.permute.xlu0 0
      %254 = vperm.xlu0 %253, %v192
      %v255 = vpop.permute.xlu0 %254
      %258 = vset.pattern.permute.xlu0 0
      %259 = vperm.xlu0 %258, %v193
      %v260 = vpop.permute.xlu0 %259
      %263 = vset.pattern.permute.xlu0 0
      %264 = vperm.xlu0 %263, %v194
      %v265 = vpop.permute.xlu0 %264
      %268 = vset.pattern.permute.xlu0 0
      %269 = vperm.xlu0 %268, %v195
      %v270 = vpop.permute.xlu0 %269
      %273 = vset.pattern.permute.xlu0 0
      %274 = vperm.xlu0 %273, %v196
      %v275 = vpop.permute.xlu0 %274
      %278 = vset.pattern.permute.xlu0 0
      %279 = vperm.xlu0 %278, %v197
      %v280 = vpop.permute.xlu0 %279
      %283 = vset.pattern.permute.xlu0 0
      %284 = vperm.xlu0 %283, %v198
      %v285 = vpop.permute.xlu0 %284
      %288 = vset.pattern.permute.xlu0 0
      %289 = vperm.xlu0 %288, %v199
      %v290 = vpop.permute.xlu0 %289
      %v292 = vmul.f32 %v244, %v255
      %v293 = vmul.f32 %v245, %v260
      %v294 = vmul.f32 %v246, %v265
      %v295 = vmul.f32 %v247, %v270
      %v296 = vmul.f32 %v248, %v275
      %v297 = vmul.f32 %v249, %v280
      %v298 = vmul.f32 %v250, %v285
      %v299 = vmul.f32 %v251, %v290
      %v301 = vlaneseq
      %v302 = vshrl.u32 %v301, 7
      %v303 = vsub.s32 0, %v302
      %v304 = vrot.slane %v191, %v303
      %v306 = vadd.f32 %v304, %v292
      %v307 = vadd.f32 %v304, %v293
      %v308 = vadd.f32 %v304, %v294
      %v309 = vadd.f32 %v304, %v295
      %v310 = vadd.f32 %v304, %v296
      %v311 = vadd.f32 %v304, %v297
      %v312 = vadd.f32 %v304, %v298
      %v313 = vadd.f32 %v304, %v299
      %v314 = vlaneseq
      %v315 = vshrl.u32 %v314, 7
      %v316 = vsub.s32 1, %v315
      %v317 = vrot.slane %v189, %v316
      %v318 = vmul.f32 %v317, %v208
      %v319 = vmul.f32 %v317, %v209
      %v320 = vmul.f32 %v317, %v210
      %v321 = vmul.f32 %v317, %v211
      %v322 = vmul.f32 %v317, %v212
      %v323 = vmul.f32 %v317, %v213
      %v324 = vmul.f32 %v317, %v214
      %v325 = vmul.f32 %v317, %v215
      %v326 = vadd.f32 %v306, %v318
      %v327 = vadd.f32 %v307, %v319
      %v328 = vadd.f32 %v308, %v320
      %v329 = vadd.f32 %v309, %v321
      %v330 = vadd.f32 %v310, %v322
      %v331 = vadd.f32 %v311, %v323
      %v332 = vadd.f32 %v312, %v324
      %v333 = vadd.f32 %v313, %v325
      %v334 = vrot.slane %v208, 1
      %v335 = vrot.slane %v209, 1
      %v336 = vrot.slane %v210, 1
      %v337 = vrot.slane %v211, 1
      %v338 = vrot.slane %v212, 1
      %v339 = vrot.slane %v213, 1
      %v340 = vrot.slane %v214, 1
      %v341 = vrot.slane %v215, 1
      %v342 = vrot.slane %v216, 1
      %vm343 = vcmp.lt.s32.totalorder %v230, 7
      %v344 = vsel %vm343, %v341, %v342
      %v345 = vsel %vm343, %v340, %v341
      %v346 = vsel %vm343, %v339, %v340
      %v347 = vsel %vm343, %v338, %v339
      %v348 = vsel %vm343, %v337, %v338
      %v349 = vsel %vm343, %v336, %v337
      %v350 = vsel %vm343, %v335, %v336
      %v351 = vsel %vm343, %v334, %v335
      %v352 = vlaneseq
      %v353 = vshrl.u32 %v352, 7
      %v354 = vsub.s32 2, %v353
      %v355 = vrot.slane %v189, %v354
      %v356 = vmul.f32 %v355, %v351
      %v357 = vmul.f32 %v355, %v350
      %v358 = vmul.f32 %v355, %v349
      %v359 = vmul.f32 %v355, %v348
      %v360 = vmul.f32 %v355, %v347
      %v361 = vmul.f32 %v355, %v346
      %v362 = vmul.f32 %v355, %v345
      %v363 = vmul.f32 %v355, %v344
      %364 = vset.pattern.permute.xlu0 2
      %365 = vperm.xlu0 %364, %v192
      %v366 = vpop.permute.xlu0 %365
      %368 = vset.pattern.permute.xlu0 2
      %369 = vperm.xlu0 %368, %v193
      %v370 = vpop.permute.xlu0 %369
      %372 = vset.pattern.permute.xlu0 2
      %373 = vperm.xlu0 %372, %v194
      %v374 = vpop.permute.xlu0 %373
      %376 = vset.pattern.permute.xlu0 2
      %377 = vperm.xlu0 %376, %v195
      %v378 = vpop.permute.xlu0 %377
      %380 = vset.pattern.permute.xlu0 2
      %381 = vperm.xlu0 %380, %v196
      %v382 = vpop.permute.xlu0 %381
      %384 = vset.pattern.permute.xlu0 2
      %385 = vperm.xlu0 %384, %v197
      %v386 = vpop.permute.xlu0 %385
      %388 = vset.pattern.permute.xlu0 2
      %389 = vperm.xlu0 %388, %v198
      %v390 = vpop.permute.xlu0 %389
      %392 = vset.pattern.permute.xlu0 2
      %393 = vperm.xlu0 %392, %v199
      %v394 = vpop.permute.xlu0 %393
      %v396 = vmul.f32 %v356, %v366
      %v397 = vmul.f32 %v357, %v370
      %v398 = vmul.f32 %v358, %v374
      %v399 = vmul.f32 %v359, %v378
      %v400 = vmul.f32 %v360, %v382
      %v401 = vmul.f32 %v361, %v386
      %v402 = vmul.f32 %v362, %v390
      %v403 = vmul.f32 %v363, %v394
      %v404 = vadd.f32 %v326, %v396
      %v405 = vadd.f32 %v327, %v397
      %v406 = vadd.f32 %v328, %v398
      %v407 = vadd.f32 %v329, %v399
      %v408 = vadd.f32 %v330, %v400
      %v409 = vadd.f32 %v331, %v401
      %v410 = vadd.f32 %v332, %v402
      %v411 = vadd.f32 %v333, %v403
      %v412 = vrot.slane %v216, 7
      %v413 = vrot.slane %v217, 7
      %v414 = vsel %vm231, %v412, %v413
      %v415 = vsel %vm231, %v227, %v412
      %v416 = vlaneseq
      %v417 = vshrl.u32 %v416, 7
      %v418 = vsub.s32 3, %v417
      %v419 = vrot.slane %v189, %v418
      %v420 = vmul.f32 %v419, %v237
      %v421 = vmul.f32 %v419, %v236
      %v422 = vmul.f32 %v419, %v235
      %v423 = vmul.f32 %v419, %v234
      %v424 = vmul.f32 %v419, %v233
      %v425 = vmul.f32 %v419, %v232
      %v426 = vmul.f32 %v419, %v415
      %v427 = vmul.f32 %v419, %v414
      %428 = vset.pattern.permute.xlu0 3
      %429 = vperm.xlu0 %428, %v192
      %v430 = vpop.permute.xlu0 %429
      %432 = vset.pattern.permute.xlu0 3
      %433 = vperm.xlu0 %432, %v193
      %v434 = vpop.permute.xlu0 %433
      %436 = vset.pattern.permute.xlu0 3
      %437 = vperm.xlu0 %436, %v194
      %v438 = vpop.permute.xlu0 %437
      %440 = vset.pattern.permute.xlu0 3
      %441 = vperm.xlu0 %440, %v195
      %v442 = vpop.permute.xlu0 %441
      %444 = vset.pattern.permute.xlu0 3
      %445 = vperm.xlu0 %444, %v196
      %v446 = vpop.permute.xlu0 %445
      %448 = vset.pattern.permute.xlu0 3
      %449 = vperm.xlu0 %448, %v197
      %v450 = vpop.permute.xlu0 %449
      %452 = vset.pattern.permute.xlu0 3
      %453 = vperm.xlu0 %452, %v198
      %v454 = vpop.permute.xlu0 %453
      %456 = vset.pattern.permute.xlu0 3
      %457 = vperm.xlu0 %456, %v199
      %v458 = vpop.permute.xlu0 %457
      %v460 = vmul.f32 %v420, %v430
      %v461 = vmul.f32 %v421, %v434
      %v462 = vmul.f32 %v422, %v438
      %v463 = vmul.f32 %v423, %v442
      %v464 = vmul.f32 %v424, %v446
      %v465 = vmul.f32 %v425, %v450
      %v466 = vmul.f32 %v426, %v454
      %v467 = vmul.f32 %v427, %v458
      %v468 = vadd.f32 %v404, %v460
      %v469 = vadd.f32 %v405, %v461
      %v470 = vadd.f32 %v406, %v462
      %v471 = vadd.f32 %v407, %v463
      %v472 = vadd.f32 %v408, %v464
      %v473 = vadd.f32 %v409, %v465
      %v474 = vadd.f32 %v410, %v466
      %v475 = vadd.f32 %v411, %v467
      %v476 = vlaneseq
      %v477 = vshrl.u32 %v476, 7
      %v478 = vsub.s32 4, %v477
      %v479 = vrot.slane %v189, %v478
      %v480 = vmul.f32 %v479, %v210
      %v481 = vmul.f32 %v479, %v211
      %v482 = vmul.f32 %v479, %v212
      %v483 = vmul.f32 %v479, %v213
      %v484 = vmul.f32 %v479, %v214
      %v485 = vmul.f32 %v479, %v215
      %v486 = vmul.f32 %v479, %v216
      %v487 = vmul.f32 %v479, %v217
      %v488 = vadd.f32 %v468, %v480
      %v489 = vadd.f32 %v469, %v481
      %v490 = vadd.f32 %v470, %v482
      %v491 = vadd.f32 %v471, %v483
      %v492 = vadd.f32 %v472, %v484
      %v493 = vadd.f32 %v473, %v485
      %v494 = vadd.f32 %v474, %v486
      %v495 = vadd.f32 %v475, %v487
      %v496 = vrot.slane %v217, 1
      %v497 = vrot.slane %v218, 1
      %v498 = vsel %vm343, %v496, %v497
      %v499 = vsel %vm343, %v342, %v496
      %v500 = vlaneseq
      %v501 = vshrl.u32 %v500, 7
      %v502 = vsub.s32 5, %v501
      %v503 = vrot.slane %v189, %v502
      %v504 = vmul.f32 %v503, %v349
      %v505 = vmul.f32 %v503, %v348
      %v506 = vmul.f32 %v503, %v347
      %v507 = vmul.f32 %v503, %v346
      %v508 = vmul.f32 %v503, %v345
      %v509 = vmul.f32 %v503, %v344
      %v510 = vmul.f32 %v503, %v499
      %v511 = vmul.f32 %v503, %v498
      %512 = vset.pattern.permute.xlu0 5
      %513 = vperm.xlu0 %512, %v192
      %v514 = vpop.permute.xlu0 %513
      %516 = vset.pattern.permute.xlu0 5
      %517 = vperm.xlu0 %516, %v193
      %v518 = vpop.permute.xlu0 %517
      %520 = vset.pattern.permute.xlu0 5
      %521 = vperm.xlu0 %520, %v194
      %v522 = vpop.permute.xlu0 %521
      %524 = vset.pattern.permute.xlu0 5
      %525 = vperm.xlu0 %524, %v195
      %v526 = vpop.permute.xlu0 %525
      %528 = vset.pattern.permute.xlu0 5
      %529 = vperm.xlu0 %528, %v196
      %v530 = vpop.permute.xlu0 %529
      %532 = vset.pattern.permute.xlu0 5
      %533 = vperm.xlu0 %532, %v197
      %v534 = vpop.permute.xlu0 %533
      %536 = vset.pattern.permute.xlu0 5
      %537 = vperm.xlu0 %536, %v198
      %v538 = vpop.permute.xlu0 %537
      %540 = vset.pattern.permute.xlu0 5
      %541 = vperm.xlu0 %540, %v199
      %v542 = vpop.permute.xlu0 %541
      %v544 = vmul.f32 %v504, %v514
      %v545 = vmul.f32 %v505, %v518
      %v546 = vmul.f32 %v506, %v522
      %v547 = vmul.f32 %v507, %v526
      %v548 = vmul.f32 %v508, %v530
      %v549 = vmul.f32 %v509, %v534
      %v550 = vmul.f32 %v510, %v538
      %v551 = vmul.f32 %v511, %v542
      %v552 = vadd.f32 %v488, %v544
      %v553 = vadd.f32 %v489, %v545
      %v554 = vadd.f32 %v490, %v546
      %v555 = vadd.f32 %v491, %v547
      %v556 = vadd.f32 %v492, %v548
      %v557 = vadd.f32 %v493, %v549
      %v558 = vadd.f32 %v494, %v550
      %v559 = vadd.f32 %v495, %v551
      %v560 = vrot.slane %v218, 7
      %v561 = vsel %vm231, %v560, %v228
      %v562 = vsel %vm231, %v413, %v560
      %v563 = vlaneseq
      %v564 = vshrl.u32 %v563, 7
      %v565 = vsub.s32 6, %v564
      %v566 = vrot.slane %v189, %v565
      %v567 = vmul.f32 %v566, %v235
      %v568 = vmul.f32 %v566, %v234
      %v569 = vmul.f32 %v566, %v233
      %v570 = vmul.f32 %v566, %v232
      %v571 = vmul.f32 %v566, %v415
      %v572 = vmul.f32 %v566, %v414
      %v573 = vmul.f32 %v566, %v562
      %v574 = vmul.f32 %v566, %v561
      %575 = vset.pattern.permute.xlu0 6
      %576 = vperm.xlu0 %575, %v192
      %v577 = vpop.permute.xlu0 %576
      %579 = vset.pattern.permute.xlu0 6
      %580 = vperm.xlu0 %579, %v193
      %v581 = vpop.permute.xlu0 %580
      %583 = vset.pattern.permute.xlu0 6
      %584 = vperm.xlu0 %583, %v194
      %v585 = vpop.permute.xlu0 %584
      %587 = vset.pattern.permute.xlu0 6
      %588 = vperm.xlu0 %587, %v195
      %v589 = vpop.permute.xlu0 %588
      %591 = vset.pattern.permute.xlu0 6
      %592 = vperm.xlu0 %591, %v196
      %v593 = vpop.permute.xlu0 %592
      %595 = vset.pattern.permute.xlu0 6
      %596 = vperm.xlu0 %595, %v197
      %v597 = vpop.permute.xlu0 %596
      %599 = vset.pattern.permute.xlu0 6
      %600 = vperm.xlu0 %599, %v198
      %v601 = vpop.permute.xlu0 %600
      %603 = vset.pattern.permute.xlu0 6
      %604 = vperm.xlu0 %603, %v199
      %v605 = vpop.permute.xlu0 %604
      %v607 = vmul.f32 %v567, %v577
      %v608 = vmul.f32 %v568, %v581
      %v609 = vmul.f32 %v569, %v585
      %v610 = vmul.f32 %v570, %v589
      %v611 = vmul.f32 %v571, %v593
      %v612 = vmul.f32 %v572, %v597
      %v613 = vmul.f32 %v573, %v601
      %v614 = vmul.f32 %v574, %v605
      %v615 = vadd.f32 %v552, %v607
      %v616 = vadd.f32 %v553, %v608
      %v617 = vadd.f32 %v554, %v609
      %v618 = vadd.f32 %v555, %v610
      %v619 = vadd.f32 %v556, %v611
      %v620 = vadd.f32 %v557, %v612
      %v621 = vadd.f32 %v558, %v613
      %v622 = vadd.f32 %v559, %v614
      %v623 = vlaneseq
      %v624 = vshrl.u32 %v623, 7
      %v625 = vsub.s32 7, %v624
      %v626 = vrot.slane %v189, %v625
      %v627 = vmul.f32 %v626, %v212
      %v628 = vmul.f32 %v626, %v213
      %v629 = vmul.f32 %v626, %v214
      %v630 = vmul.f32 %v626, %v215
      %v631 = vmul.f32 %v626, %v216
      %v632 = vmul.f32 %v626, %v217
      %v633 = vmul.f32 %v626, %v218
      %v634 = vmul.f32 %v626, %v219
      %v635 = vadd.f32 %v615, %v627
      %v636 = vadd.f32 %v616, %v628
      %v637 = vadd.f32 %v617, %v629
      %v638 = vadd.f32 %v618, %v630
      %v639 = vadd.f32 %v619, %v631
      %v640 = vadd.f32 %v620, %v632
      %v641 = vadd.f32 %v621, %v633
      %v642 = vadd.f32 %v622, %v634
      %v643 = vrot.slane %v219, 1
      %v644 = vsel %vm343, %v497, %v643
      %v645 = vsel %vm343, %v643, %v334
      %v646 = vlaneseq
      %v647 = vshrl.u32 %v646, 7
      %v648 = vsub.s32 0, %v647
      %v649 = vrot.slane %v190, %v648
      %v650 = vmul.f32 %v649, %v347
      %v651 = vmul.f32 %v649, %v346
      %v652 = vmul.f32 %v649, %v345
      %v653 = vmul.f32 %v649, %v344
      %v654 = vmul.f32 %v649, %v499
      %v655 = vmul.f32 %v649, %v498
      %v656 = vmul.f32 %v649, %v644
      %v657 = vmul.f32 %v649, %v645
      %658 = vset.pattern.permute.xlu0 8
      %659 = vperm.xlu0 %658, %v192
      %v660 = vpop.permute.xlu0 %659
      %662 = vset.pattern.permute.xlu0 8
      %663 = vperm.xlu0 %662, %v193
      %v664 = vpop.permute.xlu0 %663
      %666 = vset.pattern.permute.xlu0 8
      %667 = vperm.xlu0 %666, %v194
      %v668 = vpop.permute.xlu0 %667
      %670 = vset.pattern.permute.xlu0 8
      %671 = vperm.xlu0 %670, %v195
      %v672 = vpop.permute.xlu0 %671
      %674 = vset.pattern.permute.xlu0 8
      %675 = vperm.xlu0 %674, %v196
      %v676 = vpop.permute.xlu0 %675
      %678 = vset.pattern.permute.xlu0 8
      %679 = vperm.xlu0 %678, %v197
      %v680 = vpop.permute.xlu0 %679
      %682 = vset.pattern.permute.xlu0 8
      %683 = vperm.xlu0 %682, %v198
      %v684 = vpop.permute.xlu0 %683
      %686 = vset.pattern.permute.xlu0 8
      %687 = vperm.xlu0 %686, %v199
      %v688 = vpop.permute.xlu0 %687
      %v690 = vmul.f32 %v650, %v660
      %v691 = vmul.f32 %v651, %v664
      %v692 = vmul.f32 %v652, %v668
      %v693 = vmul.f32 %v653, %v672
      %v694 = vmul.f32 %v654, %v676
      %v695 = vmul.f32 %v655, %v680
      %v696 = vmul.f32 %v656, %v684
      %v697 = vmul.f32 %v657, %v688
      %v698 = vadd.f32 %v635, %v690
      %v699 = vadd.f32 %v636, %v691
      %v700 = vadd.f32 %v637, %v692
      %v701 = vadd.f32 %v638, %v693
      %v702 = vadd.f32 %v639, %v694
      %v703 = vadd.f32 %v640, %v695
      %v704 = vadd.f32 %v641, %v696
      %v705 = vadd.f32 %v642, %v697
      %v706 = vadd.f32 %v210, %v698
      %v707 = vadd.f32 %v211, %v699
      %v708 = vadd.f32 %v212, %v700
      %v709 = vadd.f32 %v213, %v701
      %v710 = vadd.f32 %v214, %v702
      %v711 = vadd.f32 %v215, %v703
      %v712 = vadd.f32 %v216, %v704
      %v713 = vadd.f32 %v217, %v705
      %v714 = vmul.f32 %v706, %v706
      %v715 = vmul.f32 %v707, %v707
      %v716 = vmul.f32 %v708, %v708
      %v717 = vmul.f32 %v709, %v709
      %v718 = vmul.f32 %v710, %v710
      %v719 = vmul.f32 %v711, %v711
      %v720 = vmul.f32 %v712, %v712
      %v721 = vmul.f32 %v713, %v713
      %722 = vmatprep.subr.mxu0 0.0
      %723 = vmatpush1.msra.mxu0 %v121
      %724 = vmatprep.subr.mxu0 0.0
      %725 = vmatpush1.msra.mxu0 %v122
      %726 = vmatprep.subr.mxu0 0.0
      %727 = vmatpush1.msra.mxu0 %v123
      %728 = vmatprep.subr.mxu0 0.0
      %729 = vmatpush1.msra.mxu0 %v124
      %730 = vmatprep.subr.mxu0 0.0
      %731 = vmatpush1.msra.mxu0 %v125
      %732 = vmatprep.subr.mxu0 0.0
      %733 = vmatpush1.msra.mxu0 %v126
      %734 = vmatprep.subr.mxu0 0.0
      %735 = vmatpush1.msra.mxu0 %v127
      %736 = vmatprep.subr.mxu0 0.0
      %737 = vmatpush1.msra.mxu0 %v128
      %738 = vmatprep.subr.mxu0 0.0
      %739 = vmatpush1.msra.mxu0 %v129
      %740 = vmatprep.subr.mxu0 0.0
      %741 = vmatpush1.msra.mxu0 %v130
      %742 = vmatprep.subr.mxu0 0.0
      %743 = vmatpush1.msra.mxu0 %v131
      %744 = vmatprep.subr.mxu0 0.0
      %745 = vmatpush1.msra.mxu0 %v132
      %746 = vmatprep.subr.mxu0 0.0
      %747 = vmatpush1.msra.mxu0 %v133
      %748 = vmatprep.subr.mxu0 0.0
      %749 = vmatpush1.msra.mxu0 %v134
      %750 = vmatprep.subr.mxu0 0.0
      %751 = vmatpush1.msra.mxu0 %v135
      %752 = vmatprep.subr.mxu0 0.0
      %753 = vmatpush1.msra.mxu0 %v136
      %754 = vmatprep.subr.mxu0 0.0
      %755 = vmatpush1.msra.mxu0 0.0
      %756 = vmatprep.subr.mxu0 0.0
      %757 = vmatpush1.msra.mxu0 0.0
      %758 = vmatprep.subr.mxu0 0.0
      %759 = vmatpush1.msra.mxu0 0.0
      %760 = vmatprep.subr.mxu0 0.0
      %761 = vmatpush1.msra.mxu0 0.0
      %762 = vmatprep.subr.mxu0 0.0
      %763 = vmatpush1.msra.mxu0 0.0
      %764 = vmatprep.subr.mxu0 0.0
      %765 = vmatpush1.msra.mxu0 0.0
      %766 = vmatprep.subr.mxu0 0.0
      %767 = vmatpush1.msra.mxu0 0.0
      %768 = vmatprep.subr.mxu0 0.0
      %769 = vmatpush1.msra.mxu0 0.0
      %770 = vmatprep.subr.mxu0 0.0
      %771 = vmatpush1.msra.mxu0 0.0
      %772 = vmatprep.subr.mxu0 0.0
      %773 = vmatpush1.msra.mxu0 0.0
      %774 = vmatprep.subr.mxu0 0.0
      %775 = vmatpush1.msra.mxu0 0.0
      %776 = vmatprep.subr.mxu0 0.0
      %777 = vmatpush1.msra.mxu0 0.0
      %778 = vmatprep.subr.mxu0 0.0
      %779 = vmatpush1.msra.mxu0 0.0
      %780 = vmatprep.subr.mxu0 0.0
      %781 = vmatpush1.msra.mxu0 0.0
      %782 = vmatprep.subr.mxu0 0.0
      %783 = vmatpush1.msra.mxu0 0.0
      %784 = vmatprep.subr.mxu0 0.0
      %785 = vmatpush1.msra.mxu0 0.0
      %786 = vmatprep.mubr.f32.mxu0 0.0
      %787 = vmatmul.mubr.f32.gmra.mrb[0].mxu0 %v706
      %v788 = vpop.f32.mrb[0].mxu0
      %v789 = vadd.f32 0.0, %v788
      %v790 = vpop.f32.mrb[0].mxu0
      %791 = vmatprep.mubr.f32.mxu0 0.0
      %792 = vmatmul.mubr.f32.gmra.mrb[0].mxu0 %v707
      %v793 = vpop.f32.mrb[0].mxu0
      %v794 = vadd.f32 0.0, %v793
      %v795 = vpop.f32.mrb[0].mxu0
      %796 = vmatprep.mubr.f32.mxu0 0.0
      %797 = vmatmul.mubr.f32.gmra.mrb[0].mxu0 %v708
      %v798 = vpop.f32.mrb[0].mxu0
      %v799 = vadd.f32 0.0, %v798
      %v800 = vpop.f32.mrb[0].mxu0
      %801 = vmatprep.mubr.f32.mxu0 0.0
      %802 = vmatmul.mubr.f32.gmra.mrb[0].mxu0 %v709
      %v803 = vpop.f32.mrb[0].mxu0
      %v804 = vadd.f32 0.0, %v803
      %v805 = vpop.f32.mrb[0].mxu0
      %806 = vmatprep.mubr.f32.mxu0 0.0
      %807 = vmatmul.mubr.f32.gmra.mrb[0].mxu0 %v710
      %v808 = vpop.f32.mrb[0].mxu0
      %v809 = vadd.f32 0.0, %v808
      %v810 = vpop.f32.mrb[0].mxu0
      %811 = vmatprep.mubr.f32.mxu0 0.0
      %812 = vmatmul.mubr.f32.gmra.mrb[0].mxu0 %v711
      %v813 = vpop.f32.mrb[0].mxu0
      %v814 = vadd.f32 0.0, %v813
      %v815 = vpop.f32.mrb[0].mxu0
      %816 = vmatprep.mubr.f32.mxu0 0.0
      %817 = vmatmul.mubr.f32.gmra.mrb[0].mxu0 %v712
      %v818 = vpop.f32.mrb[0].mxu0
      %v819 = vadd.f32 0.0, %v818
      %v820 = vpop.f32.mrb[0].mxu0
      %821 = vmatprep.mubr.f32.mxu0 0.0
      %822 = vmatmul.mubr.f32.gmra.mrb[0].mxu0 %v713
      %v823 = vpop.f32.mrb[0].mxu0
      %v824 = vadd.f32 0.0, %v823
      %v825 = vpop.f32.mrb[0].mxu0
      %826 = vmatprep.mubr.f32.mxu0 0.0
      %827 = vmatmul.mubr.f32.gmra.mrb[0].mxu0 %v714
      %v828 = vpop.f32.mrb[0].mxu0
      %v829 = vadd.f32 0.0, %v828
      %v830 = vpop.f32.mrb[0].mxu0
      %831 = vmatprep.mubr.f32.mxu0 0.0
      %832 = vmatmul.mubr.f32.gmra.mrb[0].mxu0 %v715
      %v833 = vpop.f32.mrb[0].mxu0
      %v834 = vadd.f32 0.0, %v833
      %v835 = vpop.f32.mrb[0].mxu0
      %836 = vmatprep.mubr.f32.mxu0 0.0
      %837 = vmatmul.mubr.f32.gmra.mrb[0].mxu0 %v716
      %v838 = vpop.f32.mrb[0].mxu0
      %v839 = vadd.f32 0.0, %v838
      %v840 = vpop.f32.mrb[0].mxu0
      %841 = vmatprep.mubr.f32.mxu0 0.0
      %842 = vmatmul.mubr.f32.gmra.mrb[0].mxu0 %v717
      %v843 = vpop.f32.mrb[0].mxu0
      %v844 = vadd.f32 0.0, %v843
      %v845 = vpop.f32.mrb[0].mxu0
      %846 = vmatprep.mubr.f32.mxu0 0.0
      %847 = vmatmul.mubr.f32.gmra.mrb[0].mxu0 %v718
      %v848 = vpop.f32.mrb[0].mxu0
      %v849 = vadd.f32 0.0, %v848
      %v850 = vpop.f32.mrb[0].mxu0
      %851 = vmatprep.mubr.f32.mxu0 0.0
      %852 = vmatmul.mubr.f32.gmra.mrb[0].mxu0 %v719
      %v853 = vpop.f32.mrb[0].mxu0
      %v854 = vadd.f32 0.0, %v853
      %v855 = vpop.f32.mrb[0].mxu0
      %856 = vmatprep.mubr.f32.mxu0 0.0
      %857 = vmatmul.mubr.f32.gmra.mrb[0].mxu0 %v720
      %v858 = vpop.f32.mrb[0].mxu0
      %v859 = vadd.f32 0.0, %v858
      %v860 = vpop.f32.mrb[0].mxu0
      %861 = vmatprep.mubr.f32.mxu0 0.0
      %862 = vmatmul.mubr.f32.gmra.mrb[0].mxu0 %v721
      %v863 = vpop.f32.mrb[0].mxu0
      %v864 = vadd.f32 0.0, %v863
      %v865 = vpop.f32.mrb[0].mxu0
      %866 = vdwg.mxu0
      %v867 = vmul.f32 %v789, %v789
      %v868 = vmul.f32 %v794, %v794
      %v869 = vmul.f32 %v799, %v799
      %v870 = vmul.f32 %v804, %v804
      %v871 = vmul.f32 %v809, %v809
      %v872 = vmul.f32 %v814, %v814
      %v873 = vmul.f32 %v819, %v819
      %v874 = vmul.f32 %v824, %v824
      %v875 = vsub.f32 %v829, %v867
      %v876 = vsub.f32 %v834, %v868
      %v877 = vsub.f32 %v839, %v869
      %v878 = vsub.f32 %v844, %v870
      %v879 = vsub.f32 %v849, %v871
      %v880 = vsub.f32 %v854, %v872
      %v881 = vsub.f32 %v859, %v873
      %v882 = vsub.f32 %v864, %v874
      %v883 = vsub.f32 %v706, %v789
      %v884 = vsub.f32 %v707, %v794
      %v885 = vsub.f32 %v708, %v799
      %v886 = vsub.f32 %v709, %v804
      %v887 = vsub.f32 %v710, %v809
      %v888 = vsub.f32 %v711, %v814
      %v889 = vsub.f32 %v712, %v819
      %v890 = vsub.f32 %v713, %v824
      %v891 = vadd.f32 %v875, 1e-05
      %v892 = vadd.f32 %v876, 1e-05
      %v893 = vadd.f32 %v877, 1e-05
      %v894 = vadd.f32 %v878, 1e-05
      %v895 = vadd.f32 %v879, 1e-05
      %v896 = vadd.f32 %v880, 1e-05
      %v897 = vadd.f32 %v881, 1e-05
      %v898 = vadd.f32 %v882, 1e-05
      %v899 = vrsqrt.pop %v891
      %v900 = vrsqrt.pop %v892
      %v901 = vrsqrt.pop %v893
      %v902 = vrsqrt.pop %v894
      %v903 = vrsqrt.pop %v895
      %v904 = vrsqrt.pop %v896
      %v905 = vrsqrt.pop %v897
      %v906 = vrsqrt.pop %v898
      %v907 = vmul.f32 %v883, %v899
      %v908 = vmul.f32 %v884, %v900
      %v909 = vmul.f32 %v885, %v901
      %v910 = vmul.f32 %v886, %v902
      %v911 = vmul.f32 %v887, %v903
      %v912 = vmul.f32 %v888, %v904
      %v913 = vmul.f32 %v889, %v905
      %v914 = vmul.f32 %v890, %v906
      %v916 = vlaneseq
      %v917 = vshrl.u32 %v916, 7
      %v918 = vsub.s32 0, %v917
      %v919 = vrot.slane %v119, %v918
      %v921 = vmul.f32 %v907, %v919
      %v922 = vmul.f32 %v908, %v919
      %v923 = vmul.f32 %v909, %v919
      %v924 = vmul.f32 %v910, %v919
      %v925 = vmul.f32 %v911, %v919
      %v926 = vmul.f32 %v912, %v919
      %v927 = vmul.f32 %v913, %v919
      %v928 = vmul.f32 %v914, %v919
      %v930 = vlaneseq
      %v931 = vshrl.u32 %v930, 7
      %v932 = vsub.s32 0, %v931
      %v933 = vrot.slane %v120, %v932
      %v935 = vadd.f32 %v921, %v933
      %v936 = vadd.f32 %v922, %v933
      %v937 = vadd.f32 %v923, %v933
      %v938 = vadd.f32 %v924, %v933
      %v939 = vadd.f32 %v925, %v933
      %v940 = vadd.f32 %v926, %v933
      %v941 = vadd.f32 %v927, %v933
      %v942 = vadd.f32 %v928, %v933
      %s943 = scalar_lea.vmem [#allocation9], %s206
      %944 = vst [vmem:[%s943] sm:$0xff] %v935
      %945 = vst [vmem:[%s943 + $0x8] sm:$0xff] %v936
      %946 = vst [vmem:[%s943 + $0x10] sm:$0xff] %v937
      %947 = vst [vmem:[%s943 + $0x18] sm:$0xff] %v938
      %948 = vst [vmem:[%s943 + $0x20] sm:$0xff] %v939
      %949 = vst [vmem:[%s943 + $0x28] sm:$0xff] %v940
      %950 = vst [vmem:[%s943 + $0x30] sm:$0xff] %v941
      %951 = vst [vmem:[%s943 + $0x38] sm:$0xff] %v942
    $region70: #{tpu_custom_call.1} parent=1 // loop_footer
      %s205 = sadd.s32 1, %s201
    $region71: #{tpu_custom_call.1} parent=1 // loop_footer_branch
      %200 = sbr.rel target = $region67
    $region72: #{tpu_custom_call.1} parent=1 // loop_exit
      _
    %s952 = scalar_lea.vmem %s8, 16
    %v953 = vld [vmem:[%s952] sm:$0xff]
    %v954 = vld [vmem:[%s952 + $0x8] sm:$0x1]
    %s955 = scalar_lea.vmem %s9, 1
    %v956 = vld [vmem:[%s955] sm:$0x1]
    %v957 = vld [vmem:[%s5] sm:$0xff]
    %v958 = vld [vmem:[%s5 + $0x8] sm:$0xff]
    %v959 = vld [vmem:[%s5 + $0x10] sm:$0xff]
    %v960 = vld [vmem:[%s5 + $0x18] sm:$0xff]
    %v961 = vld [vmem:[%s5 + $0x20] sm:$0xff]
    %v962 = vld [vmem:[%s5 + $0x28] sm:$0xff]
    %v963 = vld [vmem:[%s5 + $0x30] sm:$0xff]
    %v964 = vld [vmem:[%s5 + $0x38] sm:$0xff]
    %v965 = vld [vmem:[#allocation3] sm:$0xff]
    %v966 = vld [vmem:[#allocation3 + $0x8] sm:$0xff]
    %v967 = vld [vmem:[#allocation3 + $0x10] sm:$0xff]
    %v968 = vld [vmem:[#allocation3 + $0x18] sm:$0xff]
    %v969 = vld [vmem:[#allocation3 + $0x20] sm:$0xff]
    %v970 = vld [vmem:[#allocation3 + $0x28] sm:$0xff]
    %v971 = vld [vmem:[#allocation3 + $0x30] sm:$0xff]
    %v972 = vld [vmem:[#allocation3 + $0x38] sm:$0xff]
    %v981 = vunpack.c.l.b16 %v965
    %v982 = vunpack.c.h.b16 %v965
    %v983 = vunpack.c.l.b16 %v966
    %v984 = vunpack.c.h.b16 %v966
    %v985 = vunpack.c.l.b16 %v967
    %v986 = vunpack.c.h.b16 %v967
    %v987 = vunpack.c.l.b16 %v968
    %v988 = vunpack.c.h.b16 %v968
    %v989 = vunpack.c.l.b16 %v969
    %v990 = vunpack.c.h.b16 %v969
    %v991 = vunpack.c.l.b16 %v970
    %v992 = vunpack.c.h.b16 %v970
    %v993 = vunpack.c.l.b16 %v971
    %v994 = vunpack.c.h.b16 %v971
    %v995 = vunpack.c.l.b16 %v972
    %v996 = vunpack.c.h.b16 %v972
    %v997 = vpack.c.b16 %v983, %v981
    %v998 = vpack.c.b16 %v984, %v982
    %v999 = vpack.c.b16 %v987, %v985
    %v1000 = vpack.c.b16 %v988, %v986
    %v1001 = vpack.c.b16 %v991, %v989
    %v1002 = vpack.c.b16 %v992, %v990
    %v1003 = vpack.c.b16 %v995, %v993
    %v1004 = vpack.c.b16 %v996, %v994
    %1013 = vmatprep.subr.bf16.mxu0 0
    %1014 = vmatpush1.bf16.msra.mxu0 %v137
    %1015 = vmatprep.subr.bf16.mxu0 0
    %1016 = vmatpush1.bf16.msra.mxu0 %v138
    %1017 = vmatprep.subr.bf16.mxu0 0
    %1018 = vmatpush1.bf16.msra.mxu0 %v139
    %1019 = vmatprep.subr.bf16.mxu0 0
    %1020 = vmatpush1.bf16.msra.mxu0 %v140
    %1021 = vmatprep.subr.bf16.mxu0 0
    %1022 = vmatpush1.bf16.msra.mxu0 %v141
    %1023 = vmatprep.subr.bf16.mxu0 0
    %1024 = vmatpush1.bf16.msra.mxu0 %v142
    %1025 = vmatprep.subr.bf16.mxu0 0
    %1026 = vmatpush1.bf16.msra.mxu0 %v143
    %1027 = vmatprep.subr.bf16.mxu0 0
    %1028 = vmatpush1.bf16.msra.mxu0 %v144
    %1029 = vmatprep.subr.bf16.mxu0 0
    %1030 = vmatpush1.bf16.msra.mxu0 %v145
    %1031 = vmatprep.subr.bf16.mxu0 0
    %1032 = vmatpush1.bf16.msra.mxu0 %v146
    %1033 = vmatprep.subr.bf16.mxu0 0
    %1034 = vmatpush1.bf16.msra.mxu0 %v147
    %1035 = vmatprep.subr.bf16.mxu0 0
    %1036 = vmatpush1.bf16.msra.mxu0 %v148
    %1037 = vmatprep.subr.bf16.mxu0 0
    %1038 = vmatpush1.bf16.msra.mxu0 %v149
    %1039 = vmatprep.subr.bf16.mxu0 0
    %1040 = vmatpush1.bf16.msra.mxu0 %v150
    %1041 = vmatprep.subr.bf16.mxu0 0
    %1042 = vmatpush1.bf16.msra.mxu0 %v151
    %1043 = vmatprep.subr.bf16.mxu0 0
    %1044 = vmatpush1.bf16.msra.mxu0 %v152
    %1045 = vmatprep.mubr.bf16.mxu0 %v998
    %1046 = vmatmul.mubr.bf16.gmra.mrb[0].mxu0 %v997
    %v1047 = vpop.f32.mrb[0].mxu0
    %v1048 = vadd.f32 0.0, %v1047
    %v1049 = vpop.f32.mrb[0].mxu0
    %v1050 = vpop.f32.mrb[0].mxu0
    %v1051 = vadd.f32 0.0, %v1050
    %v1052 = vpop.f32.mrb[0].mxu0
    %1053 = vmatprep.mubr.bf16.mxu0 %v1000
    %1054 = vmatmul.mubr.bf16.gmra.mrb[0].mxu0 %v999
    %v1055 = vpop.f32.mrb[0].mxu0
    %v1056 = vadd.f32 0.0, %v1055
    %v1057 = vpop.f32.mrb[0].mxu0
    %v1058 = vpop.f32.mrb[0].mxu0
    %v1059 = vadd.f32 0.0, %v1058
    %v1060 = vpop.f32.mrb[0].mxu0
    %1061 = vmatprep.mubr.bf16.mxu0 %v1002
    %1062 = vmatmul.mubr.bf16.gmra.mrb[0].mxu0 %v1001
    %v1063 = vpop.f32.mrb[0].mxu0
    %v1064 = vadd.f32 0.0, %v1063
    %v1065 = vpop.f32.mrb[0].mxu0
    %v1066 = vpop.f32.mrb[0].mxu0
    %v1067 = vadd.f32 0.0, %v1066
    %v1068 = vpop.f32.mrb[0].mxu0
    %1069 = vmatprep.mubr.bf16.mxu0 %v1004
    %1070 = vmatmul.mubr.bf16.gmra.mrb[0].mxu0 %v1003
    %v1071 = vpop.f32.mrb[0].mxu0
    %v1072 = vadd.f32 0.0, %v1071
    %v1073 = vpop.f32.mrb[0].mxu0
    %v1074 = vpop.f32.mrb[0].mxu0
    %v1075 = vadd.f32 0.0, %v1074
    %v1076 = vpop.f32.mrb[0].mxu0
    %1077 = vdwg.mxu0
    %v1078 = vrot.slane %v1048, 7
    %v1079 = vrot.slane %v1051, 7
    %v1080 = vrot.slane %v1056, 7
    %v1081 = vrot.slane %v1059, 7
    %v1082 = vrot.slane %v1064, 7
    %v1083 = vrot.slane %v1067, 7
    %v1084 = vrot.slane %v1072, 7
    %v1085 = vrot.slane %v1075, 7
    %v1086 = vlaneseq
    %v1087 = vshrl.u32 %v1086, 7
    %vm1088 = vcmp.lt.s32.totalorder %v1087, 1
    %v1089 = vsel %vm1088, %v1084, %v1085
    %v1090 = vsel %vm1088, %v1083, %v1084
    %v1091 = vsel %vm1088, %v1082, %v1083
    %v1092 = vsel %vm1088, %v1081, %v1082
    %v1093 = vsel %vm1088, %v1080, %v1081
    %v1094 = vsel %vm1088, %v1079, %v1080
    %v1095 = vsel %vm1088, %v1078, %v1079
    %v1096 = vsel %vm1088, %v1085, %v1078
    %v1097 = vlaneseq
    %v1098 = vshrl.u32 %v1097, 7
    %v1099 = vsub.s32 0, %v1098
    %v1100 = vrot.slane %v953, %v1099
    %v1101 = vmul.f32 %v1100, %v1089
    %v1102 = vmul.f32 %v1100, %v1096
    %v1103 = vmul.f32 %v1100, %v1095
    %v1104 = vmul.f32 %v1100, %v1094
    %v1105 = vmul.f32 %v1100, %v1093
    %v1106 = vmul.f32 %v1100, %v1092
    %v1107 = vmul.f32 %v1100, %v1091
    %v1108 = vmul.f32 %v1100, %v1090
    %1110 = vset.pattern.permute.xlu0 0
    %1111 = vperm.xlu0 %1110, %v957
    %v1112 = vpop.permute.xlu0 %1111
    %1115 = vset.pattern.permute.xlu0 0
    %1116 = vperm.xlu0 %1115, %v958
    %v1117 = vpop.permute.xlu0 %1116
    %1120 = vset.pattern.permute.xlu0 0
    %1121 = vperm.xlu0 %1120, %v959
    %v1122 = vpop.permute.xlu0 %1121
    %1125 = vset.pattern.permute.xlu0 0
    %1126 = vperm.xlu0 %1125, %v960
    %v1127 = vpop.permute.xlu0 %1126
    %1130 = vset.pattern.permute.xlu0 0
    %1131 = vperm.xlu0 %1130, %v961
    %v1132 = vpop.permute.xlu0 %1131
    %1135 = vset.pattern.permute.xlu0 0
    %1136 = vperm.xlu0 %1135, %v962
    %v1137 = vpop.permute.xlu0 %1136
    %1140 = vset.pattern.permute.xlu0 0
    %1141 = vperm.xlu0 %1140, %v963
    %v1142 = vpop.permute.xlu0 %1141
    %1145 = vset.pattern.permute.xlu0 0
    %1146 = vperm.xlu0 %1145, %v964
    %v1147 = vpop.permute.xlu0 %1146
    %v1149 = vmul.f32 %v1101, %v1112
    %v1150 = vmul.f32 %v1102, %v1117
    %v1151 = vmul.f32 %v1103, %v1122
    %v1152 = vmul.f32 %v1104, %v1127
    %v1153 = vmul.f32 %v1105, %v1132
    %v1154 = vmul.f32 %v1106, %v1137
    %v1155 = vmul.f32 %v1107, %v1142
    %v1156 = vmul.f32 %v1108, %v1147
    %v1158 = vlaneseq
    %v1159 = vshrl.u32 %v1158, 7
    %v1160 = vsub.s32 0, %v1159
    %v1161 = vrot.slane %v956, %v1160
    %v1163 = vadd.f32 %v1161, %v1149
    %v1164 = vadd.f32 %v1161, %v1150
    %v1165 = vadd.f32 %v1161, %v1151
    %v1166 = vadd.f32 %v1161, %v1152
    %v1167 = vadd.f32 %v1161, %v1153
    %v1168 = vadd.f32 %v1161, %v1154
    %v1169 = vadd.f32 %v1161, %v1155
    %v1170 = vadd.f32 %v1161, %v1156
    %v1171 = vlaneseq
    %v1172 = vshrl.u32 %v1171, 7
    %v1173 = vsub.s32 1, %v1172
    %v1174 = vrot.slane %v953, %v1173
    %v1175 = vmul.f32 %v1174, %v1075
    %v1176 = vmul.f32 %v1174, %v1048
    %v1177 = vmul.f32 %v1174, %v1051
    %v1178 = vmul.f32 %v1174, %v1056
    %v1179 = vmul.f32 %v1174, %v1059
    %v1180 = vmul.f32 %v1174, %v1064
    %v1181 = vmul.f32 %v1174, %v1067
    %v1182 = vmul.f32 %v1174, %v1072
    %1183 = vset.pattern.permute.xlu0 1
    %1184 = vperm.xlu0 %1183, %v957
    %v1185 = vpop.permute.xlu0 %1184
    %1187 = vset.pattern.permute.xlu0 1
    %1188 = vperm.xlu0 %1187, %v958
    %v1189 = vpop.permute.xlu0 %1188
    %1191 = vset.pattern.permute.xlu0 1
    %1192 = vperm.xlu0 %1191, %v959
    %v1193 = vpop.permute.xlu0 %1192
    %1195 = vset.pattern.permute.xlu0 1
    %1196 = vperm.xlu0 %1195, %v960
    %v1197 = vpop.permute.xlu0 %1196
    %1199 = vset.pattern.permute.xlu0 1
    %1200 = vperm.xlu0 %1199, %v961
    %v1201 = vpop.permute.xlu0 %1200
    %1203 = vset.pattern.permute.xlu0 1
    %1204 = vperm.xlu0 %1203, %v962
    %v1205 = vpop.permute.xlu0 %1204
    %1207 = vset.pattern.permute.xlu0 1
    %1208 = vperm.xlu0 %1207, %v963
    %v1209 = vpop.permute.xlu0 %1208
    %1211 = vset.pattern.permute.xlu0 1
    %1212 = vperm.xlu0 %1211, %v964
    %v1213 = vpop.permute.xlu0 %1212
    %v1215 = vmul.f32 %v1175, %v1185
    %v1216 = vmul.f32 %v1176, %v1189
    %v1217 = vmul.f32 %v1177, %v1193
    %v1218 = vmul.f32 %v1178, %v1197
    %v1219 = vmul.f32 %v1179, %v1201
    %v1220 = vmul.f32 %v1180, %v1205
    %v1221 = vmul.f32 %v1181, %v1209
    %v1222 = vmul.f32 %v1182, %v1213
    %v1223 = vadd.f32 %v1163, %v1215
    %v1224 = vadd.f32 %v1164, %v1216
    %v1225 = vadd.f32 %v1165, %v1217
    %v1226 = vadd.f32 %v1166, %v1218
    %v1227 = vadd.f32 %v1167, %v1219
    %v1228 = vadd.f32 %v1168, %v1220
    %v1229 = vadd.f32 %v1169, %v1221
    %v1230 = vadd.f32 %v1170, %v1222
    %v1231 = vrot.slane %v1048, 1
    %v1232 = vrot.slane %v1051, 1
    %v1233 = vrot.slane %v1056, 1
    %v1234 = vrot.slane %v1059, 1
    %v1235 = vrot.slane %v1064, 1
    %v1236 = vrot.slane %v1067, 1
    %v1237 = vrot.slane %v1072, 1
    %v1238 = vrot.slane %v1075, 1
    %vm1239 = vcmp.lt.s32.totalorder %v1087, 7
    %v1240 = vsel %vm1239, %v1237, %v1238
    %v1241 = vsel %vm1239, %v1236, %v1237
    %v1242 = vsel %vm1239, %v1235, %v1236
    %v1243 = vsel %vm1239, %v1234, %v1235
    %v1244 = vsel %vm1239, %v1233, %v1234
    %v1245 = vsel %vm1239, %v1232, %v1233
    %v1246 = vsel %vm1239, %v1231, %v1232
    %v1247 = vsel %vm1239, %v1238, %v1231
    %v1248 = vlaneseq
    %v1249 = vshrl.u32 %v1248, 7
    %v1250 = vsub.s32 2, %v1249
    %v1251 = vrot.slane %v953, %v1250
    %v1252 = vmul.f32 %v1251, %v1247
    %v1253 = vmul.f32 %v1251, %v1246
    %v1254 = vmul.f32 %v1251, %v1245
    %v1255 = vmul.f32 %v1251, %v1244
    %v1256 = vmul.f32 %v1251, %v1243
    %v1257 = vmul.f32 %v1251, %v1242
    %v1258 = vmul.f32 %v1251, %v1241
    %v1259 = vmul.f32 %v1251, %v1240
    %1260 = vset.pattern.permute.xlu0 2
    %1261 = vperm.xlu0 %1260, %v957
    %v1262 = vpop.permute.xlu0 %1261
    %1264 = vset.pattern.permute.xlu0 2
    %1265 = vperm.xlu0 %1264, %v958
    %v1266 = vpop.permute.xlu0 %1265
    %1268 = vset.pattern.permute.xlu0 2
    %1269 = vperm.xlu0 %1268, %v959
    %v1270 = vpop.permute.xlu0 %1269
    %1272 = vset.pattern.permute.xlu0 2
    %1273 = vperm.xlu0 %1272, %v960
    %v1274 = vpop.permute.xlu0 %1273
    %1276 = vset.pattern.permute.xlu0 2
    %1277 = vperm.xlu0 %1276, %v961
    %v1278 = vpop.permute.xlu0 %1277
    %1280 = vset.pattern.permute.xlu0 2
    %1281 = vperm.xlu0 %1280, %v962
    %v1282 = vpop.permute.xlu0 %1281
    %1284 = vset.pattern.permute.xlu0 2
    %1285 = vperm.xlu0 %1284, %v963
    %v1286 = vpop.permute.xlu0 %1285
    %1288 = vset.pattern.permute.xlu0 2
    %1289 = vperm.xlu0 %1288, %v964
    %v1290 = vpop.permute.xlu0 %1289
    %v1292 = vmul.f32 %v1252, %v1262
    %v1293 = vmul.f32 %v1253, %v1266
    %v1294 = vmul.f32 %v1254, %v1270
    %v1295 = vmul.f32 %v1255, %v1274
    %v1296 = vmul.f32 %v1256, %v1278
    %v1297 = vmul.f32 %v1257, %v1282
    %v1298 = vmul.f32 %v1258, %v1286
    %v1299 = vmul.f32 %v1259, %v1290
    %v1300 = vadd.f32 %v1223, %v1292
    %v1301 = vadd.f32 %v1224, %v1293
    %v1302 = vadd.f32 %v1225, %v1294
    %v1303 = vadd.f32 %v1226, %v1295
    %v1304 = vadd.f32 %v1227, %v1296
    %v1305 = vadd.f32 %v1228, %v1297
    %v1306 = vadd.f32 %v1229, %v1298
    %v1307 = vadd.f32 %v1230, %v1299
    %v1308 = vlaneseq
    %v1309 = vshrl.u32 %v1308, 7
    %v1310 = vsub.s32 3, %v1309
    %v1311 = vrot.slane %v953, %v1310
    %v1312 = vmul.f32 %v1311, %v1096
    %v1313 = vmul.f32 %v1311, %v1095
    %v1314 = vmul.f32 %v1311, %v1094
    %v1315 = vmul.f32 %v1311, %v1093
    %v1316 = vmul.f32 %v1311, %v1092
    %v1317 = vmul.f32 %v1311, %v1091
    %v1318 = vmul.f32 %v1311, %v1090
    %v1319 = vmul.f32 %v1311, %v1089
    %1320 = vset.pattern.permute.xlu0 3
    %1321 = vperm.xlu0 %1320, %v957
    %v1322 = vpop.permute.xlu0 %1321
    %1324 = vset.pattern.permute.xlu0 3
    %1325 = vperm.xlu0 %1324, %v958
    %v1326 = vpop.permute.xlu0 %1325
    %1328 = vset.pattern.permute.xlu0 3
    %1329 = vperm.xlu0 %1328, %v959
    %v1330 = vpop.permute.xlu0 %1329
    %1332 = vset.pattern.permute.xlu0 3
    %1333 = vperm.xlu0 %1332, %v960
    %v1334 = vpop.permute.xlu0 %1333
    %1336 = vset.pattern.permute.xlu0 3
    %1337 = vperm.xlu0 %1336, %v961
    %v1338 = vpop.permute.xlu0 %1337
    %1340 = vset.pattern.permute.xlu0 3
    %1341 = vperm.xlu0 %1340, %v962
    %v1342 = vpop.permute.xlu0 %1341
    %1344 = vset.pattern.permute.xlu0 3
    %1345 = vperm.xlu0 %1344, %v963
    %v1346 = vpop.permute.xlu0 %1345
    %1348 = vset.pattern.permute.xlu0 3
    %1349 = vperm.xlu0 %1348, %v964
    %v1350 = vpop.permute.xlu0 %1349
    %v1352 = vmul.f32 %v1312, %v1322
    %v1353 = vmul.f32 %v1313, %v1326
    %v1354 = vmul.f32 %v1314, %v1330
    %v1355 = vmul.f32 %v1315, %v1334
    %v1356 = vmul.f32 %v1316, %v1338
    %v1357 = vmul.f32 %v1317, %v1342
    %v1358 = vmul.f32 %v1318, %v1346
    %v1359 = vmul.f32 %v1319, %v1350
    %v1360 = vadd.f32 %v1300, %v1352
    %v1361 = vadd.f32 %v1301, %v1353
    %v1362 = vadd.f32 %v1302, %v1354
    %v1363 = vadd.f32 %v1303, %v1355
    %v1364 = vadd.f32 %v1304, %v1356
    %v1365 = vadd.f32 %v1305, %v1357
    %v1366 = vadd.f32 %v1306, %v1358
    %v1367 = vadd.f32 %v1307, %v1359
    %v1368 = vlaneseq
    %v1369 = vshrl.u32 %v1368, 7
    %v1370 = vsub.s32 4, %v1369
    %v1371 = vrot.slane %v953, %v1370
    %v1372 = vmul.f32 %v1371, %v1048
    %v1373 = vmul.f32 %v1371, %v1051
    %v1374 = vmul.f32 %v1371, %v1056
    %v1375 = vmul.f32 %v1371, %v1059
    %v1376 = vmul.f32 %v1371, %v1064
    %v1377 = vmul.f32 %v1371, %v1067
    %v1378 = vmul.f32 %v1371, %v1072
    %v1379 = vmul.f32 %v1371, %v1075
    %v1380 = vadd.f32 %v1360, %v1372
    %v1381 = vadd.f32 %v1361, %v1373
    %v1382 = vadd.f32 %v1362, %v1374
    %v1383 = vadd.f32 %v1363, %v1375
    %v1384 = vadd.f32 %v1364, %v1376
    %v1385 = vadd.f32 %v1365, %v1377
    %v1386 = vadd.f32 %v1366, %v1378
    %v1387 = vadd.f32 %v1367, %v1379
    %v1388 = vlaneseq
    %v1389 = vshrl.u32 %v1388, 7
    %v1390 = vsub.s32 5, %v1389
    %v1391 = vrot.slane %v953, %v1390
    %v1392 = vmul.f32 %v1391, %v1246
    %v1393 = vmul.f32 %v1391, %v1245
    %v1394 = vmul.f32 %v1391, %v1244
    %v1395 = vmul.f32 %v1391, %v1243
    %v1396 = vmul.f32 %v1391, %v1242
    %v1397 = vmul.f32 %v1391, %v1241
    %v1398 = vmul.f32 %v1391, %v1240
    %v1399 = vmul.f32 %v1391, %v1247
    %1400 = vset.pattern.permute.xlu0 5
    %1401 = vperm.xlu0 %1400, %v957
    %v1402 = vpop.permute.xlu0 %1401
    %1404 = vset.pattern.permute.xlu0 5
    %1405 = vperm.xlu0 %1404, %v958
    %v1406 = vpop.permute.xlu0 %1405
    %1408 = vset.pattern.permute.xlu0 5
    %1409 = vperm.xlu0 %1408, %v959
    %v1410 = vpop.permute.xlu0 %1409
    %1412 = vset.pattern.permute.xlu0 5
    %1413 = vperm.xlu0 %1412, %v960
    %v1414 = vpop.permute.xlu0 %1413
    %1416 = vset.pattern.permute.xlu0 5
    %1417 = vperm.xlu0 %1416, %v961
    %v1418 = vpop.permute.xlu0 %1417
    %1420 = vset.pattern.permute.xlu0 5
    %1421 = vperm.xlu0 %1420, %v962
    %v1422 = vpop.permute.xlu0 %1421
    %1424 = vset.pattern.permute.xlu0 5
    %1425 = vperm.xlu0 %1424, %v963
    %v1426 = vpop.permute.xlu0 %1425
    %1428 = vset.pattern.permute.xlu0 5
    %1429 = vperm.xlu0 %1428, %v964
    %v1430 = vpop.permute.xlu0 %1429
    %v1432 = vmul.f32 %v1392, %v1402
    %v1433 = vmul.f32 %v1393, %v1406
    %v1434 = vmul.f32 %v1394, %v1410
    %v1435 = vmul.f32 %v1395, %v1414
    %v1436 = vmul.f32 %v1396, %v1418
    %v1437 = vmul.f32 %v1397, %v1422
    %v1438 = vmul.f32 %v1398, %v1426
    %v1439 = vmul.f32 %v1399, %v1430
    %v1440 = vadd.f32 %v1380, %v1432
    %v1441 = vadd.f32 %v1381, %v1433
    %v1442 = vadd.f32 %v1382, %v1434
    %v1443 = vadd.f32 %v1383, %v1435
    %v1444 = vadd.f32 %v1384, %v1436
    %v1445 = vadd.f32 %v1385, %v1437
    %v1446 = vadd.f32 %v1386, %v1438
    %v1447 = vadd.f32 %v1387, %v1439
    %v1448 = vlaneseq
    %v1449 = vshrl.u32 %v1448, 7
    %v1450 = vsub.s32 6, %v1449
    %v1451 = vrot.slane %v953, %v1450
    %v1452 = vmul.f32 %v1451, %v1095
    %v1453 = vmul.f32 %v1451, %v1094
    %v1454 = vmul.f32 %v1451, %v1093
    %v1455 = vmul.f32 %v1451, %v1092
    %v1456 = vmul.f32 %v1451, %v1091
    %v1457 = vmul.f32 %v1451, %v1090
    %v1458 = vmul.f32 %v1451, %v1089
    %v1459 = vmul.f32 %v1451, %v1096
    %1460 = vset.pattern.permute.xlu0 6
    %1461 = vperm.xlu0 %1460, %v957
    %v1462 = vpop.permute.xlu0 %1461
    %1464 = vset.pattern.permute.xlu0 6
    %1465 = vperm.xlu0 %1464, %v958
    %v1466 = vpop.permute.xlu0 %1465
    %1468 = vset.pattern.permute.xlu0 6
    %1469 = vperm.xlu0 %1468, %v959
    %v1470 = vpop.permute.xlu0 %1469
    %1472 = vset.pattern.permute.xlu0 6
    %1473 = vperm.xlu0 %1472, %v960
    %v1474 = vpop.permute.xlu0 %1473
    %1476 = vset.pattern.permute.xlu0 6
    %1477 = vperm.xlu0 %1476, %v961
    %v1478 = vpop.permute.xlu0 %1477
    %1480 = vset.pattern.permute.xlu0 6
    %1481 = vperm.xlu0 %1480, %v962
    %v1482 = vpop.permute.xlu0 %1481
    %1484 = vset.pattern.permute.xlu0 6
    %1485 = vperm.xlu0 %1484, %v963
    %v1486 = vpop.permute.xlu0 %1485
    %1488 = vset.pattern.permute.xlu0 6
    %1489 = vperm.xlu0 %1488, %v964
    %v1490 = vpop.permute.xlu0 %1489
    %v1492 = vmul.f32 %v1452, %v1462
    %v1493 = vmul.f32 %v1453, %v1466
    %v1494 = vmul.f32 %v1454, %v1470
    %v1495 = vmul.f32 %v1455, %v1474
    %v1496 = vmul.f32 %v1456, %v1478
    %v1497 = vmul.f32 %v1457, %v1482
    %v1498 = vmul.f32 %v1458, %v1486
    %v1499 = vmul.f32 %v1459, %v1490
    %v1500 = vadd.f32 %v1440, %v1492
    %v1501 = vadd.f32 %v1441, %v1493
    %v1502 = vadd.f32 %v1442, %v1494
    %v1503 = vadd.f32 %v1443, %v1495
    %v1504 = vadd.f32 %v1444, %v1496
    %v1505 = vadd.f32 %v1445, %v1497
    %v1506 = vadd.f32 %v1446, %v1498
    %v1507 = vadd.f32 %v1447, %v1499
    %v1508 = vlaneseq
    %v1509 = vshrl.u32 %v1508, 7
    %v1510 = vsub.s32 7, %v1509
    %v1511 = vrot.slane %v953, %v1510
    %v1512 = vmul.f32 %v1511, %v1051
    %v1513 = vmul.f32 %v1511, %v1056
    %v1514 = vmul.f32 %v1511, %v1059
    %v1515 = vmul.f32 %v1511, %v1064
    %v1516 = vmul.f32 %v1511, %v1067
    %v1517 = vmul.f32 %v1511, %v1072
    %v1518 = vmul.f32 %v1511, %v1075
    %v1519 = vmul.f32 %v1511, %v1048
    %1520 = vset.pattern.permute.xlu0 7
    %1521 = vperm.xlu0 %1520, %v957
    %v1522 = vpop.permute.xlu0 %1521
    %1524 = vset.pattern.permute.xlu0 7
    %1525 = vperm.xlu0 %1524, %v958
    %v1526 = vpop.permute.xlu0 %1525
    %1528 = vset.pattern.permute.xlu0 7
    %1529 = vperm.xlu0 %1528, %v959
    %v1530 = vpop.permute.xlu0 %1529
    %1532 = vset.pattern.permute.xlu0 7
    %1533 = vperm.xlu0 %1532, %v960
    %v1534 = vpop.permute.xlu0 %1533
    %1536 = vset.pattern.permute.xlu0 7
    %1537 = vperm.xlu0 %1536, %v961
    %v1538 = vpop.permute.xlu0 %1537
    %1540 = vset.pattern.permute.xlu0 7
    %1541 = vperm.xlu0 %1540, %v962
    %v1542 = vpop.permute.xlu0 %1541
    %1544 = vset.pattern.permute.xlu0 7
    %1545 = vperm.xlu0 %1544, %v963
    %v1546 = vpop.permute.xlu0 %1545
    %1548 = vset.pattern.permute.xlu0 7
    %1549 = vperm.xlu0 %1548, %v964
    %v1550 = vpop.permute.xlu0 %1549
    %v1552 = vmul.f32 %v1512, %v1522
    %v1553 = vmul.f32 %v1513, %v1526
    %v1554 = vmul.f32 %v1514, %v1530
    %v1555 = vmul.f32 %v1515, %v1534
    %v1556 = vmul.f32 %v1516, %v1538
    %v1557 = vmul.f32 %v1517, %v1542
    %v1558 = vmul.f32 %v1518, %v1546
    %v1559 = vmul.f32 %v1519, %v1550
    %v1560 = vadd.f32 %v1500, %v1552
    %v1561 = vadd.f32 %v1501, %v1553
    %v1562 = vadd.f32 %v1502, %v1554
    %v1563 = vadd.f32 %v1503, %v1555
    %v1564 = vadd.f32 %v1504, %v1556
    %v1565 = vadd.f32 %v1505, %v1557
    %v1566 = vadd.f32 %v1506, %v1558
    %v1567 = vadd.f32 %v1507, %v1559
    %v1568 = vlaneseq
    %v1569 = vshrl.u32 %v1568, 7
    %v1570 = vsub.s32 0, %v1569
    %v1571 = vrot.slane %v954, %v1570
    %v1572 = vmul.f32 %v1571, %v1245
    %v1573 = vmul.f32 %v1571, %v1244
    %v1574 = vmul.f32 %v1571, %v1243
    %v1575 = vmul.f32 %v1571, %v1242
    %v1576 = vmul.f32 %v1571, %v1241
    %v1577 = vmul.f32 %v1571, %v1240
    %v1578 = vmul.f32 %v1571, %v1247
    %v1579 = vmul.f32 %v1571, %v1246
    %1580 = vset.pattern.permute.xlu0 8
    %1581 = vperm.xlu0 %1580, %v957
    %v1582 = vpop.permute.xlu0 %1581
    %1584 = vset.pattern.permute.xlu0 8
    %1585 = vperm.xlu0 %1584, %v958
    %v1586 = vpop.permute.xlu0 %1585
    %1588 = vset.pattern.permute.xlu0 8
    %1589 = vperm.xlu0 %1588, %v959
    %v1590 = vpop.permute.xlu0 %1589
    %1592 = vset.pattern.permute.xlu0 8
    %1593 = vperm.xlu0 %1592, %v960
    %v1594 = vpop.permute.xlu0 %1593
    %1596 = vset.pattern.permute.xlu0 8
    %1597 = vperm.xlu0 %1596, %v961
    %v1598 = vpop.permute.xlu0 %1597
    %1600 = vset.pattern.permute.xlu0 8
    %1601 = vperm.xlu0 %1600, %v962
    %v1602 = vpop.permute.xlu0 %1601
    %1604 = vset.pattern.permute.xlu0 8
    %1605 = vperm.xlu0 %1604, %v963
    %v1606 = vpop.permute.xlu0 %1605
    %1608 = vset.pattern.permute.xlu0 8
    %1609 = vperm.xlu0 %1608, %v964
    %v1610 = vpop.permute.xlu0 %1609
    %v1612 = vmul.f32 %v1572, %v1582
    %v1613 = vmul.f32 %v1573, %v1586
    %v1614 = vmul.f32 %v1574, %v1590
    %v1615 = vmul.f32 %v1575, %v1594
    %v1616 = vmul.f32 %v1576, %v1598
    %v1617 = vmul.f32 %v1577, %v1602
    %v1618 = vmul.f32 %v1578, %v1606
    %v1619 = vmul.f32 %v1579, %v1610
    %v1620 = vadd.f32 %v1560, %v1612
    %v1621 = vadd.f32 %v1561, %v1613
    %v1622 = vadd.f32 %v1562, %v1614
    %v1623 = vadd.f32 %v1563, %v1615
    %v1624 = vadd.f32 %v1564, %v1616
    %v1625 = vadd.f32 %v1565, %v1617
    %v1626 = vadd.f32 %v1566, %v1618
    %v1627 = vadd.f32 %v1567, %v1619
    %v1628 = vadd.f32 %v1048, %v1620
    %v1629 = vadd.f32 %v1051, %v1621
    %v1630 = vadd.f32 %v1056, %v1622
    %v1631 = vadd.f32 %v1059, %v1623
    %v1632 = vadd.f32 %v1064, %v1624
    %v1633 = vadd.f32 %v1067, %v1625
    %v1634 = vadd.f32 %v1072, %v1626
    %v1635 = vadd.f32 %v1075, %v1627
    %v1636 = vmul.f32 %v1628, %v1628
    %v1637 = vmul.f32 %v1629, %v1629
    %v1638 = vmul.f32 %v1630, %v1630
    %v1639 = vmul.f32 %v1631, %v1631
    %v1640 = vmul.f32 %v1632, %v1632
    %v1641 = vmul.f32 %v1633, %v1633
    %v1642 = vmul.f32 %v1634, %v1634
    %v1643 = vmul.f32 %v1635, %v1635
    %1644 = vmatprep.subr.mxu0 0.0
    %1645 = vmatpush1.msra.mxu0 %v121
    %1646 = vmatprep.subr.mxu0 0.0
    %1647 = vmatpush1.msra.mxu0 %v122
    %1648 = vmatprep.subr.mxu0 0.0
    %1649 = vmatpush1.msra.mxu0 %v123
    %1650 = vmatprep.subr.mxu0 0.0
    %1651 = vmatpush1.msra.mxu0 %v124
    %1652 = vmatprep.subr.mxu0 0.0
    %1653 = vmatpush1.msra.mxu0 %v125
    %1654 = vmatprep.subr.mxu0 0.0
    %1655 = vmatpush1.msra.mxu0 %v126
    %1656 = vmatprep.subr.mxu0 0.0
    %1657 = vmatpush1.msra.mxu0 %v127
    %1658 = vmatprep.subr.mxu0 0.0
    %1659 = vmatpush1.msra.mxu0 %v128
    %1660 = vmatprep.subr.mxu0 0.0
    %1661 = vmatpush1.msra.mxu0 %v129
    %1662 = vmatprep.subr.mxu0 0.0
    %1663 = vmatpush1.msra.mxu0 %v130
    %1664 = vmatprep.subr.mxu0 0.0
    %1665 = vmatpush1.msra.mxu0 %v131
    %1666 = vmatprep.subr.mxu0 0.0
    %1667 = vmatpush1.msra.mxu0 %v132
    %1668 = vmatprep.subr.mxu0 0.0
    %1669 = vmatpush1.msra.mxu0 %v133
    %1670 = vmatprep.subr.mxu0 0.0
    %1671 = vmatpush1.msra.mxu0 %v134
    %1672 = vmatprep.subr.mxu0 0.0
    %1673 = vmatpush1.msra.mxu0 %v135
    %1674 = vmatprep.subr.mxu0 0.0
    %1675 = vmatpush1.msra.mxu0 %v136
    %1676 = vmatprep.subr.mxu0 0.0
    %1677 = vmatpush1.msra.mxu0 0.0
    %1678 = vmatprep.subr.mxu0 0.0
    %1679 = vmatpush1.msra.mxu0 0.0
    %1680 = vmatprep.subr.mxu0 0.0
    %1681 = vmatpush1.msra.mxu0 0.0
    %1682 = vmatprep.subr.mxu0 0.0
    %1683 = vmatpush1.msra.mxu0 0.0
    %1684 = vmatprep.subr.mxu0 0.0
    %1685 = vmatpush1.msra.mxu0 0.0
    %1686 = vmatprep.subr.mxu0 0.0
    %1687 = vmatpush1.msra.mxu0 0.0
    %1688 = vmatprep.subr.mxu0 0.0
    %1689 = vmatpush1.msra.mxu0 0.0
    %1690 = vmatprep.subr.mxu0 0.0
    %1691 = vmatpush1.msra.mxu0 0.0
    %1692 = vmatprep.subr.mxu0 0.0
    %1693 = vmatpush1.msra.mxu0 0.0
    %1694 = vmatprep.subr.mxu0 0.0
    %1695 = vmatpush1.msra.mxu0 0.0
    %1696 = vmatprep.subr.mxu0 0.0
    %1697 = vmatpush1.msra.mxu0 0.0
    %1698 = vmatprep.subr.mxu0 0.0
    %1699 = vmatpush1.msra.mxu0 0.0
    %1700 = vmatprep.subr.mxu0 0.0
    %1701 = vmatpush1.msra.mxu0 0.0
    %1702 = vmatprep.subr.mxu0 0.0
    %1703 = vmatpush1.msra.mxu0 0.0
    %1704 = vmatprep.subr.mxu0 0.0
    %1705 = vmatpush1.msra.mxu0 0.0
    %1706 = vmatprep.subr.mxu0 0.0
    %1707 = vmatpush1.msra.mxu0 0.0
    %1708 = vmatprep.mubr.f32.mxu0 0.0
    %1709 = vmatmul.mubr.f32.gmra.mrb[0].mxu0 %v1628
    %v1710 = vpop.f32.mrb[0].mxu0
    %v1711 = vadd.f32 0.0, %v1710
    %v1712 = vpop.f32.mrb[0].mxu0
    %1713 = vmatprep.mubr.f32.mxu0 0.0
    %1714 = vmatmul.mubr.f32.gmra.mrb[0].mxu0 %v1629
    %v1715 = vpop.f32.mrb[0].mxu0
    %v1716 = vadd.f32 0.0, %v1715
    %v1717 = vpop.f32.mrb[0].mxu0
    %1718 = vmatprep.mubr.f32.mxu0 0.0
    %1719 = vmatmul.mubr.f32.gmra.mrb[0].mxu0 %v1630
    %v1720 = vpop.f32.mrb[0].mxu0
    %v1721 = vadd.f32 0.0, %v1720
    %v1722 = vpop.f32.mrb[0].mxu0
    %1723 = vmatprep.mubr.f32.mxu0 0.0
    %1724 = vmatmul.mubr.f32.gmra.mrb[0].mxu0 %v1631
    %v1725 = vpop.f32.mrb[0].mxu0
    %v1726 = vadd.f32 0.0, %v1725
    %v1727 = vpop.f32.mrb[0].mxu0
    %1728 = vmatprep.mubr.f32.mxu0 0.0
    %1729 = vmatmul.mubr.f32.gmra.mrb[0].mxu0 %v1632
    %v1730 = vpop.f32.mrb[0].mxu0
    %v1731 = vadd.f32 0.0, %v1730
    %v1732 = vpop.f32.mrb[0].mxu0
    %1733 = vmatprep.mubr.f32.mxu0 0.0
    %1734 = vmatmul.mubr.f32.gmra.mrb[0].mxu0 %v1633
    %v1735 = vpop.f32.mrb[0].mxu0
    %v1736 = vadd.f32 0.0, %v1735
    %v1737 = vpop.f32.mrb[0].mxu0
    %1738 = vmatprep.mubr.f32.mxu0 0.0
    %1739 = vmatmul.mubr.f32.gmra.mrb[0].mxu0 %v1634
    %v1740 = vpop.f32.mrb[0].mxu0
    %v1741 = vadd.f32 0.0, %v1740
    %v1742 = vpop.f32.mrb[0].mxu0
    %1743 = vmatprep.mubr.f32.mxu0 0.0
    %1744 = vmatmul.mubr.f32.gmra.mrb[0].mxu0 %v1635
    %v1745 = vpop.f32.mrb[0].mxu0
    %v1746 = vadd.f32 0.0, %v1745
    %v1747 = vpop.f32.mrb[0].mxu0
    %1748 = vmatprep.mubr.f32.mxu0 0.0
    %1749 = vmatmul.mubr.f32.gmra.mrb[0].mxu0 %v1636
    %v1750 = vpop.f32.mrb[0].mxu0
    %v1751 = vadd.f32 0.0, %v1750
    %v1752 = vpop.f32.mrb[0].mxu0
    %1753 = vmatprep.mubr.f32.mxu0 0.0
    %1754 = vmatmul.mubr.f32.gmra.mrb[0].mxu0 %v1637
    %v1755 = vpop.f32.mrb[0].mxu0
    %v1756 = vadd.f32 0.0, %v1755
    %v1757 = vpop.f32.mrb[0].mxu0
    %1758 = vmatprep.mubr.f32.mxu0 0.0
    %1759 = vmatmul.mubr.f32.gmra.mrb[0].mxu0 %v1638
    %v1760 = vpop.f32.mrb[0].mxu0
    %v1761 = vadd.f32 0.0, %v1760
    %v1762 = vpop.f32.mrb[0].mxu0
    %1763 = vmatprep.mubr.f32.mxu0 0.0
    %1764 = vmatmul.mubr.f32.gmra.mrb[0].mxu0 %v1639
    %v1765 = vpop.f32.mrb[0].mxu0
    %v1766 = vadd.f32 0.0, %v1765
    %v1767 = vpop.f32.mrb[0].mxu0
    %1768 = vmatprep.mubr.f32.mxu0 0.0
    %1769 = vmatmul.mubr.f32.gmra.mrb[0].mxu0 %v1640
    %v1770 = vpop.f32.mrb[0].mxu0
    %v1771 = vadd.f32 0.0, %v1770
    %v1772 = vpop.f32.mrb[0].mxu0
    %1773 = vmatprep.mubr.f32.mxu0 0.0
    %1774 = vmatmul.mubr.f32.gmra.mrb[0].mxu0 %v1641
    %v1775 = vpop.f32.mrb[0].mxu0
    %v1776 = vadd.f32 0.0, %v1775
    %v1777 = vpop.f32.mrb[0].mxu0
    %1778 = vmatprep.mubr.f32.mxu0 0.0
    %1779 = vmatmul.mubr.f32.gmra.mrb[0].mxu0 %v1642
    %v1780 = vpop.f32.mrb[0].mxu0
    %v1781 = vadd.f32 0.0, %v1780
    %v1782 = vpop.f32.mrb[0].mxu0
    %1783 = vmatprep.mubr.f32.mxu0 0.0
    %1784 = vmatmul.mubr.f32.gmra.mrb[0].mxu0 %v1643
    %v1785 = vpop.f32.mrb[0].mxu0
    %v1786 = vadd.f32 0.0, %v1785
    %v1787 = vpop.f32.mrb[0].mxu0
    %1788 = vdwg.mxu0
    %v1789 = vmul.f32 %v1711, %v1711
    %v1790 = vmul.f32 %v1716, %v1716
    %v1791 = vmul.f32 %v1721, %v1721
    %v1792 = vmul.f32 %v1726, %v1726
    %v1793 = vmul.f32 %v1731, %v1731
    %v1794 = vmul.f32 %v1736, %v1736
    %v1795 = vmul.f32 %v1741, %v1741
    %v1796 = vmul.f32 %v1746, %v1746
    %v1797 = vsub.f32 %v1751, %v1789
    %v1798 = vsub.f32 %v1756, %v1790
    %v1799 = vsub.f32 %v1761, %v1791
    %v1800 = vsub.f32 %v1766, %v1792
    %v1801 = vsub.f32 %v1771, %v1793
    %v1802 = vsub.f32 %v1776, %v1794
    %v1803 = vsub.f32 %v1781, %v1795
    %v1804 = vsub.f32 %v1786, %v1796
    %v1805 = vsub.f32 %v1628, %v1711
    %v1806 = vsub.f32 %v1629, %v1716
    %v1807 = vsub.f32 %v1630, %v1721
    %v1808 = vsub.f32 %v1631, %v1726
    %v1809 = vsub.f32 %v1632, %v1731
    %v1810 = vsub.f32 %v1633, %v1736
    %v1811 = vsub.f32 %v1634, %v1741
    %v1812 = vsub.f32 %v1635, %v1746
    %v1813 = vadd.f32 %v1797, 1e-05
    %v1814 = vadd.f32 %v1798, 1e-05
    %v1815 = vadd.f32 %v1799, 1e-05
    %v1816 = vadd.f32 %v1800, 1e-05
    %v1817 = vadd.f32 %v1801, 1e-05
    %v1818 = vadd.f32 %v1802, 1e-05
    %v1819 = vadd.f32 %v1803, 1e-05
    %v1820 = vadd.f32 %v1804, 1e-05
    %v1821 = vrsqrt.pop %v1813
    %v1822 = vrsqrt.pop %v1814
    %v1823 = vrsqrt.pop %v1815
    %v1824 = vrsqrt.pop %v1816
    %v1825 = vrsqrt.pop %v1817
    %v1826 = vrsqrt.pop %v1818
    %v1827 = vrsqrt.pop %v1819
    %v1828 = vrsqrt.pop %v1820
    %v1829 = vmul.f32 %v1805, %v1821
    %v1830 = vmul.f32 %v1806, %v1822
    %v1831 = vmul.f32 %v1807, %v1823
    %v1832 = vmul.f32 %v1808, %v1824
    %v1833 = vmul.f32 %v1809, %v1825
    %v1834 = vmul.f32 %v1810, %v1826
    %v1835 = vmul.f32 %v1811, %v1827
    %v1836 = vmul.f32 %v1812, %v1828
    %v1838 = vlaneseq
    %v1839 = vshrl.u32 %v1838, 7
    %v1840 = vsub.s32 0, %v1839
    %v1841 = vrot.slane %v119, %v1840
    %v1843 = vmul.f32 %v1829, %v1841
    %v1844 = vmul.f32 %v1830, %v1841
    %v1845 = vmul.f32 %v1831, %v1841
    %v1846 = vmul.f32 %v1832, %v1841
    %v1847 = vmul.f32 %v1833, %v1841
    %v1848 = vmul.f32 %v1834, %v1841
    %v1849 = vmul.f32 %v1835, %v1841
    %v1850 = vmul.f32 %v1836, %v1841
    %v1852 = vlaneseq
    %v1853 = vshrl.u32 %v1852, 7
    %v1854 = vsub.s32 0, %v1853
    %v1855 = vrot.slane %v120, %v1854
    %v1857 = vadd.f32 %v1843, %v1855
    %v1858 = vadd.f32 %v1844, %v1855
    %v1859 = vadd.f32 %v1845, %v1855
    %v1860 = vadd.f32 %v1846, %v1855
    %v1861 = vadd.f32 %v1847, %v1855
    %v1862 = vadd.f32 %v1848, %v1855
    %v1863 = vadd.f32 %v1849, %v1855
    %v1864 = vadd.f32 %v1850, %v1855
    %1865 = vst [vmem:[#allocation9 + $0x100] sm:$0xff] %v1857
    %1866 = vst [vmem:[#allocation9 + $0x108] sm:$0xff] %v1858
    %1867 = vst [vmem:[#allocation9 + $0x110] sm:$0xff] %v1859
    %1868 = vst [vmem:[#allocation9 + $0x118] sm:$0xff] %v1860
    %1869 = vst [vmem:[#allocation9 + $0x120] sm:$0xff] %v1861
    %1870 = vst [vmem:[#allocation9 + $0x128] sm:$0xff] %v1862
    %1871 = vst [vmem:[#allocation9 + $0x130] sm:$0xff] %v1863
    %1872 = vst [vmem:[#allocation9 + $0x138] sm:$0xff] %v1864
    %s1873 = scalar_lea.vmem %s8, 32
    %v1874 = vld [vmem:[%s1873] sm:$0xff]
    %v1875 = vld [vmem:[%s1873 + $0x8] sm:$0x1]
    %s1876 = scalar_lea.vmem %s9, 2
    %v1877 = vld [vmem:[%s1876] sm:$0x1]
    %v1878 = vld [vmem:[%s6] sm:$0xff]
    %v1879 = vld [vmem:[%s6 + $0x8] sm:$0xff]
    %v1880 = vld [vmem:[%s6 + $0x10] sm:$0xff]
    %v1881 = vld [vmem:[%s6 + $0x18] sm:$0xff]
    %v1882 = vld [vmem:[#allocation6] sm:$0xff]
    %v1883 = vld [vmem:[#allocation6 + $0x8] sm:$0xff]
    %v1884 = vld [vmem:[#allocation6 + $0x10] sm:$0xff]
    %v1885 = vld [vmem:[#allocation6 + $0x18] sm:$0xff]
    %v1890 = vunpack.c.l.b16 %v1882
    %v1891 = vunpack.c.h.b16 %v1882
    %v1892 = vunpack.c.l.b16 %v1883
    %v1893 = vunpack.c.h.b16 %v1883
    %v1894 = vunpack.c.l.b16 %v1884
    %v1895 = vunpack.c.h.b16 %v1884
    %v1896 = vunpack.c.l.b16 %v1885
    %v1897 = vunpack.c.h.b16 %v1885
    %v1898 = vpack.c.b16 %v1892, %v1890
    %v1899 = vpack.c.b16 %v1893, %v1891
    %v1900 = vpack.c.b16 %v1896, %v1894
    %v1901 = vpack.c.b16 %v1897, %v1895
    %1906 = vmatprep.subr.bf16.mxu0 0
    %1907 = vmatpush1.bf16.msra.mxu0 %v137
    %1908 = vmatprep.subr.bf16.mxu0 0
    %1909 = vmatpush1.bf16.msra.mxu0 %v138
    %1910 = vmatprep.subr.bf16.mxu0 0
    %1911 = vmatpush1.bf16.msra.mxu0 %v139
    %1912 = vmatprep.subr.bf16.mxu0 0
    %1913 = vmatpush1.bf16.msra.mxu0 %v140
    %1914 = vmatprep.subr.bf16.mxu0 0
    %1915 = vmatpush1.bf16.msra.mxu0 %v141
    %1916 = vmatprep.subr.bf16.mxu0 0
    %1917 = vmatpush1.bf16.msra.mxu0 %v142
    %1918 = vmatprep.subr.bf16.mxu0 0
    %1919 = vmatpush1.bf16.msra.mxu0 %v143
    %1920 = vmatprep.subr.bf16.mxu0 0
    %1921 = vmatpush1.bf16.msra.mxu0 %v144
    %1922 = vmatprep.subr.bf16.mxu0 0
    %1923 = vmatpush1.bf16.msra.mxu0 %v145
    %1924 = vmatprep.subr.bf16.mxu0 0
    %1925 = vmatpush1.bf16.msra.mxu0 %v146
    %1926 = vmatprep.subr.bf16.mxu0 0
    %1927 = vmatpush1.bf16.msra.mxu0 %v147
    %1928 = vmatprep.subr.bf16.mxu0 0
    %1929 = vmatpush1.bf16.msra.mxu0 %v148
    %1930 = vmatprep.subr.bf16.mxu0 0
    %1931 = vmatpush1.bf16.msra.mxu0 %v149
    %1932 = vmatprep.subr.bf16.mxu0 0
    %1933 = vmatpush1.bf16.msra.mxu0 %v150
    %1934 = vmatprep.subr.bf16.mxu0 0
    %1935 = vmatpush1.bf16.msra.mxu0 %v151
    %1936 = vmatprep.subr.bf16.mxu0 0
    %1937 = vmatpush1.bf16.msra.mxu0 %v152
    %1938 = vmatprep.mubr.bf16.mxu0 %v1899
    %1939 = vmatmul.mubr.bf16.gmra.mrb[0].mxu0 %v1898
    %v1940 = vpop.f32.mrb[0].mxu0
    %v1941 = vadd.f32 0.0, %v1940
    %v1942 = vpop.f32.mrb[0].mxu0
    %v1943 = vpop.f32.mrb[0].mxu0
    %v1944 = vadd.f32 0.0, %v1943
    %v1945 = vpop.f32.mrb[0].mxu0
    %1946 = vmatprep.mubr.bf16.mxu0 %v1901
    %1947 = vmatmul.mubr.bf16.gmra.mrb[0].mxu0 %v1900
    %v1948 = vpop.f32.mrb[0].mxu0
    %v1949 = vadd.f32 0.0, %v1948
    %v1950 = vpop.f32.mrb[0].mxu0
    %v1951 = vpop.f32.mrb[0].mxu0
    %v1952 = vadd.f32 0.0, %v1951
    %v1953 = vpop.f32.mrb[0].mxu0
    %1954 = vdwg.mxu0
    %v1955 = vrot.slane %v1941, 2
    %v1956 = vrot.slane %v1944, 2
    %v1957 = vrot.slane %v1949, 2
    %v1958 = vrot.slane %v1952, 2
    %vm1959 = vcmp.lt.s32.totalorder %v1087, 6
    %v1960 = vsel %vm1959, %v1957, %v1958
    %v1961 = vsel %vm1959, %v1956, %v1957
    %v1962 = vsel %vm1959, %v1955, %v1956
    %v1963 = vsel %vm1959, %v1958, %v1955
    %v1964 = vlaneseq
    %v1965 = vshrl.u32 %v1964, 7
    %v1966 = vsub.s32 0, %v1965
    %v1967 = vrot.slane %v1874, %v1966
    %v1968 = vmul.f32 %v1967, %v1963
    %v1969 = vmul.f32 %v1967, %v1962
    %v1970 = vmul.f32 %v1967, %v1961
    %v1971 = vmul.f32 %v1967, %v1960
    %1973 = vset.pattern.permute.xlu0 0
    %1974 = vperm.xlu0 %1973, %v1878
    %v1975 = vpop.permute.xlu0 %1974
    %1978 = vset.pattern.permute.xlu0 0
    %1979 = vperm.xlu0 %1978, %v1879
    %v1980 = vpop.permute.xlu0 %1979
    %1983 = vset.pattern.permute.xlu0 0
    %1984 = vperm.xlu0 %1983, %v1880
    %v1985 = vpop.permute.xlu0 %1984
    %1988 = vset.pattern.permute.xlu0 0
    %1989 = vperm.xlu0 %1988, %v1881
    %v1990 = vpop.permute.xlu0 %1989
    %v1992 = vmul.f32 %v1968, %v1975
    %v1993 = vmul.f32 %v1969, %v1980
    %v1994 = vmul.f32 %v1970, %v1985
    %v1995 = vmul.f32 %v1971, %v1990
    %v1997 = vlaneseq
    %v1998 = vshrl.u32 %v1997, 7
    %v1999 = vsub.s32 0, %v1998
    %v2000 = vrot.slane %v1877, %v1999
    %v2002 = vadd.f32 %v2000, %v1992
    %v2003 = vadd.f32 %v2000, %v1993
    %v2004 = vadd.f32 %v2000, %v1994
    %v2005 = vadd.f32 %v2000, %v1995
    %v2006 = vrot.slane %v1941, 3
    %v2007 = vrot.slane %v1944, 3
    %v2008 = vrot.slane %v1949, 3
    %v2009 = vrot.slane %v1952, 3
    %vm2010 = vcmp.lt.s32.totalorder %v1087, 5
    %v2011 = vsel %vm2010, %v2008, %v2009
    %v2012 = vsel %vm2010, %v2007, %v2008
    %v2013 = vsel %vm2010, %v2006, %v2007
    %v2014 = vsel %vm2010, %v2009, %v2006
    %v2015 = vlaneseq
    %v2016 = vshrl.u32 %v2015, 7
    %v2017 = vsub.s32 1, %v2016
    %v2018 = vrot.slane %v1874, %v2017
    %v2019 = vmul.f32 %v2018, %v2014
    %v2020 = vmul.f32 %v2018, %v2013
    %v2021 = vmul.f32 %v2018, %v2012
    %v2022 = vmul.f32 %v2018, %v2011
    %2023 = vset.pattern.permute.xlu0 1
    %2024 = vperm.xlu0 %2023, %v1878
    %v2025 = vpop.permute.xlu0 %2024
    %2027 = vset.pattern.permute.xlu0 1
    %2028 = vperm.xlu0 %2027, %v1879
    %v2029 = vpop.permute.xlu0 %2028
    %2031 = vset.pattern.permute.xlu0 1
    %2032 = vperm.xlu0 %2031, %v1880
    %v2033 = vpop.permute.xlu0 %2032
    %2035 = vset.pattern.permute.xlu0 1
    %2036 = vperm.xlu0 %2035, %v1881
    %v2037 = vpop.permute.xlu0 %2036
    %v2039 = vmul.f32 %v2019, %v2025
    %v2040 = vmul.f32 %v2020, %v2029
    %v2041 = vmul.f32 %v2021, %v2033
    %v2042 = vmul.f32 %v2022, %v2037
    %v2043 = vadd.f32 %v2002, %v2039
    %v2044 = vadd.f32 %v2003, %v2040
    %v2045 = vadd.f32 %v2004, %v2041
    %v2046 = vadd.f32 %v2005, %v2042
    %v2047 = vrot.slane %v1941, 4
    %v2048 = vrot.slane %v1944, 4
    %v2049 = vrot.slane %v1949, 4
    %v2050 = vrot.slane %v1952, 4
    %vm2051 = vcmp.lt.s32.totalorder %v1087, 4
    %v2052 = vsel %vm2051, %v2049, %v2050
    %v2053 = vsel %vm2051, %v2048, %v2049
    %v2054 = vsel %vm2051, %v2047, %v2048
    %v2055 = vsel %vm2051, %v2050, %v2047
    %v2056 = vlaneseq
    %v2057 = vshrl.u32 %v2056, 7
    %v2058 = vsub.s32 2, %v2057
    %v2059 = vrot.slane %v1874, %v2058
    %v2060 = vmul.f32 %v2059, %v2055
    %v2061 = vmul.f32 %v2059, %v2054
    %v2062 = vmul.f32 %v2059, %v2053
    %v2063 = vmul.f32 %v2059, %v2052
    %2064 = vset.pattern.permute.xlu0 2
    %2065 = vperm.xlu0 %2064, %v1878
    %v2066 = vpop.permute.xlu0 %2065
    %2068 = vset.pattern.permute.xlu0 2
    %2069 = vperm.xlu0 %2068, %v1879
    %v2070 = vpop.permute.xlu0 %2069
    %2072 = vset.pattern.permute.xlu0 2
    %2073 = vperm.xlu0 %2072, %v1880
    %v2074 = vpop.permute.xlu0 %2073
    %2076 = vset.pattern.permute.xlu0 2
    %2077 = vperm.xlu0 %2076, %v1881
    %v2078 = vpop.permute.xlu0 %2077
    %v2080 = vmul.f32 %v2060, %v2066
    %v2081 = vmul.f32 %v2061, %v2070
    %v2082 = vmul.f32 %v2062, %v2074
    %v2083 = vmul.f32 %v2063, %v2078
    %v2084 = vadd.f32 %v2043, %v2080
    %v2085 = vadd.f32 %v2044, %v2081
    %v2086 = vadd.f32 %v2045, %v2082
    %v2087 = vadd.f32 %v2046, %v2083
    %v2088 = vrot.slane %v1941, 7
    %v2089 = vrot.slane %v1944, 7
    %v2090 = vrot.slane %v1949, 7
    %v2091 = vrot.slane %v1952, 7
    %v2092 = vsel %vm1088, %v2090, %v2091
    %v2093 = vsel %vm1088, %v2089, %v2090
    %v2094 = vsel %vm1088, %v2088, %v2089
    %v2095 = vsel %vm1088, %v2091, %v2088
    %v2096 = vlaneseq
    %v2097 = vshrl.u32 %v2096, 7
    %v2098 = vsub.s32 3, %v2097
    %v2099 = vrot.slane %v1874, %v2098
    %v2100 = vmul.f32 %v2099, %v2095
    %v2101 = vmul.f32 %v2099, %v2094
    %v2102 = vmul.f32 %v2099, %v2093
    %v2103 = vmul.f32 %v2099, %v2092
    %2104 = vset.pattern.permute.xlu0 3
    %2105 = vperm.xlu0 %2104, %v1878
    %v2106 = vpop.permute.xlu0 %2105
    %2108 = vset.pattern.permute.xlu0 3
    %2109 = vperm.xlu0 %2108, %v1879
    %v2110 = vpop.permute.xlu0 %2109
    %2112 = vset.pattern.permute.xlu0 3
    %2113 = vperm.xlu0 %2112, %v1880
    %v2114 = vpop.permute.xlu0 %2113
    %2116 = vset.pattern.permute.xlu0 3
    %2117 = vperm.xlu0 %2116, %v1881
    %v2118 = vpop.permute.xlu0 %2117
    %v2120 = vmul.f32 %v2100, %v2106
    %v2121 = vmul.f32 %v2101, %v2110
    %v2122 = vmul.f32 %v2102, %v2114
    %v2123 = vmul.f32 %v2103, %v2118
    %v2124 = vadd.f32 %v2084, %v2120
    %v2125 = vadd.f32 %v2085, %v2121
    %v2126 = vadd.f32 %v2086, %v2122
    %v2127 = vadd.f32 %v2087, %v2123
    %v2128 = vlaneseq
    %v2129 = vshrl.u32 %v2128, 7
    %v2130 = vsub.s32 4, %v2129
    %v2131 = vrot.slane %v1874, %v2130
    %v2132 = vmul.f32 %v2131, %v1941
    %v2133 = vmul.f32 %v2131, %v1944
    %v2134 = vmul.f32 %v2131, %v1949
    %v2135 = vmul.f32 %v2131, %v1952
    %v2136 = vadd.f32 %v2124, %v2132
    %v2137 = vadd.f32 %v2125, %v2133
    %v2138 = vadd.f32 %v2126, %v2134
    %v2139 = vadd.f32 %v2127, %v2135
    %v2140 = vrot.slane %v1941, 1
    %v2141 = vrot.slane %v1944, 1
    %v2142 = vrot.slane %v1949, 1
    %v2143 = vrot.slane %v1952, 1
    %v2144 = vsel %vm1239, %v2142, %v2143
    %v2145 = vsel %vm1239, %v2141, %v2142
    %v2146 = vsel %vm1239, %v2140, %v2141
    %v2147 = vsel %vm1239, %v2143, %v2140
    %v2148 = vlaneseq
    %v2149 = vshrl.u32 %v2148, 7
    %v2150 = vsub.s32 5, %v2149
    %v2151 = vrot.slane %v1874, %v2150
    %v2152 = vmul.f32 %v2151, %v2146
    %v2153 = vmul.f32 %v2151, %v2145
    %v2154 = vmul.f32 %v2151, %v2144
    %v2155 = vmul.f32 %v2151, %v2147
    %2156 = vset.pattern.permute.xlu0 5
    %2157 = vperm.xlu0 %2156, %v1878
    %v2158 = vpop.permute.xlu0 %2157
    %2160 = vset.pattern.permute.xlu0 5
    %2161 = vperm.xlu0 %2160, %v1879
    %v2162 = vpop.permute.xlu0 %2161
    %2164 = vset.pattern.permute.xlu0 5
    %2165 = vperm.xlu0 %2164, %v1880
    %v2166 = vpop.permute.xlu0 %2165
    %2168 = vset.pattern.permute.xlu0 5
    %2169 = vperm.xlu0 %2168, %v1881
    %v2170 = vpop.permute.xlu0 %2169
    %v2172 = vmul.f32 %v2152, %v2158
    %v2173 = vmul.f32 %v2153, %v2162
    %v2174 = vmul.f32 %v2154, %v2166
    %v2175 = vmul.f32 %v2155, %v2170
    %v2176 = vadd.f32 %v2136, %v2172
    %v2177 = vadd.f32 %v2137, %v2173
    %v2178 = vadd.f32 %v2138, %v2174
    %v2179 = vadd.f32 %v2139, %v2175
    %v2180 = vlaneseq
    %v2181 = vshrl.u32 %v2180, 7
    %v2182 = vsub.s32 6, %v2181
    %v2183 = vrot.slane %v1874, %v2182
    %v2184 = vmul.f32 %v2183, %v2054
    %v2185 = vmul.f32 %v2183, %v2053
    %v2186 = vmul.f32 %v2183, %v2052
    %v2187 = vmul.f32 %v2183, %v2055
    %2188 = vset.pattern.permute.xlu0 6
    %2189 = vperm.xlu0 %2188, %v1878
    %v2190 = vpop.permute.xlu0 %2189
    %2192 = vset.pattern.permute.xlu0 6
    %2193 = vperm.xlu0 %2192, %v1879
    %v2194 = vpop.permute.xlu0 %2193
    %2196 = vset.pattern.permute.xlu0 6
    %2197 = vperm.xlu0 %2196, %v1880
    %v2198 = vpop.permute.xlu0 %2197
    %2200 = vset.pattern.permute.xlu0 6
    %2201 = vperm.xlu0 %2200, %v1881
    %v2202 = vpop.permute.xlu0 %2201
    %v2204 = vmul.f32 %v2184, %v2190
    %v2205 = vmul.f32 %v2185, %v2194
    %v2206 = vmul.f32 %v2186, %v2198
    %v2207 = vmul.f32 %v2187, %v2202
    %v2208 = vadd.f32 %v2176, %v2204
    %v2209 = vadd.f32 %v2177, %v2205
    %v2210 = vadd.f32 %v2178, %v2206
    %v2211 = vadd.f32 %v2179, %v2207
    %v2212 = vrot.slane %v1941, 5
    %v2213 = vrot.slane %v1944, 5
    %v2214 = vrot.slane %v1949, 5
    %v2215 = vrot.slane %v1952, 5
    %vm2216 = vcmp.lt.s32.totalorder %v1087, 3
    %v2217 = vsel %vm2216, %v2214, %v2215
    %v2218 = vsel %vm2216, %v2213, %v2214
    %v2219 = vsel %vm2216, %v2212, %v2213
    %v2220 = vsel %vm2216, %v2215, %v2212
    %v2221 = vlaneseq
    %v2222 = vshrl.u32 %v2221, 7
    %v2223 = vsub.s32 7, %v2222
    %v2224 = vrot.slane %v1874, %v2223
    %v2225 = vmul.f32 %v2224, %v2219
    %v2226 = vmul.f32 %v2224, %v2218
    %v2227 = vmul.f32 %v2224, %v2217
    %v2228 = vmul.f32 %v2224, %v2220
    %2229 = vset.pattern.permute.xlu0 7
    %2230 = vperm.xlu0 %2229, %v1878
    %v2231 = vpop.permute.xlu0 %2230
    %2233 = vset.pattern.permute.xlu0 7
    %2234 = vperm.xlu0 %2233, %v1879
    %v2235 = vpop.permute.xlu0 %2234
    %2237 = vset.pattern.permute.xlu0 7
    %2238 = vperm.xlu0 %2237, %v1880
    %v2239 = vpop.permute.xlu0 %2238
    %2241 = vset.pattern.permute.xlu0 7
    %2242 = vperm.xlu0 %2241, %v1881
    %v2243 = vpop.permute.xlu0 %2242
    %v2245 = vmul.f32 %v2225, %v2231
    %v2246 = vmul.f32 %v2226, %v2235
    %v2247 = vmul.f32 %v2227, %v2239
    %v2248 = vmul.f32 %v2228, %v2243
    %v2249 = vadd.f32 %v2208, %v2245
    %v2250 = vadd.f32 %v2209, %v2246
    %v2251 = vadd.f32 %v2210, %v2247
    %v2252 = vadd.f32 %v2211, %v2248
    %v2253 = vrot.slane %v1941, 6
    %v2254 = vrot.slane %v1944, 6
    %v2255 = vrot.slane %v1949, 6
    %v2256 = vrot.slane %v1952, 6
    %vm2257 = vcmp.lt.s32.totalorder %v1087, 2
    %v2258 = vsel %vm2257, %v2255, %v2256
    %v2259 = vsel %vm2257, %v2254, %v2255
    %v2260 = vsel %vm2257, %v2253, %v2254
    %v2261 = vsel %vm2257, %v2256, %v2253
    %v2262 = vlaneseq
    %v2263 = vshrl.u32 %v2262, 7
    %v2264 = vsub.s32 0, %v2263
    %v2265 = vrot.slane %v1875, %v2264
    %v2266 = vmul.f32 %v2265, %v2260
    %v2267 = vmul.f32 %v2265, %v2259
    %v2268 = vmul.f32 %v2265, %v2258
    %v2269 = vmul.f32 %v2265, %v2261
    %2270 = vset.pattern.permute.xlu0 8
    %2271 = vperm.xlu0 %2270, %v1878
    %v2272 = vpop.permute.xlu0 %2271
    %2274 = vset.pattern.permute.xlu0 8
    %2275 = vperm.xlu0 %2274, %v1879
    %v2276 = vpop.permute.xlu0 %2275
    %2278 = vset.pattern.permute.xlu0 8
    %2279 = vperm.xlu0 %2278, %v1880
    %v2280 = vpop.permute.xlu0 %2279
    %2282 = vset.pattern.permute.xlu0 8
    %2283 = vperm.xlu0 %2282, %v1881
    %v2284 = vpop.permute.xlu0 %2283
    %v2286 = vmul.f32 %v2266, %v2272
    %v2287 = vmul.f32 %v2267, %v2276
    %v2288 = vmul.f32 %v2268, %v2280
    %v2289 = vmul.f32 %v2269, %v2284
    %v2290 = vadd.f32 %v2249, %v2286
    %v2291 = vadd.f32 %v2250, %v2287
    %v2292 = vadd.f32 %v2251, %v2288
    %v2293 = vadd.f32 %v2252, %v2289
    %v2294 = vadd.f32 %v1941, %v2290
    %v2295 = vadd.f32 %v1944, %v2291
    %v2296 = vadd.f32 %v1949, %v2292
    %v2297 = vadd.f32 %v1952, %v2293
    %v2298 = vmul.f32 %v2294, %v2294
    %v2299 = vmul.f32 %v2295, %v2295
    %v2300 = vmul.f32 %v2296, %v2296
    %v2301 = vmul.f32 %v2297, %v2297
    %2302 = vmatprep.subr.mxu0 0.0
    %2303 = vmatpush1.msra.mxu0 %v121
    %2304 = vmatprep.subr.mxu0 0.0
    %2305 = vmatpush1.msra.mxu0 %v122
    %2306 = vmatprep.subr.mxu0 0.0
    %2307 = vmatpush1.msra.mxu0 %v123
    %2308 = vmatprep.subr.mxu0 0.0
    %2309 = vmatpush1.msra.mxu0 %v124
    %2310 = vmatprep.subr.mxu0 0.0
    %2311 = vmatpush1.msra.mxu0 %v125
    %2312 = vmatprep.subr.mxu0 0.0
    %2313 = vmatpush1.msra.mxu0 %v126
    %2314 = vmatprep.subr.mxu0 0.0
    %2315 = vmatpush1.msra.mxu0 %v127
    %2316 = vmatprep.subr.mxu0 0.0
    %2317 = vmatpush1.msra.mxu0 %v128
    %2318 = vmatprep.subr.mxu0 0.0
    %2319 = vmatpush1.msra.mxu0 %v129
    %2320 = vmatprep.subr.mxu0 0.0
    %2321 = vmatpush1.msra.mxu0 %v130
    %2322 = vmatprep.subr.mxu0 0.0
    %2323 = vmatpush1.msra.mxu0 %v131
    %2324 = vmatprep.subr.mxu0 0.0
    %2325 = vmatpush1.msra.mxu0 %v132
    %2326 = vmatprep.subr.mxu0 0.0
    %2327 = vmatpush1.msra.mxu0 %v133
    %2328 = vmatprep.subr.mxu0 0.0
    %2329 = vmatpush1.msra.mxu0 %v134
    %2330 = vmatprep.subr.mxu0 0.0
    %2331 = vmatpush1.msra.mxu0 %v135
    %2332 = vmatprep.subr.mxu0 0.0
    %2333 = vmatpush1.msra.mxu0 %v136
    %2334 = vmatprep.subr.mxu0 0.0
    %2335 = vmatpush1.msra.mxu0 0.0
    %2336 = vmatprep.subr.mxu0 0.0
    %2337 = vmatpush1.msra.mxu0 0.0
    %2338 = vmatprep.subr.mxu0 0.0
    %2339 = vmatpush1.msra.mxu0 0.0
    %2340 = vmatprep.subr.mxu0 0.0
    %2341 = vmatpush1.msra.mxu0 0.0
    %2342 = vmatprep.subr.mxu0 0.0
    %2343 = vmatpush1.msra.mxu0 0.0
    %2344 = vmatprep.subr.mxu0 0.0
    %2345 = vmatpush1.msra.mxu0 0.0
    %2346 = vmatprep.subr.mxu0 0.0
    %2347 = vmatpush1.msra.mxu0 0.0
    %2348 = vmatprep.subr.mxu0 0.0
    %2349 = vmatpush1.msra.mxu0 0.0
    %2350 = vmatprep.subr.mxu0 0.0
    %2351 = vmatpush1.msra.mxu0 0.0
    %2352 = vmatprep.subr.mxu0 0.0
    %2353 = vmatpush1.msra.mxu0 0.0
    %2354 = vmatprep.subr.mxu0 0.0
    %2355 = vmatpush1.msra.mxu0 0.0
    %2356 = vmatprep.subr.mxu0 0.0
    %2357 = vmatpush1.msra.mxu0 0.0
    %2358 = vmatprep.subr.mxu0 0.0
    %2359 = vmatpush1.msra.mxu0 0.0
    %2360 = vmatprep.subr.mxu0 0.0
    %2361 = vmatpush1.msra.mxu0 0.0
    %2362 = vmatprep.subr.mxu0 0.0
    %2363 = vmatpush1.msra.mxu0 0.0
    %2364 = vmatprep.subr.mxu0 0.0
    %2365 = vmatpush1.msra.mxu0 0.0
    %2366 = vmatprep.mubr.f32.mxu0 0.0
    %2367 = vmatmul.mubr.f32.gmra.mrb[0].mxu0 %v2294
    %v2368 = vpop.f32.mrb[0].mxu0
    %v2369 = vadd.f32 0.0, %v2368
    %v2370 = vpop.f32.mrb[0].mxu0
    %2371 = vmatprep.mubr.f32.mxu0 0.0
    %2372 = vmatmul.mubr.f32.gmra.mrb[0].mxu0 %v2295
    %v2373 = vpop.f32.mrb[0].mxu0
    %v2374 = vadd.f32 0.0, %v2373
    %v2375 = vpop.f32.mrb[0].mxu0
    %2376 = vmatprep.mubr.f32.mxu0 0.0
    %2377 = vmatmul.mubr.f32.gmra.mrb[0].mxu0 %v2296
    %v2378 = vpop.f32.mrb[0].mxu0
    %v2379 = vadd.f32 0.0, %v2378
    %v2380 = vpop.f32.mrb[0].mxu0
    %2381 = vmatprep.mubr.f32.mxu0 0.0
    %2382 = vmatmul.mubr.f32.gmra.mrb[0].mxu0 %v2297
    %v2383 = vpop.f32.mrb[0].mxu0
    %v2384 = vadd.f32 0.0, %v2383
    %v2385 = vpop.f32.mrb[0].mxu0
    %2386 = vmatprep.mubr.f32.mxu0 0.0
    %2387 = vmatmul.mubr.f32.gmra.mrb[0].mxu0 %v2298
    %v2388 = vpop.f32.mrb[0].mxu0
    %v2389 = vadd.f32 0.0, %v2388
    %v2390 = vpop.f32.mrb[0].mxu0
    %2391 = vmatprep.mubr.f32.mxu0 0.0
    %2392 = vmatmul.mubr.f32.gmra.mrb[0].mxu0 %v2299
    %v2393 = vpop.f32.mrb[0].mxu0
    %v2394 = vadd.f32 0.0, %v2393
    %v2395 = vpop.f32.mrb[0].mxu0
    %2396 = vmatprep.mubr.f32.mxu0 0.0
    %2397 = vmatmul.mubr.f32.gmra.mrb[0].mxu0 %v2300
    %v2398 = vpop.f32.mrb[0].mxu0
    %v2399 = vadd.f32 0.0, %v2398
    %v2400 = vpop.f32.mrb[0].mxu0
    %2401 = vmatprep.mubr.f32.mxu0 0.0
    %2402 = vmatmul.mubr.f32.gmra.mrb[0].mxu0 %v2301
    %v2403 = vpop.f32.mrb[0].mxu0
    %v2404 = vadd.f32 0.0, %v2403
    %v2405 = vpop.f32.mrb[0].mxu0
    %2406 = vdwg.mxu0
    %v2407 = vmul.f32 %v2369, %v2369
    %v2408 = vmul.f32 %v2374, %v2374
    %v2409 = vmul.f32 %v2379, %v2379
    %v2410 = vmul.f32 %v2384, %v2384
    %v2411 = vsub.f32 %v2389, %v2407
    %v2412 = vsub.f32 %v2394, %v2408
    %v2413 = vsub.f32 %v2399, %v2409
    %v2414 = vsub.f32 %v2404, %v2410
    %v2415 = vsub.f32 %v2294, %v2369
    %v2416 = vsub.f32 %v2295, %v2374
    %v2417 = vsub.f32 %v2296, %v2379
    %v2418 = vsub.f32 %v2297, %v2384
    %v2419 = vadd.f32 %v2411, 1e-05
    %v2420 = vadd.f32 %v2412, 1e-05
    %v2421 = vadd.f32 %v2413, 1e-05
    %v2422 = vadd.f32 %v2414, 1e-05
    %v2423 = vrsqrt.pop %v2419
    %v2424 = vrsqrt.pop %v2420
    %v2425 = vrsqrt.pop %v2421
    %v2426 = vrsqrt.pop %v2422
    %v2427 = vmul.f32 %v2415, %v2423
    %v2428 = vmul.f32 %v2416, %v2424
    %v2429 = vmul.f32 %v2417, %v2425
    %v2430 = vmul.f32 %v2418, %v2426
    %v2431 = vmul.f32 %v2427, %v1841
    %v2432 = vmul.f32 %v2428, %v1841
    %v2433 = vmul.f32 %v2429, %v1841
    %v2434 = vmul.f32 %v2430, %v1841
    %v2435 = vadd.f32 %v2431, %v1855
    %v2436 = vadd.f32 %v2432, %v1855
    %v2437 = vadd.f32 %v2433, %v1855
    %v2438 = vadd.f32 %v2434, %v1855
    %2439 = vst [vmem:[#allocation9 + $0x140] sm:$0xff] %v2435
    %2440 = vst [vmem:[#allocation9 + $0x148] sm:$0xff] %v2436
    %2441 = vst [vmem:[#allocation9 + $0x150] sm:$0xff] %v2437
    %2442 = vst [vmem:[#allocation9 + $0x158] sm:$0xff] %v2438
    %s2443 = scalar_lea.vmem %s8, 48
    %v2444 = vld [vmem:[%s2443] sm:$0xff]
    %v2445 = vld [vmem:[%s2443 + $0x8] sm:$0x1]
    %s2446 = scalar_lea.vmem %s9, 3
    %v2447 = vld [vmem:[%s2446] sm:$0x1]
    %v2448 = vld [vmem:[%s7] sm:$0xff]
    %v2449 = vld [vmem:[%s7 + $0x8] sm:$0xff]
    %v2450 = vld [vmem:[%s3] sm:$0xff]
    %v2451 = vld [vmem:[%s3 + $0x8] sm:$0xff]
    %v2454 = vunpack.c.l.b16 %v2450
    %v2455 = vunpack.c.h.b16 %v2450
    %v2456 = vunpack.c.l.b16 %v2451
    %v2457 = vunpack.c.h.b16 %v2451
    %v2458 = vpack.c.b16 %v2456, %v2454
    %v2459 = vpack.c.b16 %v2457, %v2455
    %2462 = vmatprep.subr.bf16.mxu0 0
    %2463 = vmatpush1.bf16.msra.mxu0 %v137
    %2464 = vmatprep.subr.bf16.mxu0 0
    %2465 = vmatpush1.bf16.msra.mxu0 %v138
    %2466 = vmatprep.subr.bf16.mxu0 0
    %2467 = vmatpush1.bf16.msra.mxu0 %v139
    %2468 = vmatprep.subr.bf16.mxu0 0
    %2469 = vmatpush1.bf16.msra.mxu0 %v140
    %2470 = vmatprep.subr.bf16.mxu0 0
    %2471 = vmatpush1.bf16.msra.mxu0 %v141
    %2472 = vmatprep.subr.bf16.mxu0 0
    %2473 = vmatpush1.bf16.msra.mxu0 %v142
    %2474 = vmatprep.subr.bf16.mxu0 0
    %2475 = vmatpush1.bf16.msra.mxu0 %v143
    %2476 = vmatprep.subr.bf16.mxu0 0
    %2477 = vmatpush1.bf16.msra.mxu0 %v144
    %2478 = vmatprep.subr.bf16.mxu0 0
    %2479 = vmatpush1.bf16.msra.mxu0 %v145
    %2480 = vmatprep.subr.bf16.mxu0 0
    %2481 = vmatpush1.bf16.msra.mxu0 %v146
    %2482 = vmatprep.subr.bf16.mxu0 0
    %2483 = vmatpush1.bf16.msra.mxu0 %v147
    %2484 = vmatprep.subr.bf16.mxu0 0
    %2485 = vmatpush1.bf16.msra.mxu0 %v148
    %2486 = vmatprep.subr.bf16.mxu0 0
    %2487 = vmatpush1.bf16.msra.mxu0 %v149
    %2488 = vmatprep.subr.bf16.mxu0 0
    %2489 = vmatpush1.bf16.msra.mxu0 %v150
    %2490 = vmatprep.subr.bf16.mxu0 0
    %2491 = vmatpush1.bf16.msra.mxu0 %v151
    %2492 = vmatprep.subr.bf16.mxu0 0
    %2493 = vmatpush1.bf16.msra.mxu0 %v152
    %2494 = vmatprep.mubr.bf16.mxu0 %v2459
    %2495 = vmatmul.mubr.bf16.gmra.mrb[0].mxu0 %v2458
    %v2496 = vpop.f32.mrb[0].mxu0
    %v2497 = vadd.f32 0.0, %v2496
    %v2498 = vpop.f32.mrb[0].mxu0
    %v2499 = vpop.f32.mrb[0].mxu0
    %v2500 = vadd.f32 0.0, %v2499
    %v2501 = vpop.f32.mrb[0].mxu0
    %2502 = vdwg.mxu0
    %v2503 = vrot.slane %v2497, 3
    %v2504 = vrot.slane %v2500, 3
    %v2505 = vsel %vm2010, %v2503, %v2504
    %v2506 = vsel %vm2010, %v2504, %v2503
    %v2507 = vlaneseq
    %v2508 = vshrl.u32 %v2507, 7
    %v2509 = vsub.s32 0, %v2508
    %v2510 = vrot.slane %v2444, %v2509
    %v2511 = vmul.f32 %v2510, %v2506
    %v2512 = vmul.f32 %v2510, %v2505
    %2514 = vset.pattern.permute.xlu0 0
    %2515 = vperm.xlu0 %2514, %v2448
    %v2516 = vpop.permute.xlu0 %2515
    %2519 = vset.pattern.permute.xlu0 0
    %2520 = vperm.xlu0 %2519, %v2449
    %v2521 = vpop.permute.xlu0 %2520
    %v2523 = vmul.f32 %v2511, %v2516
    %v2524 = vmul.f32 %v2512, %v2521
    %v2526 = vlaneseq
    %v2527 = vshrl.u32 %v2526, 7
    %v2528 = vsub.s32 0, %v2527
    %v2529 = vrot.slane %v2447, %v2528
    %v2531 = vadd.f32 %v2529, %v2523
    %v2532 = vadd.f32 %v2529, %v2524
    %v2533 = vrot.slane %v2497, 4
    %v2534 = vrot.slane %v2500, 4
    %v2535 = vsel %vm2051, %v2533, %v2534
    %v2536 = vsel %vm2051, %v2534, %v2533
    %v2537 = vlaneseq
    %v2538 = vshrl.u32 %v2537, 7
    %v2539 = vsub.s32 1, %v2538
    %v2540 = vrot.slane %v2444, %v2539
    %v2541 = vmul.f32 %v2540, %v2536
    %v2542 = vmul.f32 %v2540, %v2535
    %2543 = vset.pattern.permute.xlu0 1
    %2544 = vperm.xlu0 %2543, %v2448
    %v2545 = vpop.permute.xlu0 %2544
    %2547 = vset.pattern.permute.xlu0 1
    %2548 = vperm.xlu0 %2547, %v2449
    %v2549 = vpop.permute.xlu0 %2548
    %v2551 = vmul.f32 %v2541, %v2545
    %v2552 = vmul.f32 %v2542, %v2549
    %v2553 = vadd.f32 %v2531, %v2551
    %v2554 = vadd.f32 %v2532, %v2552
    %v2555 = vrot.slane %v2497, 5
    %v2556 = vrot.slane %v2500, 5
    %v2557 = vsel %vm2216, %v2555, %v2556
    %v2558 = vsel %vm2216, %v2556, %v2555
    %v2559 = vlaneseq
    %v2560 = vshrl.u32 %v2559, 7
    %v2561 = vsub.s32 2, %v2560
    %v2562 = vrot.slane %v2444, %v2561
    %v2563 = vmul.f32 %v2562, %v2558
    %v2564 = vmul.f32 %v2562, %v2557
    %2565 = vset.pattern.permute.xlu0 2
    %2566 = vperm.xlu0 %2565, %v2448
    %v2567 = vpop.permute.xlu0 %2566
    %2569 = vset.pattern.permute.xlu0 2
    %2570 = vperm.xlu0 %2569, %v2449
    %v2571 = vpop.permute.xlu0 %2570
    %v2573 = vmul.f32 %v2563, %v2567
    %v2574 = vmul.f32 %v2564, %v2571
    %v2575 = vadd.f32 %v2553, %v2573
    %v2576 = vadd.f32 %v2554, %v2574
    %v2577 = vrot.slane %v2497, 7
    %v2578 = vrot.slane %v2500, 7
    %v2579 = vsel %vm1088, %v2577, %v2578
    %v2580 = vsel %vm1088, %v2578, %v2577
    %v2581 = vlaneseq
    %v2582 = vshrl.u32 %v2581, 7
    %v2583 = vsub.s32 3, %v2582
    %v2584 = vrot.slane %v2444, %v2583
    %v2585 = vmul.f32 %v2584, %v2580
    %v2586 = vmul.f32 %v2584, %v2579
    %2587 = vset.pattern.permute.xlu0 3
    %2588 = vperm.xlu0 %2587, %v2448
    %v2589 = vpop.permute.xlu0 %2588
    %2591 = vset.pattern.permute.xlu0 3
    %2592 = vperm.xlu0 %2591, %v2449
    %v2593 = vpop.permute.xlu0 %2592
    %v2595 = vmul.f32 %v2585, %v2589
    %v2596 = vmul.f32 %v2586, %v2593
    %v2597 = vadd.f32 %v2575, %v2595
    %v2598 = vadd.f32 %v2576, %v2596
    %v2599 = vlaneseq
    %v2600 = vshrl.u32 %v2599, 7
    %v2601 = vsub.s32 4, %v2600
    %v2602 = vrot.slane %v2444, %v2601
    %v2603 = vmul.f32 %v2602, %v2497
    %v2604 = vmul.f32 %v2602, %v2500
    %v2605 = vadd.f32 %v2597, %v2603
    %v2606 = vadd.f32 %v2598, %v2604
    %v2607 = vrot.slane %v2497, 1
    %v2608 = vrot.slane %v2500, 1
    %v2609 = vsel %vm1239, %v2607, %v2608
    %v2610 = vsel %vm1239, %v2608, %v2607
    %v2611 = vlaneseq
    %v2612 = vshrl.u32 %v2611, 7
    %v2613 = vsub.s32 5, %v2612
    %v2614 = vrot.slane %v2444, %v2613
    %v2615 = vmul.f32 %v2614, %v2609
    %v2616 = vmul.f32 %v2614, %v2610
    %2617 = vset.pattern.permute.xlu0 5
    %2618 = vperm.xlu0 %2617, %v2448
    %v2619 = vpop.permute.xlu0 %2618
    %2621 = vset.pattern.permute.xlu0 5
    %2622 = vperm.xlu0 %2621, %v2449
    %v2623 = vpop.permute.xlu0 %2622
    %v2625 = vmul.f32 %v2615, %v2619
    %v2626 = vmul.f32 %v2616, %v2623
    %v2627 = vadd.f32 %v2605, %v2625
    %v2628 = vadd.f32 %v2606, %v2626
    %v2629 = vlaneseq
    %v2630 = vshrl.u32 %v2629, 7
    %v2631 = vsub.s32 6, %v2630
    %v2632 = vrot.slane %v2444, %v2631
    %v2633 = vmul.f32 %v2632, %v2505
    %v2634 = vmul.f32 %v2632, %v2506
    %2635 = vset.pattern.permute.xlu0 6
    %2636 = vperm.xlu0 %2635, %v2448
    %v2637 = vpop.permute.xlu0 %2636
    %2639 = vset.pattern.permute.xlu0 6
    %2640 = vperm.xlu0 %2639, %v2449
    %v2641 = vpop.permute.xlu0 %2640
    %v2643 = vmul.f32 %v2633, %v2637
    %v2644 = vmul.f32 %v2634, %v2641
    %v2645 = vadd.f32 %v2627, %v2643
    %v2646 = vadd.f32 %v2628, %v2644
    %v2647 = vlaneseq
    %v2648 = vshrl.u32 %v2647, 7
    %v2649 = vsub.s32 7, %v2648
    %v2650 = vrot.slane %v2444, %v2649
    %v2651 = vmul.f32 %v2650, %v2535
    %v2652 = vmul.f32 %v2650, %v2536
    %2653 = vset.pattern.permute.xlu0 7
    %2654 = vperm.xlu0 %2653, %v2448
    %v2655 = vpop.permute.xlu0 %2654
    %2657 = vset.pattern.permute.xlu0 7
    %2658 = vperm.xlu0 %2657, %v2449
    %v2659 = vpop.permute.xlu0 %2658
    %v2661 = vmul.f32 %v2651, %v2655
    %v2662 = vmul.f32 %v2652, %v2659
    %v2663 = vadd.f32 %v2645, %v2661
    %v2664 = vadd.f32 %v2646, %v2662
    %v2665 = vlaneseq
    %v2666 = vshrl.u32 %v2665, 7
    %v2667 = vsub.s32 0, %v2666
    %v2668 = vrot.slane %v2445, %v2667
    %v2669 = vmul.f32 %v2668, %v2557
    %v2670 = vmul.f32 %v2668, %v2558
    %2671 = vset.pattern.permute.xlu0 8
    %2672 = vperm.xlu0 %2671, %v2448
    %v2673 = vpop.permute.xlu0 %2672
    %2675 = vset.pattern.permute.xlu0 8
    %2676 = vperm.xlu0 %2675, %v2449
    %v2677 = vpop.permute.xlu0 %2676
    %v2679 = vmul.f32 %v2669, %v2673
    %v2680 = vmul.f32 %v2670, %v2677
    %v2681 = vadd.f32 %v2663, %v2679
    %v2682 = vadd.f32 %v2664, %v2680
    %v2683 = vadd.f32 %v2497, %v2681
    %v2684 = vadd.f32 %v2500, %v2682
    %v2685 = vmul.f32 %v2683, %v2683
    %v2686 = vmul.f32 %v2684, %v2684
    %2687 = vmatprep.subr.mxu0 0.0
    %2688 = vmatpush1.msra.mxu0 %v121
    %2689 = vmatprep.subr.mxu0 0.0
    %2690 = vmatpush1.msra.mxu0 %v122
    %2691 = vmatprep.subr.mxu0 0.0
    %2692 = vmatpush1.msra.mxu0 %v123
    %2693 = vmatprep.subr.mxu0 0.0
    %2694 = vmatpush1.msra.mxu0 %v124
    %2695 = vmatprep.subr.mxu0 0.0
    %2696 = vmatpush1.msra.mxu0 %v125
    %2697 = vmatprep.subr.mxu0 0.0
    %2698 = vmatpush1.msra.mxu0 %v126
    %2699 = vmatprep.subr.mxu0 0.0
    %2700 = vmatpush1.msra.mxu0 %v127
    %2701 = vmatprep.subr.mxu0 0.0
    %2702 = vmatpush1.msra.mxu0 %v128
    %2703 = vmatprep.subr.mxu0 0.0
    %2704 = vmatpush1.msra.mxu0 %v129
    %2705 = vmatprep.subr.mxu0 0.0
    %2706 = vmatpush1.msra.mxu0 %v130
    %2707 = vmatprep.subr.mxu0 0.0
    %2708 = vmatpush1.msra.mxu0 %v131
    %2709 = vmatprep.subr.mxu0 0.0
    %2710 = vmatpush1.msra.mxu0 %v132
    %2711 = vmatprep.subr.mxu0 0.0
    %2712 = vmatpush1.msra.mxu0 %v133
    %2713 = vmatprep.subr.mxu0 0.0
    %2714 = vmatpush1.msra.mxu0 %v134
    %2715 = vmatprep.subr.mxu0 0.0
    %2716 = vmatpush1.msra.mxu0 %v135
    %2717 = vmatprep.subr.mxu0 0.0
    %2718 = vmatpush1.msra.mxu0 %v136
    %2719 = vmatprep.subr.mxu0 0.0
    %2720 = vmatpush1.msra.mxu0 0.0
    %2721 = vmatprep.subr.mxu0 0.0
    %2722 = vmatpush1.msra.mxu0 0.0
    %2723 = vmatprep.subr.mxu0 0.0
    %2724 = vmatpush1.msra.mxu0 0.0
    %2725 = vmatprep.subr.mxu0 0.0
    %2726 = vmatpush1.msra.mxu0 0.0
    %2727 = vmatprep.subr.mxu0 0.0
    %2728 = vmatpush1.msra.mxu0 0.0
    %2729 = vmatprep.subr.mxu0 0.0
    %2730 = vmatpush1.msra.mxu0 0.0
    %2731 = vmatprep.subr.mxu0 0.0
    %2732 = vmatpush1.msra.mxu0 0.0
    %2733 = vmatprep.subr.mxu0 0.0
    %2734 = vmatpush1.msra.mxu0 0.0
    %2735 = vmatprep.subr.mxu0 0.0
    %2736 = vmatpush1.msra.mxu0 0.0
    %2737 = vmatprep.subr.mxu0 0.0
    %2738 = vmatpush1.msra.mxu0 0.0
    %2739 = vmatprep.subr.mxu0 0.0
    %2740 = vmatpush1.msra.mxu0 0.0
    %2741 = vmatprep.subr.mxu0 0.0
    %2742 = vmatpush1.msra.mxu0 0.0
    %2743 = vmatprep.subr.mxu0 0.0
    %2744 = vmatpush1.msra.mxu0 0.0
    %2745 = vmatprep.subr.mxu0 0.0
    %2746 = vmatpush1.msra.mxu0 0.0
    %2747 = vmatprep.subr.mxu0 0.0
    %2748 = vmatpush1.msra.mxu0 0.0
    %2749 = vmatprep.subr.mxu0 0.0
    %2750 = vmatpush1.msra.mxu0 0.0
    %2751 = vmatprep.mubr.f32.mxu0 0.0
    %2752 = vmatmul.mubr.f32.gmra.mrb[0].mxu0 %v2683
    %v2753 = vpop.f32.mrb[0].mxu0
    %v2754 = vadd.f32 0.0, %v2753
    %v2755 = vpop.f32.mrb[0].mxu0
    %2756 = vmatprep.mubr.f32.mxu0 0.0
    %2757 = vmatmul.mubr.f32.gmra.mrb[0].mxu0 %v2684
    %v2758 = vpop.f32.mrb[0].mxu0
    %v2759 = vadd.f32 0.0, %v2758
    %v2760 = vpop.f32.mrb[0].mxu0
    %2761 = vmatprep.mubr.f32.mxu0 0.0
    %2762 = vmatmul.mubr.f32.gmra.mrb[0].mxu0 %v2685
    %v2763 = vpop.f32.mrb[0].mxu0
    %v2764 = vadd.f32 0.0, %v2763
    %v2765 = vpop.f32.mrb[0].mxu0
    %2766 = vmatprep.mubr.f32.mxu0 0.0
    %2767 = vmatmul.mubr.f32.gmra.mrb[0].mxu0 %v2686
    %v2768 = vpop.f32.mrb[0].mxu0
    %v2769 = vadd.f32 0.0, %v2768
    %v2770 = vpop.f32.mrb[0].mxu0
    %2771 = vdwg.mxu0
    %v2772 = vmul.f32 %v2754, %v2754
    %v2773 = vmul.f32 %v2759, %v2759
    %v2774 = vsub.f32 %v2764, %v2772
    %v2775 = vsub.f32 %v2769, %v2773
    %v2776 = vsub.f32 %v2683, %v2754
    %v2777 = vsub.f32 %v2684, %v2759
    %v2778 = vadd.f32 %v2774, 1e-05
    %v2779 = vadd.f32 %v2775, 1e-05
    %v2780 = vrsqrt.pop %v2778
    %v2781 = vrsqrt.pop %v2779
    %v2782 = vmul.f32 %v2776, %v2780
    %v2783 = vmul.f32 %v2777, %v2781
    %v2784 = vmul.f32 %v2782, %v1841
    %v2785 = vmul.f32 %v2783, %v1841
    %v2786 = vadd.f32 %v2784, %v1855
    %v2787 = vadd.f32 %v2785, %v1855
    %2788 = vst [vmem:[#allocation9 + $0x160] sm:$0xff] %v2786
    %2789 = vst [vmem:[#allocation9 + $0x168] sm:$0xff] %v2787
    // Predicated region
    $region73: #{tpu_custom_call.1} parent=1 // pred_check
      _
    $region74: #{tpu_custom_call.1} parent=1 // pred_check_branch
      %2791 = sbr.rel (0) target = $region76
    $region75: #{tpu_custom_call.1} parent=1 // pred_region
      %s2793 = ssub.s32 5888, 5888
      %2794 = vsyncadd [#allocation5], %s2793
      %s2795 = sshll.u32 [#allocation9], 4
      %s2796 = int_to_ptr.vmem [resolvable:$true] %s2795
      %2801 = dma.vmem_to_hbm [thread:$0]  %s2796, 5888, %s13, [#allocation5], 128, 128, 8
    $region76: #{tpu_custom_call.1} parent=1 // pred_fallthru
      _
    // Predicated region
    $region77: #{tpu_custom_call.1} parent=1 // pred_check
      _
    $region78: #{tpu_custom_call.1} parent=1 // pred_check_branch
      %2803 = sbr.rel (0) target = $region80
    $region79: #{tpu_custom_call.1} parent=1 // pred_region
      %2804 = dma.done [#allocation5], 5888
    $region80: #{tpu_custom_call.1} parent=1 // pred_fallthru
      _
    %2805 = vsyncpa [#allocation4], 1
    %2806 = vsyncpa [#allocation7], 1
    %2807 = vsyncpa [#allocation5], 1

</llo_original>
